<compile_context>
chip_gen: v7x
topology: tpu7x:2x2x1
jax: 0.10.0
libtpu: 0.0.40
codegen_flags: <defaults>
</compile_context>

<pallas_src>
import jax
import jax.numpy as jnp
from jax.experimental import pallas as pl
from jax.experimental.pallas import tpu as pltpu


_VMEM_LIMIT = 32 * 1024 * 1024  # safe on v5e (128 MiB), v6e (128), v7x (64)


# ----------------------------- helpers --------------------------------------

def _round_up(x, m):
    return (x + m - 1) // m * m


def _pad2(a, rows, cols):
    return jnp.pad(a, ((0, rows - a.shape[0]), (0, cols - a.shape[1])))


def _choose_tm(m, tm_max=1024):
    """M tile: multiple of 16 (bf16 sublane packing), <= tm_max, and >= 2 grid
    blocks whenever m allows it (so v7x megacore can use both TensorCores)."""
    mp16 = _round_up(m, 16)
    if mp16 <= 16:
        return 16, 16
    tm = min(tm_max, _round_up(mp16 // 2, 16))
    return tm, _round_up(m, tm)


# ----------------------------- Pallas kernels -------------------------------

def conv_relu_pool_kernel(p_ref, w_ref, b_ref, o_ref):
    """Fused conv(im2col matmul) + bias + ReLU + 2x2/2 max-pool.

    p_ref : [4, tm, Kp] bf16  -- im2col patches, one slab per pool corner
    w_ref : [Kp, 128]   bf16  -- packed conv weights (zero padded K and N)
    b_ref : [1, 128]    f32   -- bias (zero padded)
    o_ref : [tm, 128]   bf16  -- pooled, ReLU'd output rows (b, hp, wp)
    """
    _, tm, kp = p_ref.shape
    n = o_ref.shape[-1]
    # One long MXU stream over all four pool corners, then one VPU max-reduce.
    m = jnp.dot(p_ref[...].reshape(4 * tm, kp), w_ref[...],
                preferred_element_type=jnp.float32)
    m = m.reshape(4, tm, n).max(axis=0)
    # relu(pool(x)+b) == pool(relu(x+b)): per-channel bias + monotone max/relu.
    o_ref[...] = jnp.maximum(m + b_ref[...], 0.0).astype(o_ref.dtype)


def fc3_kernel(x_ref, w1_ref, b1_ref, w2_ref, b2_ref, w3_ref, b3_ref, o_ref):
    """Fused fc1+ReLU -> fc2+ReLU -> fc3.  Intermediates stay on-chip."""
    h = jnp.dot(x_ref[...], w1_ref[...], preferred_element_type=jnp.float32)
    h = jnp.maximum(h + b1_ref[...], 0.0).astype(jnp.bfloat16)
    h = jnp.dot(h, w2_ref[...], preferred_element_type=jnp.float32)
    h = jnp.maximum(h + b2_ref[...], 0.0).astype(jnp.bfloat16)
    h = jnp.dot(h, w3_ref[...], preferred_element_type=jnp.float32)
    o_ref[...] = h + b3_ref[...]


# ----------------------------- kernel wrappers ------------------------------

def _im2col_corner_groups(x, kh, kw):
    """x: [B, H, W, C] NHWC -> [4, B*Hp*Wp, kh*kw*C] corner-grouped patches.

    Corner c = di*2 + dj holds, for each pooled position (b, hp, wp), the
    im2col patch of conv-output position (2*hp+di, 2*wp+dj).  K ordering is
    (kh, kw, C).
    """
    B, H, W, C = x.shape
    Ho, Wo = H - kh + 1, W - kw + 1
    assert Ho % 2 == 0 and Wo % 2 == 0, "2x2/2 pool needs even conv output"
    Hp, Wp = Ho // 2, Wo // 2
    cols = [x[:, i:i + Ho, j:j + Wo, :] for i in range(kh) for j in range(kw)]
    p = jnp.concatenate(cols, axis=-1)                  # [B, Ho, Wo, kh*kw*C]
    groups = [p[:, di::2, dj::2, :].reshape(B * Hp * Wp, kh * kw * C)
              for di in range(2) for dj in range(2)]
    return jnp.stack(groups, axis=0), (B, Hp, Wp)


def conv_relu_pool(x, w_packed, b_packed, cout, kh=5, kw=5, tm_max=1024):
    """Valid conv (stride 1) + bias + ReLU + 2x2/2 max-pool on NHWC input.

    x        : [B, H, W, Cin] (NHWC, f32 or bf16)
    w_packed : [Kp, 128] bf16, K ordering (kh, kw, Cin), zero padded
    b_packed : [1, 128]  f32, zero padded
    returns  : [B, Hp, Wp, cout] bf16 (NHWC)
    """
    Kp, Np = w_packed.shape
    K = kh * kw * x.shape[-1]
    p, (B, Hp, Wp) = _im2col_corner_groups(x, kh, kw)   # [4, M, K]
    M = B * Hp * Wp
    tm, Mp = _choose_tm(M, tm_max)
    # K zero-padded in HBM -> guaranteed-zero pad lanes for the MXU.
    p = jnp.pad(p, ((0, 0), (0, Mp - M), (0, Kp - K))).astype(jnp.bfloat16)

    out = pl.pallas_call(
        conv_relu_pool_kernel,
        out_shape=jax.ShapeDtypeStruct((Mp, Np), jnp.bfloat16),
        grid=(Mp // tm,),
        in_specs=[
            pl.BlockSpec((4, tm, Kp), lambda i: (0, i, 0)),
            pl.BlockSpec((Kp, Np), lambda i: (0, 0)),
            pl.BlockSpec((1, Np), lambda i: (0, 0)),
        ],
        out_specs=pl.BlockSpec((tm, Np), lambda i: (i, 0)),
        compiler_params=pltpu.CompilerParams(
            dimension_semantics=("parallel",),
            vmem_limit_bytes=_VMEM_LIMIT),
    )(p, w_packed, b_packed)

    return out[:M, :cout].reshape(B, Hp, Wp, cout)


def fc_stack(x, params, tm_max=1024):
    """Fused fc1/fc2/fc3 on [B, 400] activations. Returns [B, 10] f32."""
    B, K = x.shape
    K1p = params["wf1"].shape[0]
    tm, Bp = _choose_tm(B, tm_max)
    xp = jnp.pad(x, ((0, Bp - B), (0, K1p - K))).astype(jnp.bfloat16)

    out = pl.pallas_call(
        fc3_kernel,
        out_shape=jax.ShapeDtypeStruct((Bp, 128), jnp.float32),
        grid=(Bp // tm,),
        in_specs=[
            pl.BlockSpec((tm, K1p), lambda i: (i, 0)),
            pl.BlockSpec(params["wf1"].shape, lambda i: (0, 0)),
            pl.BlockSpec((1, 128), lambda i: (0, 0)),
            pl.BlockSpec(params["wf2"].shape, lambda i: (0, 0)),
            pl.BlockSpec((1, 128), lambda i: (0, 0)),
            pl.BlockSpec(params["wf3"].shape, lambda i: (0, 0)),
            pl.BlockSpec((1, 128), lambda i: (0, 0)),
        ],
        out_specs=pl.BlockSpec((tm, 128), lambda i: (i, 0)),
        compiler_params=pltpu.CompilerParams(
            dimension_semantics=("parallel",),
            vmem_limit_bytes=_VMEM_LIMIT),
    )(xp, params["wf1"], params["bf1"], params["wf2"], params["bf2"],
      params["wf3"], params["bf3"])

    return out[:B, :10]


# ----------------------------- parameters -----------------------------------

def init_raw_params(key):
    """PyTorch-layout f32 parameters (same semantics as the nn.Module)."""
    ks = jax.random.split(key, 10)
    s = 0.1
    return {
        "w1": jax.random.normal(ks[0], (6, 3, 5, 5), jnp.float32) * s,
        "b1": jax.random.normal(ks[1], (6,), jnp.float32) * s,
        "w2": jax.random.normal(ks[2], (16, 6, 5, 5), jnp.float32) * s,
        "b2": jax.random.normal(ks[3], (16,), jnp.float32) * s,
        "wf1": jax.random.normal(ks[4], (120, 16 * 5 * 5), jnp.float32) * s,
        "bf1": jax.random.normal(ks[5], (120,), jnp.float32) * s,
        "wf2": jax.random.normal(ks[6], (84, 120), jnp.float32) * s,
        "bf2": jax.random.normal(ks[7], (84,), jnp.float32) * s,
        "wf3": jax.random.normal(ks[8], (10, 84), jnp.float32) * s,
        "bf3": jax.random.normal(ks[9], (10,), jnp.float32) * s,
    }


def _pack_conv_w(w, kp, np_):
    """[O, Cin, kh, kw] torch layout -> [kp, np_] bf16, K order (kh, kw, Cin)."""
    O, C, kh, kw = w.shape
    wm = w.transpose(2, 3, 1, 0).reshape(kh * kw * C, O)
    return _pad2(wm, kp, np_).astype(jnp.bfloat16)


def _pack_fc_w(w, kp, np_):
    """[out, in] torch layout -> [kp, np_] bf16."""
    return _pad2(w.T, kp, np_).astype(jnp.bfloat16)


def _pack_bias(b, np_):
    return _pad2(b.reshape(1, -1), 1, np_)              # stays f32


def pack_params(raw):
    # fc1 consumes torch's NCHW flatten (c, h, w); our activations flatten as
    # NHWC (h, w, c) -- absorb the permutation into the weight once here.
    wf1_hwc = (raw["wf1"].reshape(120, 16, 5, 5)
               .transpose(0, 2, 3, 1).reshape(120, 400))
    return {
        "w1": _pack_conv_w(raw["w1"], 128, 128), "b1": _pack_bias(raw["b1"], 128),
        "w2": _pack_conv_w(raw["w2"], 256, 128), "b2": _pack_bias(raw["b2"], 128),
        "wf1": _pack_fc_w(wf1_hwc, 512, 128),    "bf1": _pack_bias(raw["bf1"], 128),
        "wf2": _pack_fc_w(raw["wf2"], 128, 128), "bf2": _pack_bias(raw["bf2"], 128),
        "wf3": _pack_fc_w(raw["wf3"], 128, 128), "bf3": _pack_bias(raw["bf3"], 128),
    }


# ----------------------------- forward pass ---------------------------------

def forward(x, params):
    """x: [B, 3, 32, 32] NCHW (PyTorch interface) -> logits [B, 10] f32."""
    B = x.shape[0]
    x = jnp.transpose(x, (0, 2, 3, 1))                            # NHWC, once
    y = conv_relu_pool(x, params["w1"], params["b1"], cout=6)     # [B,14,14,6]
    y = conv_relu_pool(y, params["w2"], params["b2"], cout=16)    # [B,5,5,16]
    y = y.reshape(B, 5 * 5 * 16)      # NHWC flatten; fc1 weight pre-permuted
    return fc_stack(y, params)                                    # [B,10]


# ----------------------------- pure-JAX reference ---------------------------

def reference_forward(x, raw):
    """f32 reference matching the PyTorch module exactly."""
    def conv(z, w, b):
        y = jax.lax.conv_general_dilated(
            z, w, window_strides=(1, 1), padding="VALID",
            dimension_numbers=("NCHW", "OIHW", "NCHW"))
        return y + b[None, :, None, None]

    def pool(z):
        return jax.lax.reduce_window(z, -jnp.inf, jax.lax.max,
                                     (1, 1, 2, 2), (1, 1, 2, 2), "VALID")

    y = pool(jax.nn.relu(conv(x, raw["w1"], raw["b1"])))
    y = pool(jax.nn.relu(conv(y, raw["w2"], raw["b2"])))
    y = y.reshape(x.shape[0], -1)                                 # NCHW flatten
    y = jax.nn.relu(y @ raw["wf1"].T + raw["bf1"])
    y = jax.nn.relu(y @ raw["wf2"].T + raw["bf2"])
    return y @ raw["wf3"].T + raw["bf3"]


if __name__ == "__main__":
    key = jax.random.PRNGKey(0)
    kx, kp = jax.random.split(key)
    # LeNet geometry requires 32x32 spatial input for the 16*5*5 flatten.
    x = jax.random.normal(kx, (2, 3, 32, 32), jnp.float32)
    raw = init_raw_params(kp)
    params = pack_params(raw)

    out = jax.jit(forward)(x, params)
    out = jax.block_until_ready(out)
    assert out.shape == (2, 10), out.shape

    ref = reference_forward(x, raw)
    err = float(jnp.max(jnp.abs(out - ref)))
    assert jnp.allclose(out, ref, rtol=5e-2, atol=5e-2), f"max abs err {err}"
    print("KERNEL_OK")
</pallas_src>

<mosaic_0001>
module attributes {stable_mosaic.version = 11 : i64} {
  func.func @conv_relu_pool_kernel(%arg0: i32, %arg1: memref<4x208x128xbf16, #tpu.memory_space<vmem>>, %arg2: memref<128x128xbf16, #tpu.memory_space<vmem>>, %arg3: memref<1x128xf32, #tpu.memory_space<vmem>>, %arg4: memref<208x128xbf16, #tpu.memory_space<vmem>>) attributes {dimension_semantics = [#tpu.dimension_semantics<parallel>], iteration_bounds = array<i64: 2>, scalar_prefetch = 0 : i64, scratch_operands = 0 : i64, tpu.core_type = #tpu.core_type<tc>, window_params = [{transform_indices = @transform_0, window_bounds = array<i64: 4, 208, 128>}, {pipeline_mode = #tpu.pipeline_mode<synchronous>, transform_indices = @transform_1, window_bounds = array<i64: 128, 128>}, {pipeline_mode = #tpu.pipeline_mode<synchronous>, transform_indices = @transform_2, window_bounds = array<i64: 1, 128>}, {transform_indices = @transform_3, window_bounds = array<i64: 208, 128>}]} {
    %c0 = arith.constant 0 : index
    %c0_0 = arith.constant 0 : index
    %c0_1 = arith.constant 0 : index
    %0 = vector.load %arg1[%c0, %c0_0, %c0_1] : memref<4x208x128xbf16, #tpu.memory_space<vmem>>, vector<4x208x128xbf16>
    %1 = vector.shape_cast %0 : vector<4x208x128xbf16> to vector<832x128xbf16>
    %c0_2 = arith.constant 0 : index
    %c0_3 = arith.constant 0 : index
    %2 = vector.load %arg2[%c0_2, %c0_3] : memref<128x128xbf16, #tpu.memory_space<vmem>>, vector<128x128xbf16>
    %cst = arith.constant dense<0.000000e+00> : vector<832x128xf32>
    %3 = tpu.matmul %1, %2, %cst {dimension_numbers = #tpu.dot_dimension_numbers<[1], [0], [0], [1], [0, 0, 1, 1], [], []>} : vector<832x128xbf16>, vector<128x128xbf16>, vector<832x128xf32> -> vector<832x128xf32>
    %4 = vector.shape_cast %3 : vector<832x128xf32> to vector<4x208x128xf32>
    %cst_4 = arith.constant dense<0xFF800000> : vector<208x128xf32>
    %5 = vector.multi_reduction <maximumf>, %4, %cst_4 [0] : vector<4x208x128xf32> to vector<208x128xf32>
    %c0_5 = arith.constant 0 : index
    %c0_6 = arith.constant 0 : index
    %6 = vector.load %arg3[%c0_5, %c0_6] : memref<1x128xf32, #tpu.memory_space<vmem>>, vector<1x128xf32>
    %7 = vector.broadcast %6 : vector<1x128xf32> to vector<208x128xf32>
    %8 = arith.addf %5, %7 : vector<208x128xf32>
    %cst_7 = arith.constant 0.000000e+00 : f32
    %9 = vector.broadcast %cst_7 : f32 to vector<208x128xf32>
    %10 = arith.maximumf %8, %9 : vector<208x128xf32>
    %11 = arith.truncf %10 : vector<208x128xf32> to vector<208x128xbf16>
    %c0_8 = arith.constant 0 : index
    %c0_9 = arith.constant 0 : index
    %12 = vector.load %arg4[%c0_8, %c0_9] : memref<208x128xbf16, #tpu.memory_space<vmem>>, vector<208x128xbf16>
    tpu.vector_store %arg4[%c0_8, %c0_9], %11 {strides = array<i32>} : memref<208x128xbf16, #tpu.memory_space<vmem>>, vector<208x128xbf16>,
    return
  }
  func.func @transform_0(%arg0: i32) -> (i32, i32, i32) {
    %c0_i32 = arith.constant 0 : i32
    %c0_i32_0 = arith.constant 0 : i32
    %c0_i32_1 = arith.constant 0 : i32
    return %c0_i32, %arg0, %c0_i32_0 : i32, i32, i32
  }
  func.func @transform_1(%arg0: i32) -> (i32, i32) {
    %c0_i32 = arith.constant 0 : i32
    %c0_i32_0 = arith.constant 0 : i32
    %c0_i32_1 = arith.constant 0 : i32
    return %c0_i32, %c0_i32_0 : i32, i32
  }
  func.func @transform_2(%arg0: i32) -> (i32, i32) {
    %c0_i32 = arith.constant 0 : i32
    %c0_i32_0 = arith.constant 0 : i32
    %c0_i32_1 = arith.constant 0 : i32
    return %c0_i32, %c0_i32_0 : i32, i32
  }
  func.func @transform_3(%arg0: i32) -> (i32, i32) {
    %c0_i32 = arith.constant 0 : i32
    %c0_i32_0 = arith.constant 0 : i32
    return %arg0, %c0_i32 : i32, i32
  }
}

module attributes {stable_mosaic.version = 11 : i64} {
  func.func @conv_relu_pool_kernel(%arg0: i32, %arg1: memref<4x32x256xbf16, #tpu.memory_space<vmem>>, %arg2: memref<256x128xbf16, #tpu.memory_space<vmem>>, %arg3: memref<1x128xf32, #tpu.memory_space<vmem>>, %arg4: memref<32x128xbf16, #tpu.memory_space<vmem>>) attributes {dimension_semantics = [#tpu.dimension_semantics<parallel>], iteration_bounds = array<i64: 2>, scalar_prefetch = 0 : i64, scratch_operands = 0 : i64, tpu.core_type = #tpu.core_type<tc>, window_params = [{transform_indices = @transform_0, window_bounds = array<i64: 4, 32, 256>}, {pipeline_mode = #tpu.pipeline_mode<synchronous>, transform_indices = @transform_1, window_bounds = array<i64: 256, 128>}, {pipeline_mode = #tpu.pipeline_mode<synchronous>, transform_indices = @transform_2, window_bounds = array<i64: 1, 128>}, {transform_indices = @transform_3, window_bounds = array<i64: 32, 128>}]} {
    %c0 = arith.constant 0 : index
    %c0_0 = arith.constant 0 : index
    %c0_1 = arith.constant 0 : index
    %0 = vector.load %arg1[%c0, %c0_0, %c0_1] : memref<4x32x256xbf16, #tpu.memory_space<vmem>>, vector<4x32x256xbf16>
    %1 = vector.shape_cast %0 : vector<4x32x256xbf16> to vector<128x256xbf16>
    %c0_2 = arith.constant 0 : index
    %c0_3 = arith.constant 0 : index
    %2 = vector.load %arg2[%c0_2, %c0_3] : memref<256x128xbf16, #tpu.memory_space<vmem>>, vector<256x128xbf16>
    %cst = arith.constant dense<0.000000e+00> : vector<128x128xf32>
    %3 = tpu.matmul %1, %2, %cst {dimension_numbers = #tpu.dot_dimension_numbers<[1], [0], [0], [1], [0, 0, 1, 1], [], []>} : vector<128x256xbf16>, vector<256x128xbf16>, vector<128x128xf32> -> vector<128x128xf32>
    %4 = vector.shape_cast %3 : vector<128x128xf32> to vector<4x32x128xf32>
    %cst_4 = arith.constant dense<0xFF800000> : vector<32x128xf32>
    %5 = vector.multi_reduction <maximumf>, %4, %cst_4 [0] : vector<4x32x128xf32> to vector<32x128xf32>
    %c0_5 = arith.constant 0 : index
    %c0_6 = arith.constant 0 : index
    %6 = vector.load %arg3[%c0_5, %c0_6] : memref<1x128xf32, #tpu.memory_space<vmem>>, vector<1x128xf32>
    %7 = vector.broadcast %6 : vector<1x128xf32> to vector<32x128xf32>
    %8 = arith.addf %5, %7 : vector<32x128xf32>
    %cst_7 = arith.constant 0.000000e+00 : f32
    %9 = vector.broadcast %cst_7 : f32 to vector<32x128xf32>
    %10 = arith.maximumf %8, %9 : vector<32x128xf32>
    %11 = arith.truncf %10 : vector<32x128xf32> to vector<32x128xbf16>
    %c0_8 = arith.constant 0 : index
    %c0_9 = arith.constant 0 : index
    %12 = vector.load %arg4[%c0_8, %c0_9] : memref<32x128xbf16, #tpu.memory_space<vmem>>, vector<32x128xbf16>
    tpu.vector_store %arg4[%c0_8, %c0_9], %11 {strides = array<i32>} : memref<32x128xbf16, #tpu.memory_space<vmem>>, vector<32x128xbf16>,
    return
  }
  func.func @transform_0(%arg0: i32) -> (i32, i32, i32) {
    %c0_i32 = arith.constant 0 : i32
    %c0_i32_0 = arith.constant 0 : i32
    %c0_i32_1 = arith.constant 0 : i32
    return %c0_i32, %arg0, %c0_i32_0 : i32, i32, i32
  }
  func.func @transform_1(%arg0: i32) -> (i32, i32) {
    %c0_i32 = arith.constant 0 : i32
    %c0_i32_0 = arith.constant 0 : i32
    %c0_i32_1 = arith.constant 0 : i32
    return %c0_i32, %c0_i32_0 : i32, i32
  }
  func.func @transform_2(%arg0: i32) -> (i32, i32) {
    %c0_i32 = arith.constant 0 : i32
    %c0_i32_0 = arith.constant 0 : i32
    %c0_i32_1 = arith.constant 0 : i32
    return %c0_i32, %c0_i32_0 : i32, i32
  }
  func.func @transform_3(%arg0: i32) -> (i32, i32) {
    %c0_i32 = arith.constant 0 : i32
    %c0_i32_0 = arith.constant 0 : i32
    return %arg0, %c0_i32 : i32, i32
  }
}

module attributes {stable_mosaic.version = 11 : i64} {
  func.func @fc3_kernel(%arg0: i32, %arg1: memref<16x512xbf16, #tpu.memory_space<vmem>>, %arg2: memref<512x128xbf16, #tpu.memory_space<vmem>>, %arg3: memref<1x128xf32, #tpu.memory_space<vmem>>, %arg4: memref<128x128xbf16, #tpu.memory_space<vmem>>, %arg5: memref<1x128xf32, #tpu.memory_space<vmem>>, %arg6: memref<128x128xbf16, #tpu.memory_space<vmem>>, %arg7: memref<1x128xf32, #tpu.memory_space<vmem>>, %arg8: memref<16x128xf32, #tpu.memory_space<vmem>>) attributes {dimension_semantics = [#tpu.dimension_semantics<parallel>], iteration_bounds = array<i64: 1>, scalar_prefetch = 0 : i64, scratch_operands = 0 : i64, tpu.core_type = #tpu.core_type<tc>, window_params = [{transform_indices = @transform_0, window_bounds = array<i64: 16, 512>}, {pipeline_mode = #tpu.pipeline_mode<synchronous>, transform_indices = @transform_1, window_bounds = array<i64: 512, 128>}, {pipeline_mode = #tpu.pipeline_mode<synchronous>, transform_indices = @transform_2, window_bounds = array<i64: 1, 128>}, {pipeline_mode = #tpu.pipeline_mode<synchronous>, transform_indices = @transform_3, window_bounds = array<i64: 128, 128>}, {pipeline_mode = #tpu.pipeline_mode<synchronous>, transform_indices = @transform_4, window_bounds = array<i64: 1, 128>}, {pipeline_mode = #tpu.pipeline_mode<synchronous>, transform_indices = @transform_5, window_bounds = array<i64: 128, 128>}, {pipeline_mode = #tpu.pipeline_mode<synchronous>, transform_indices = @transform_6, window_bounds = array<i64: 1, 128>}, {transform_indices = @transform_7, window_bounds = array<i64: 16, 128>}]} {
    %c0 = arith.constant 0 : index
    %c0_0 = arith.constant 0 : index
    %0 = vector.load %arg1[%c0, %c0_0] : memref<16x512xbf16, #tpu.memory_space<vmem>>, vector<16x512xbf16>
    %c0_1 = arith.constant 0 : index
    %c0_2 = arith.constant 0 : index
    %1 = vector.load %arg2[%c0_1, %c0_2] : memref<512x128xbf16, #tpu.memory_space<vmem>>, vector<512x128xbf16>
    %cst = arith.constant dense<0.000000e+00> : vector<16x128xf32>
    %2 = tpu.matmul %0, %1, %cst {dimension_numbers = #tpu.dot_dimension_numbers<[1], [0], [0], [1], [0, 0, 1, 1], [], []>} : vector<16x512xbf16>, vector<512x128xbf16>, vector<16x128xf32> -> vector<16x128xf32>
    %c0_3 = arith.constant 0 : index
    %c0_4 = arith.constant 0 : index
    %3 = vector.load %arg3[%c0_3, %c0_4] : memref<1x128xf32, #tpu.memory_space<vmem>>, vector<1x128xf32>
    %4 = vector.broadcast %3 : vector<1x128xf32> to vector<16x128xf32>
    %5 = arith.addf %2, %4 : vector<16x128xf32>
    %cst_5 = arith.constant 0.000000e+00 : f32
    %6 = vector.broadcast %cst_5 : f32 to vector<16x128xf32>
    %7 = arith.maximumf %5, %6 : vector<16x128xf32>
    %8 = arith.truncf %7 : vector<16x128xf32> to vector<16x128xbf16>
    %c0_6 = arith.constant 0 : index
    %c0_7 = arith.constant 0 : index
    %9 = vector.load %arg4[%c0_6, %c0_7] : memref<128x128xbf16, #tpu.memory_space<vmem>>, vector<128x128xbf16>
    %cst_8 = arith.constant dense<0.000000e+00> : vector<16x128xf32>
    %10 = tpu.matmul %8, %9, %cst_8 {dimension_numbers = #tpu.dot_dimension_numbers<[1], [0], [0], [1], [0, 0, 1, 1], [], []>} : vector<16x128xbf16>, vector<128x128xbf16>, vector<16x128xf32> -> vector<16x128xf32>
    %c0_9 = arith.constant 0 : index
    %c0_10 = arith.constant 0 : index
    %11 = vector.load %arg5[%c0_9, %c0_10] : memref<1x128xf32, #tpu.memory_space<vmem>>, vector<1x128xf32>
    %12 = vector.broadcast %11 : vector<1x128xf32> to vector<16x128xf32>
    %13 = arith.addf %10, %12 : vector<16x128xf32>
    %cst_11 = arith.constant 0.000000e+00 : f32
    %14 = vector.broadcast %cst_11 : f32 to vector<16x128xf32>
    %15 = arith.maximumf %13, %14 : vector<16x128xf32>
    %16 = arith.truncf %15 : vector<16x128xf32> to vector<16x128xbf16>
    %c0_12 = arith.constant 0 : index
    %c0_13 = arith.constant 0 : index
    %17 = vector.load %arg6[%c0_12, %c0_13] : memref<128x128xbf16, #tpu.memory_space<vmem>>, vector<128x128xbf16>
    %cst_14 = arith.constant dense<0.000000e+00> : vector<16x128xf32>
    %18 = tpu.matmul %16, %17, %cst_14 {dimension_numbers = #tpu.dot_dimension_numbers<[1], [0], [0], [1], [0, 0, 1, 1], [], []>} : vector<16x128xbf16>, vector<128x128xbf16>, vector<16x128xf32> -> vector<16x128xf32>
    %c0_15 = arith.constant 0 : index
    %c0_16 = arith.constant 0 : index
    %19 = vector.load %arg7[%c0_15, %c0_16] : memref<1x128xf32, #tpu.memory_space<vmem>>, vector<1x128xf32>
    %20 = vector.broadcast %19 : vector<1x128xf32> to vector<16x128xf32>
    %21 = arith.addf %18, %20 : vector<16x128xf32>
    %c0_17 = arith.constant 0 : index
    %c0_18 = arith.constant 0 : index
    %22 = vector.load %arg8[%c0_17, %c0_18] : memref<16x128xf32, #tpu.memory_space<vmem>>, vector<16x128xf32>
    tpu.vector_store %arg8[%c0_17, %c0_18], %21 {strides = array<i32>} : memref<16x128xf32, #tpu.memory_space<vmem>>, vector<16x128xf32>,
    return
  }
  func.func @transform_0(%arg0: i32) -> (i32, i32) {
    %c0_i32 = arith.constant 0 : i32
    %c0_i32_0 = arith.constant 0 : i32
    return %arg0, %c0_i32 : i32, i32
  }
  func.func @transform_1(%arg0: i32) -> (i32, i32) {
    %c0_i32 = arith.constant 0 : i32
    %c0_i32_0 = arith.constant 0 : i32
    %c0_i32_1 = arith.constant 0 : i32
    return %c0_i32, %c0_i32_0 : i32, i32
  }
  func.func @transform_2(%arg0: i32) -> (i32, i32) {
    %c0_i32 = arith.constant 0 : i32
    %c0_i32_0 = arith.constant 0 : i32
    %c0_i32_1 = arith.constant 0 : i32
    return %c0_i32, %c0_i32_0 : i32, i32
  }
  func.func @transform_3(%arg0: i32) -> (i32, i32) {
    %c0_i32 = arith.constant 0 : i32
    %c0_i32_0 = arith.constant 0 : i32
    %c0_i32_1 = arith.constant 0 : i32
    return %c0_i32, %c0_i32_0 : i32, i32
  }
  func.func @transform_4(%arg0: i32) -> (i32, i32) {
    %c0_i32 = arith.constant 0 : i32
    %c0_i32_0 = arith.constant 0 : i32
    %c0_i32_1 = arith.constant 0 : i32
    return %c0_i32, %c0_i32_0 : i32, i32
  }
  func.func @transform_5(%arg0: i32) -> (i32, i32) {
    %c0_i32 = arith.constant 0 : i32
    %c0_i32_0 = arith.constant 0 : i32
    %c0_i32_1 = arith.constant 0 : i32
    return %c0_i32, %c0_i32_0 : i32, i32
  }
  func.func @transform_6(%arg0: i32) -> (i32, i32) {
    %c0_i32 = arith.constant 0 : i32
    %c0_i32_0 = arith.constant 0 : i32
    %c0_i32_1 = arith.constant 0 : i32
    return %c0_i32, %c0_i32_0 : i32, i32
  }
  func.func @transform_7(%arg0: i32) -> (i32, i32) {
    %c0_i32 = arith.constant 0 : i32
    %c0_i32_0 = arith.constant 0 : i32
    return %arg0, %c0_i32 : i32, i32
  }
}

</mosaic_0001>

<llo_original>
// kernel: forward.3
$region0: #{forward.3}
  #allocation0 [shape = 'u32[]', space=smem, size = 0x4, offset = 0x4, fixed_abs, tag = 'smem constant byte address 0x4 - core index']
  #allocation1 [shape = 'u32[144,128]{1,0:T(1,128)}', space=vmem, size = 0x12000, scoped, tag = 'internal scratch']
  %s0 = inlined_call_operand.vmem [shape: bf16[4,416,128], index: 0, kind: input, shape index: {}]
  %s1 = inlined_call_operand.vmem [shape: bf16[128,128], index: 1, kind: input, shape index: {}]
  %s2 = inlined_call_operand.vmem [shape: f32[1,128], index: 2, kind: input, shape index: {}]
  %s3 = inlined_call_operand.vmem [shape: bf16[416,128], index: 3, kind: output, shape index: {}]
  %s4 = sld [smem:[#allocation0]]
  $region86: #{forward.3} parent=0
    _
  %s6 = ssub.s32 1, %s4
  %s7 = scalar_select 0, %s6, %s4
  $region1: #{forward.3} parent=0
    #allocation2 [shape = 'u8[425984]{0}', space=vmem, size = 0x68000, scoped, tag = 'input window, operand 0']
    loop: start=0, step=1, limit=4
    $region2: #{forward.3} parent=1 // loop_pre_header
      _
    $region3: #{forward.3} parent=1 // loop_header
      %s9 = sphi 0, %s13
      %p10 = scmp.ge.s32.totalorder %s9, 4
      %s19 = sphi 0, %s21
      %s22 = sphi 0, %s19
      %s23 = sphi 0, %s22
      %s39 = sphi 0, %s23
      %s43 = sphi 0, %s43
      %s45 = sphi 0, %s43
      %s46 = sphi 0, %s45
      %s60 = sphi 0, %s46
      %s64 = sphi 0, %s64
      %s66 = sphi 0, %s64
      %s67 = sphi 0, %s66
      %s81 = sphi 0, %s67
      %s87 = sphi 0, %s89
      %s90 = sphi 0, %s87
      %s91 = sphi 0, %s90
      %s107 = sphi 0, %s91
    $region4: #{forward.3} parent=1 // loop_header_branch
      %12 = sbr.rel (%p10) target = $region8
    $region5: #{forward.3} parent=1 // loop_body
      %s14 = ssub.s32 %s9, 1
      %s15 = ssub.s32 %s9, 2
      %s16 = sadd.s32 %s9, 1
      %s17 = ssub.s32 %s9, %s16
      %p18 = scmp.eq.s32.totalorder %s17, 0
      %s20 = sadd.s32 %s19, 1
      %s21 = scalar_select %p18, %s19, %s20
      %p24 = pneg %p18
      %p25 = scmp.eq.s32.totalorder %s9, 1
      %p26 = por %p24, %p25
      %p27 = scmp.ne.s32.totalorder %s19, %s22
      %p28 = scmp.eq.s32.totalorder %s9, 0
      %p29 = por %p27, %p28
      %p30 = scmp.ne.s32.totalorder %s19, %s22
      %p31 = scmp.eq.s32.totalorder %s14, 1
      %p32 = por %p30, %p31
      %p33 = scmp.ne.s32.totalorder %s22, %s23
      %p34 = scmp.eq.s32.totalorder %s14, 0
      %p35 = por %p33, %p34
      %p36 = scmp.ne.s32.totalorder %s22, %s23
      %p37 = scmp.eq.s32.totalorder %s15, 1
      %p38 = por %p36, %p37
      %p40 = scmp.ne.s32.totalorder %s23, %s39
      %p41 = scmp.eq.s32.totalorder %s15, 0
      %p42 = por %p40, %p41
      %s44 = sadd.s32 %s43, 1
      %p47 = scmp.eq.s32.totalorder %s9, 1
      %p48 = scmp.ne.s32.totalorder %s43, %s45
      %p49 = scmp.eq.s32.totalorder %s9, 0
      %p50 = por %p48, %p49
      %p51 = scmp.ne.s32.totalorder %s43, %s45
      %p52 = scmp.eq.s32.totalorder %s14, 1
      %p53 = por %p51, %p52
      %p54 = scmp.ne.s32.totalorder %s45, %s46
      %p55 = scmp.eq.s32.totalorder %s14, 0
      %p56 = por %p54, %p55
      %p57 = scmp.ne.s32.totalorder %s45, %s46
      %p58 = scmp.eq.s32.totalorder %s15, 1
      %p59 = por %p57, %p58
      %p61 = scmp.ne.s32.totalorder %s46, %s60
      %p62 = scmp.eq.s32.totalorder %s15, 0
      %p63 = por %p61, %p62
      %s65 = sadd.s32 %s64, 1
      %p68 = scmp.eq.s32.totalorder %s9, 1
      %p69 = scmp.ne.s32.totalorder %s64, %s66
      %p70 = scmp.eq.s32.totalorder %s9, 0
      %p71 = por %p69, %p70
      %p72 = scmp.ne.s32.totalorder %s64, %s66
      %p73 = scmp.eq.s32.totalorder %s14, 1
      %p74 = por %p72, %p73
      %p75 = scmp.ne.s32.totalorder %s66, %s67
      %p76 = scmp.eq.s32.totalorder %s14, 0
      %p77 = por %p75, %p76
      %p78 = scmp.ne.s32.totalorder %s66, %s67
      %p79 = scmp.eq.s32.totalorder %s15, 1
      %p80 = por %p78, %p79
      %p82 = scmp.ne.s32.totalorder %s67, %s81
      %p83 = scmp.eq.s32.totalorder %s15, 0
      %p84 = por %p82, %p83
      %s85 = ssub.s32 %s9, %s16
      %p86 = scmp.eq.s32.totalorder %s85, 0
      %s88 = sadd.s32 %s87, 1
      %s89 = scalar_select %p86, %s87, %s88
      %p92 = pneg %p86
      %p93 = scmp.eq.s32.totalorder %s9, 1
      %p94 = por %p92, %p93
      %p95 = scmp.ne.s32.totalorder %s87, %s90
      %p96 = scmp.eq.s32.totalorder %s9, 0
      %p97 = por %p95, %p96
      %p98 = scmp.ne.s32.totalorder %s87, %s90
      %p99 = scmp.eq.s32.totalorder %s14, 1
      %p100 = por %p98, %p99
      %p101 = scmp.ne.s32.totalorder %s90, %s91
      %p102 = scmp.eq.s32.totalorder %s14, 0
      %p103 = por %p101, %p102
      %p104 = scmp.ne.s32.totalorder %s90, %s91
      %p105 = scmp.eq.s32.totalorder %s15, 1
      %p106 = por %p104, %p105
      %p108 = scmp.ne.s32.totalorder %s91, %s107
      %p109 = scmp.eq.s32.totalorder %s15, 0
      %p110 = por %p108, %p109
      %p111 = scmp.le.s32.totalorder 1, %s9
      %p112 = scmp.lt.s32.totalorder %s9, 3
      %p113 = pnand %p111, %p112
      %p114 = pneg %p113
      // Predicated region
      $region9: #{forward.3} parent=5 // pred_check
        _
      $region10: #{forward.3} parent=5 // pred_check_branch
        %116 = sbr.rel (%p113) target = $region12
      $region11: #{forward.3} parent=5 // pred_region
        %s117 = ssub.s32 %s9, 1
        // Predicated region
        $region13: #{forward.3} parent=11 // pred_check
          %p118 = pneg %p56
        $region14: #{forward.3} parent=11 // pred_check_branch
          %120 = sbr.rel (%p118) target = $region16
        $region15: #{forward.3} parent=11 // pred_region
          _
        $region16: #{forward.3} parent=11 // pred_fallthru
          _
        // Predicated region
        $region17: #{forward.3} parent=11 // pred_check
          %p121 = pneg %p77
        $region18: #{forward.3} parent=11 // pred_check_branch
          %123 = sbr.rel (%p121) target = $region20
        $region19: #{forward.3} parent=11 // pred_region
          _
        $region20: #{forward.3} parent=11 // pred_fallthru
          _
      $region12: #{forward.3} parent=5 // pred_fallthru
        _
      %p124 = scmp.lt.s32.totalorder %s9, 2
      // Predicated region
      $region21: #{forward.3} parent=5 // pred_check
        %p125 = pneg %p124
      $region22: #{forward.3} parent=5 // pred_check_branch
        %127 = sbr.rel (%p125) target = $region24
      $region23: #{forward.3} parent=5 // pred_region
        // Predicated region
        $region25: #{forward.3} parent=23 // pred_check
          %p128 = pneg %p29
        $region26: #{forward.3} parent=23 // pred_check_branch
          %130 = sbr.rel (%p128) target = $region28
        $region27: #{forward.3} parent=23 // pred_region
          %s131 = sand.u32 %s19, 1
          %s132 = sand.u32 %s19, 1
          %s133 = smul.addr %s132, 416
          %s134 = scalar_lea.vmem [#allocation2], %s133
          %s135 = smul.u32 26, %s9
          %s136 = smul.addr %s135, 4
          %s137 = scalar_lea.vmem %s0, %s136
          // Predicated region
          $region29: #{forward.3} parent=27 // pred_check
            _
          $region30: #{forward.3} parent=27 // pred_check_branch
            %139 = sbr.rel (0) target = $region32
          $region31: #{forward.3} parent=27 // pred_region
            // Predicated region
            $region33: #{forward.3} parent=31 // pred_check
              _
            $region34: #{forward.3} parent=31 // pred_check_branch
              %141 = sbr.rel target = $region36
            $region35: #{forward.3} parent=31 // pred_region
              // Predicated region
              $region48: #{forward.3} parent=35 // pred_check
                _
              $region49: #{forward.3} parent=35 // pred_check_branch
                %362 = sbr.rel (0) target = $region51
              $region50: #{forward.3} parent=35 // pred_region
                loop: start=0, step=1, limit=1
                $region52: #{forward.3} parent=50 // loop_pre_header
                  _
                $region53: #{forward.3} parent=50 // loop_header
                  %s364 = sphi 0, %s368
                  %p365 = scmp.ge.s32.totalorder %s364, 1
                  %s369 = sphi %s137, %s137
                  %s370 = sphi %s134, %s134
                $region54: #{forward.3} parent=50 // loop_header_branch
                  %367 = sbr.rel (%p365) target = $region58
                $region55: #{forward.3} parent=50 // loop_body
                  _
                $region56: #{forward.3} parent=50 // loop_footer
                  %s368 = sadd.s32 1, %s364
                $region57: #{forward.3} parent=50 // loop_footer_branch
                  %363 = sbr.rel target = $region53
                $region58: #{forward.3} parent=50 // loop_exit
                  _
                loop: start=0, step=1, limit=1
                $region59: #{forward.3} parent=50 // loop_pre_header
                  _
                $region60: #{forward.3} parent=50 // loop_header
                  %s373 = sphi 0, %s377
                  %p374 = scmp.ge.s32.totalorder %s373, 1
                  %s378 = sphi %s137, %s137
                  %s379 = sphi %s134, %s134
                $region61: #{forward.3} parent=50 // loop_header_branch
                  %376 = sbr.rel (%p374) target = $region65
                $region62: #{forward.3} parent=50 // loop_body
                  %v380 = vld [vmem:[%s378] sm:$0xf]
                  %381 = vst [vmem:[%s379] sm:$0xf] %v380
                  %v382 = vld [vmem:[%s378 + $0x4] sm:$0xf]
                  %383 = vst [vmem:[%s379 + $0x4] sm:$0xf] %v382
                  %v384 = vld [vmem:[%s378 + $0x8] sm:$0xf]
                  %385 = vst [vmem:[%s379 + $0x8] sm:$0xf] %v384
                  %v386 = vld [vmem:[%s378 + $0xc] sm:$0xf]
                  %387 = vst [vmem:[%s379 + $0xc] sm:$0xf] %v386
                  %v388 = vld [vmem:[%s378 + $0x10] sm:$0xf]
                  %389 = vst [vmem:[%s379 + $0x10] sm:$0xf] %v388
                  %v390 = vld [vmem:[%s378 + $0x14] sm:$0xf]
                  %391 = vst [vmem:[%s379 + $0x14] sm:$0xf] %v390
                  %v392 = vld [vmem:[%s378 + $0x18] sm:$0xf]
                  %393 = vst [vmem:[%s379 + $0x18] sm:$0xf] %v392
                  %v394 = vld [vmem:[%s378 + $0x1c] sm:$0xf]
                  %395 = vst [vmem:[%s379 + $0x1c] sm:$0xf] %v394
                  %v396 = vld [vmem:[%s378 + $0x20] sm:$0xf]
                  %397 = vst [vmem:[%s379 + $0x20] sm:$0xf] %v396
                  %v398 = vld [vmem:[%s378 + $0x24] sm:$0xf]
                  %399 = vst [vmem:[%s379 + $0x24] sm:$0xf] %v398
                  %v400 = vld [vmem:[%s378 + $0x28] sm:$0xf]
                  %401 = vst [vmem:[%s379 + $0x28] sm:$0xf] %v400
                  %v402 = vld [vmem:[%s378 + $0x2c] sm:$0xf]
                  %403 = vst [vmem:[%s379 + $0x2c] sm:$0xf] %v402
                  %v404 = vld [vmem:[%s378 + $0x30] sm:$0xf]
                  %405 = vst [vmem:[%s379 + $0x30] sm:$0xf] %v404
                  %v406 = vld [vmem:[%s378 + $0x34] sm:$0xf]
                  %407 = vst [vmem:[%s379 + $0x34] sm:$0xf] %v406
                  %v408 = vld [vmem:[%s378 + $0x38] sm:$0xf]
                  %409 = vst [vmem:[%s379 + $0x38] sm:$0xf] %v408
                  %v410 = vld [vmem:[%s378 + $0x3c] sm:$0xf]
                  %411 = vst [vmem:[%s379 + $0x3c] sm:$0xf] %v410
                  %v412 = vld [vmem:[%s378 + $0x40] sm:$0xf]
                  %413 = vst [vmem:[%s379 + $0x40] sm:$0xf] %v412
                  %v414 = vld [vmem:[%s378 + $0x44] sm:$0xf]
                  %415 = vst [vmem:[%s379 + $0x44] sm:$0xf] %v414
                  %v416 = vld [vmem:[%s378 + $0x48] sm:$0xf]
                  %417 = vst [vmem:[%s379 + $0x48] sm:$0xf] %v416
                  %v418 = vld [vmem:[%s378 + $0x4c] sm:$0xf]
                  %419 = vst [vmem:[%s379 + $0x4c] sm:$0xf] %v418
                  %v420 = vld [vmem:[%s378 + $0x50] sm:$0xf]
                  %421 = vst [vmem:[%s379 + $0x50] sm:$0xf] %v420
                  %v422 = vld [vmem:[%s378 + $0x54] sm:$0xf]
                  %423 = vst [vmem:[%s379 + $0x54] sm:$0xf] %v422
                  %v424 = vld [vmem:[%s378 + $0x58] sm:$0xf]
                  %425 = vst [vmem:[%s379 + $0x58] sm:$0xf] %v424
                  %v426 = vld [vmem:[%s378 + $0x5c] sm:$0xf]
                  %427 = vst [vmem:[%s379 + $0x5c] sm:$0xf] %v426
                  %v428 = vld [vmem:[%s378 + $0x60] sm:$0xf]
                  %429 = vst [vmem:[%s379 + $0x60] sm:$0xf] %v428
                  %v430 = vld [vmem:[%s378 + $0x64] sm:$0xf]
                  %431 = vst [vmem:[%s379 + $0x64] sm:$0xf] %v430
                  %v432 = vld [vmem:[%s378 + $0xd0] sm:$0xf]
                  %433 = vst [vmem:[%s379 + $0x68] sm:$0xf] %v432
                  %v434 = vld [vmem:[%s378 + $0xd4] sm:$0xf]
                  %435 = vst [vmem:[%s379 + $0x6c] sm:$0xf] %v434
                  %v436 = vld [vmem:[%s378 + $0xd8] sm:$0xf]
                  %437 = vst [vmem:[%s379 + $0x70] sm:$0xf] %v436
                  %v438 = vld [vmem:[%s378 + $0xdc] sm:$0xf]
                  %439 = vst [vmem:[%s379 + $0x74] sm:$0xf] %v438
                  %v440 = vld [vmem:[%s378 + $0xe0] sm:$0xf]
                  %441 = vst [vmem:[%s379 + $0x78] sm:$0xf] %v440
                  %v442 = vld [vmem:[%s378 + $0xe4] sm:$0xf]
                  %443 = vst [vmem:[%s379 + $0x7c] sm:$0xf] %v442
                  %v444 = vld [vmem:[%s378 + $0xe8] sm:$0xf]
                  %445 = vst [vmem:[%s379 + $0x80] sm:$0xf] %v444
                  %v446 = vld [vmem:[%s378 + $0xec] sm:$0xf]
                  %447 = vst [vmem:[%s379 + $0x84] sm:$0xf] %v446
                  %v448 = vld [vmem:[%s378 + $0xf0] sm:$0xf]
                  %449 = vst [vmem:[%s379 + $0x88] sm:$0xf] %v448
                  %v450 = vld [vmem:[%s378 + $0xf4] sm:$0xf]
                  %451 = vst [vmem:[%s379 + $0x8c] sm:$0xf] %v450
                  %v452 = vld [vmem:[%s378 + $0xf8] sm:$0xf]
                  %453 = vst [vmem:[%s379 + $0x90] sm:$0xf] %v452
                  %v454 = vld [vmem:[%s378 + $0xfc] sm:$0xf]
                  %455 = vst [vmem:[%s379 + $0x94] sm:$0xf] %v454
                  %v456 = vld [vmem:[%s378 + $0x100] sm:$0xf]
                  %457 = vst [vmem:[%s379 + $0x98] sm:$0xf] %v456
                  %v458 = vld [vmem:[%s378 + $0x104] sm:$0xf]
                  %459 = vst [vmem:[%s379 + $0x9c] sm:$0xf] %v458
                  %v460 = vld [vmem:[%s378 + $0x108] sm:$0xf]
                  %461 = vst [vmem:[%s379 + $0xa0] sm:$0xf] %v460
                  %v462 = vld [vmem:[%s378 + $0x10c] sm:$0xf]
                  %463 = vst [vmem:[%s379 + $0xa4] sm:$0xf] %v462
                  %v464 = vld [vmem:[%s378 + $0x110] sm:$0xf]
                  %465 = vst [vmem:[%s379 + $0xa8] sm:$0xf] %v464
                  %v466 = vld [vmem:[%s378 + $0x114] sm:$0xf]
                  %467 = vst [vmem:[%s379 + $0xac] sm:$0xf] %v466
                  %v468 = vld [vmem:[%s378 + $0x118] sm:$0xf]
                  %469 = vst [vmem:[%s379 + $0xb0] sm:$0xf] %v468
                  %v470 = vld [vmem:[%s378 + $0x11c] sm:$0xf]
                  %471 = vst [vmem:[%s379 + $0xb4] sm:$0xf] %v470
                  %v472 = vld [vmem:[%s378 + $0x120] sm:$0xf]
                  %473 = vst [vmem:[%s379 + $0xb8] sm:$0xf] %v472
                  %v474 = vld [vmem:[%s378 + $0x124] sm:$0xf]
                  %475 = vst [vmem:[%s379 + $0xbc] sm:$0xf] %v474
                  %v476 = vld [vmem:[%s378 + $0x128] sm:$0xf]
                  %477 = vst [vmem:[%s379 + $0xc0] sm:$0xf] %v476
                  %v478 = vld [vmem:[%s378 + $0x12c] sm:$0xf]
                  %479 = vst [vmem:[%s379 + $0xc4] sm:$0xf] %v478
                  %v480 = vld [vmem:[%s378 + $0x130] sm:$0xf]
                  %481 = vst [vmem:[%s379 + $0xc8] sm:$0xf] %v480
                  %v482 = vld [vmem:[%s378 + $0x134] sm:$0xf]
                  %483 = vst [vmem:[%s379 + $0xcc] sm:$0xf] %v482
                  %v484 = vld [vmem:[%s378 + $0x1a0] sm:$0xf]
                  %485 = vst [vmem:[%s379 + $0xd0] sm:$0xf] %v484
                  %v486 = vld [vmem:[%s378 + $0x1a4] sm:$0xf]
                  %487 = vst [vmem:[%s379 + $0xd4] sm:$0xf] %v486
                  %v488 = vld [vmem:[%s378 + $0x1a8] sm:$0xf]
                  %489 = vst [vmem:[%s379 + $0xd8] sm:$0xf] %v488
                  %v490 = vld [vmem:[%s378 + $0x1ac] sm:$0xf]
                  %491 = vst [vmem:[%s379 + $0xdc] sm:$0xf] %v490
                  %v492 = vld [vmem:[%s378 + $0x1b0] sm:$0xf]
                  %493 = vst [vmem:[%s379 + $0xe0] sm:$0xf] %v492
                  %v494 = vld [vmem:[%s378 + $0x1b4] sm:$0xf]
                  %495 = vst [vmem:[%s379 + $0xe4] sm:$0xf] %v494
                  %v496 = vld [vmem:[%s378 + $0x1b8] sm:$0xf]
                  %497 = vst [vmem:[%s379 + $0xe8] sm:$0xf] %v496
                  %v498 = vld [vmem:[%s378 + $0x1bc] sm:$0xf]
                  %499 = vst [vmem:[%s379 + $0xec] sm:$0xf] %v498
                  %v500 = vld [vmem:[%s378 + $0x1c0] sm:$0xf]
                  %501 = vst [vmem:[%s379 + $0xf0] sm:$0xf] %v500
                  %v502 = vld [vmem:[%s378 + $0x1c4] sm:$0xf]
                  %503 = vst [vmem:[%s379 + $0xf4] sm:$0xf] %v502
                  %v504 = vld [vmem:[%s378 + $0x1c8] sm:$0xf]
                  %505 = vst [vmem:[%s379 + $0xf8] sm:$0xf] %v504
                  %v506 = vld [vmem:[%s378 + $0x1cc] sm:$0xf]
                  %507 = vst [vmem:[%s379 + $0xfc] sm:$0xf] %v506
                  %v508 = vld [vmem:[%s378 + $0x1d0] sm:$0xf]
                  %509 = vst [vmem:[%s379 + $0x100] sm:$0xf] %v508
                  %v510 = vld [vmem:[%s378 + $0x1d4] sm:$0xf]
                  %511 = vst [vmem:[%s379 + $0x104] sm:$0xf] %v510
                  %v512 = vld [vmem:[%s378 + $0x1d8] sm:$0xf]
                  %513 = vst [vmem:[%s379 + $0x108] sm:$0xf] %v512
                  %v514 = vld [vmem:[%s378 + $0x1dc] sm:$0xf]
                  %515 = vst [vmem:[%s379 + $0x10c] sm:$0xf] %v514
                  %v516 = vld [vmem:[%s378 + $0x1e0] sm:$0xf]
                  %517 = vst [vmem:[%s379 + $0x110] sm:$0xf] %v516
                  %v518 = vld [vmem:[%s378 + $0x1e4] sm:$0xf]
                  %519 = vst [vmem:[%s379 + $0x114] sm:$0xf] %v518
                  %v520 = vld [vmem:[%s378 + $0x1e8] sm:$0xf]
                  %521 = vst [vmem:[%s379 + $0x118] sm:$0xf] %v520
                  %v522 = vld [vmem:[%s378 + $0x1ec] sm:$0xf]
                  %523 = vst [vmem:[%s379 + $0x11c] sm:$0xf] %v522
                  %v524 = vld [vmem:[%s378 + $0x1f0] sm:$0xf]
                  %525 = vst [vmem:[%s379 + $0x120] sm:$0xf] %v524
                  %v526 = vld [vmem:[%s378 + $0x1f4] sm:$0xf]
                  %527 = vst [vmem:[%s379 + $0x124] sm:$0xf] %v526
                  %v528 = vld [vmem:[%s378 + $0x1f8] sm:$0xf]
                  %529 = vst [vmem:[%s379 + $0x128] sm:$0xf] %v528
                  %v530 = vld [vmem:[%s378 + $0x1fc] sm:$0xf]
                  %531 = vst [vmem:[%s379 + $0x12c] sm:$0xf] %v530
                  %v532 = vld [vmem:[%s378 + $0x200] sm:$0xf]
                  %533 = vst [vmem:[%s379 + $0x130] sm:$0xf] %v532
                  %v534 = vld [vmem:[%s378 + $0x204] sm:$0xf]
                  %535 = vst [vmem:[%s379 + $0x134] sm:$0xf] %v534
                  %v536 = vld [vmem:[%s378 + $0x270] sm:$0xf]
                  %537 = vst [vmem:[%s379 + $0x138] sm:$0xf] %v536
                  %v538 = vld [vmem:[%s378 + $0x274] sm:$0xf]
                  %539 = vst [vmem:[%s379 + $0x13c] sm:$0xf] %v538
                  %v540 = vld [vmem:[%s378 + $0x278] sm:$0xf]
                  %541 = vst [vmem:[%s379 + $0x140] sm:$0xf] %v540
                  %v542 = vld [vmem:[%s378 + $0x27c] sm:$0xf]
                  %543 = vst [vmem:[%s379 + $0x144] sm:$0xf] %v542
                  %v544 = vld [vmem:[%s378 + $0x280] sm:$0xf]
                  %545 = vst [vmem:[%s379 + $0x148] sm:$0xf] %v544
                  %v546 = vld [vmem:[%s378 + $0x284] sm:$0xf]
                  %547 = vst [vmem:[%s379 + $0x14c] sm:$0xf] %v546
                  %v548 = vld [vmem:[%s378 + $0x288] sm:$0xf]
                  %549 = vst [vmem:[%s379 + $0x150] sm:$0xf] %v548
                  %v550 = vld [vmem:[%s378 + $0x28c] sm:$0xf]
                  %551 = vst [vmem:[%s379 + $0x154] sm:$0xf] %v550
                  %v552 = vld [vmem:[%s378 + $0x290] sm:$0xf]
                  %553 = vst [vmem:[%s379 + $0x158] sm:$0xf] %v552
                  %v554 = vld [vmem:[%s378 + $0x294] sm:$0xf]
                  %555 = vst [vmem:[%s379 + $0x15c] sm:$0xf] %v554
                  %v556 = vld [vmem:[%s378 + $0x298] sm:$0xf]
                  %557 = vst [vmem:[%s379 + $0x160] sm:$0xf] %v556
                  %v558 = vld [vmem:[%s378 + $0x29c] sm:$0xf]
                  %559 = vst [vmem:[%s379 + $0x164] sm:$0xf] %v558
                  %v560 = vld [vmem:[%s378 + $0x2a0] sm:$0xf]
                  %561 = vst [vmem:[%s379 + $0x168] sm:$0xf] %v560
                  %v562 = vld [vmem:[%s378 + $0x2a4] sm:$0xf]
                  %563 = vst [vmem:[%s379 + $0x16c] sm:$0xf] %v562
                  %v564 = vld [vmem:[%s378 + $0x2a8] sm:$0xf]
                  %565 = vst [vmem:[%s379 + $0x170] sm:$0xf] %v564
                  %v566 = vld [vmem:[%s378 + $0x2ac] sm:$0xf]
                  %567 = vst [vmem:[%s379 + $0x174] sm:$0xf] %v566
                  %v568 = vld [vmem:[%s378 + $0x2b0] sm:$0xf]
                  %569 = vst [vmem:[%s379 + $0x178] sm:$0xf] %v568
                  %v570 = vld [vmem:[%s378 + $0x2b4] sm:$0xf]
                  %571 = vst [vmem:[%s379 + $0x17c] sm:$0xf] %v570
                  %v572 = vld [vmem:[%s378 + $0x2b8] sm:$0xf]
                  %573 = vst [vmem:[%s379 + $0x180] sm:$0xf] %v572
                  %v574 = vld [vmem:[%s378 + $0x2bc] sm:$0xf]
                  %575 = vst [vmem:[%s379 + $0x184] sm:$0xf] %v574
                  %v576 = vld [vmem:[%s378 + $0x2c0] sm:$0xf]
                  %577 = vst [vmem:[%s379 + $0x188] sm:$0xf] %v576
                  %v578 = vld [vmem:[%s378 + $0x2c4] sm:$0xf]
                  %579 = vst [vmem:[%s379 + $0x18c] sm:$0xf] %v578
                  %v580 = vld [vmem:[%s378 + $0x2c8] sm:$0xf]
                  %581 = vst [vmem:[%s379 + $0x190] sm:$0xf] %v580
                  %v582 = vld [vmem:[%s378 + $0x2cc] sm:$0xf]
                  %583 = vst [vmem:[%s379 + $0x194] sm:$0xf] %v582
                  %v584 = vld [vmem:[%s378 + $0x2d0] sm:$0xf]
                  %585 = vst [vmem:[%s379 + $0x198] sm:$0xf] %v584
                  %v586 = vld [vmem:[%s378 + $0x2d4] sm:$0xf]
                  %587 = vst [vmem:[%s379 + $0x19c] sm:$0xf] %v586
                $region63: #{forward.3} parent=50 // loop_footer
                  %s377 = sadd.s32 1, %s373
                $region64: #{forward.3} parent=50 // loop_footer_branch
                  %372 = sbr.rel target = $region60
                $region65: #{forward.3} parent=50 // loop_exit
                  _
              $region51: #{forward.3} parent=35 // pred_fallthru
                _
            $region36: #{forward.3} parent=31 // pred_fallthru
              _
            // Predicated region
            $region37: #{forward.3} parent=31 // pred_check
              _
            $region38: #{forward.3} parent=31 // pred_check_branch
              %143 = sbr.rel (0) target = $region40
            $region39: #{forward.3} parent=31 // pred_region
              loop: start=0, step=1, limit=1
              $region41: #{forward.3} parent=39 // loop_pre_header
                _
              $region42: #{forward.3} parent=39 // loop_header
                %s146 = sphi 0, %s150
                %p147 = scmp.ge.s32.totalorder %s146, 1
                %s151 = sphi %s137, %s137
                %s152 = sphi %s134, %s134
              $region43: #{forward.3} parent=39 // loop_header_branch
                %149 = sbr.rel (%p147) target = $region47
              $region44: #{forward.3} parent=39 // loop_body
                %v153 = vld [vmem:[%s151] sm:$0xf]
                %154 = vst [vmem:[%s152] sm:$0xf] %v153
                %v155 = vld [vmem:[%s151 + $0x4] sm:$0xf]
                %156 = vst [vmem:[%s152 + $0x4] sm:$0xf] %v155
                %v157 = vld [vmem:[%s151 + $0x8] sm:$0xf]
                %158 = vst [vmem:[%s152 + $0x8] sm:$0xf] %v157
                %v159 = vld [vmem:[%s151 + $0xc] sm:$0xf]
                %160 = vst [vmem:[%s152 + $0xc] sm:$0xf] %v159
                %v161 = vld [vmem:[%s151 + $0x10] sm:$0xf]
                %162 = vst [vmem:[%s152 + $0x10] sm:$0xf] %v161
                %v163 = vld [vmem:[%s151 + $0x14] sm:$0xf]
                %164 = vst [vmem:[%s152 + $0x14] sm:$0xf] %v163
                %v165 = vld [vmem:[%s151 + $0x18] sm:$0xf]
                %166 = vst [vmem:[%s152 + $0x18] sm:$0xf] %v165
                %v167 = vld [vmem:[%s151 + $0x1c] sm:$0xf]
                %168 = vst [vmem:[%s152 + $0x1c] sm:$0xf] %v167
                %v169 = vld [vmem:[%s151 + $0x20] sm:$0xf]
                %170 = vst [vmem:[%s152 + $0x20] sm:$0xf] %v169
                %v171 = vld [vmem:[%s151 + $0x24] sm:$0xf]
                %172 = vst [vmem:[%s152 + $0x24] sm:$0xf] %v171
                %v173 = vld [vmem:[%s151 + $0x28] sm:$0xf]
                %174 = vst [vmem:[%s152 + $0x28] sm:$0xf] %v173
                %v175 = vld [vmem:[%s151 + $0x2c] sm:$0xf]
                %176 = vst [vmem:[%s152 + $0x2c] sm:$0xf] %v175
                %v177 = vld [vmem:[%s151 + $0x30] sm:$0xf]
                %178 = vst [vmem:[%s152 + $0x30] sm:$0xf] %v177
                %v179 = vld [vmem:[%s151 + $0x34] sm:$0xf]
                %180 = vst [vmem:[%s152 + $0x34] sm:$0xf] %v179
                %v181 = vld [vmem:[%s151 + $0x38] sm:$0xf]
                %182 = vst [vmem:[%s152 + $0x38] sm:$0xf] %v181
                %v183 = vld [vmem:[%s151 + $0x3c] sm:$0xf]
                %184 = vst [vmem:[%s152 + $0x3c] sm:$0xf] %v183
                %v185 = vld [vmem:[%s151 + $0x40] sm:$0xf]
                %186 = vst [vmem:[%s152 + $0x40] sm:$0xf] %v185
                %v187 = vld [vmem:[%s151 + $0x44] sm:$0xf]
                %188 = vst [vmem:[%s152 + $0x44] sm:$0xf] %v187
                %v189 = vld [vmem:[%s151 + $0x48] sm:$0xf]
                %190 = vst [vmem:[%s152 + $0x48] sm:$0xf] %v189
                %v191 = vld [vmem:[%s151 + $0x4c] sm:$0xf]
                %192 = vst [vmem:[%s152 + $0x4c] sm:$0xf] %v191
                %v193 = vld [vmem:[%s151 + $0x50] sm:$0xf]
                %194 = vst [vmem:[%s152 + $0x50] sm:$0xf] %v193
                %v195 = vld [vmem:[%s151 + $0x54] sm:$0xf]
                %196 = vst [vmem:[%s152 + $0x54] sm:$0xf] %v195
                %v197 = vld [vmem:[%s151 + $0x58] sm:$0xf]
                %198 = vst [vmem:[%s152 + $0x58] sm:$0xf] %v197
                %v199 = vld [vmem:[%s151 + $0x5c] sm:$0xf]
                %200 = vst [vmem:[%s152 + $0x5c] sm:$0xf] %v199
                %v201 = vld [vmem:[%s151 + $0x60] sm:$0xf]
                %202 = vst [vmem:[%s152 + $0x60] sm:$0xf] %v201
                %v203 = vld [vmem:[%s151 + $0x64] sm:$0xf]
                %204 = vst [vmem:[%s152 + $0x64] sm:$0xf] %v203
                %v205 = vld [vmem:[%s151 + $0xd0] sm:$0xf]
                %206 = vst [vmem:[%s152 + $0x68] sm:$0xf] %v205
                %v207 = vld [vmem:[%s151 + $0xd4] sm:$0xf]
                %208 = vst [vmem:[%s152 + $0x6c] sm:$0xf] %v207
                %v209 = vld [vmem:[%s151 + $0xd8] sm:$0xf]
                %210 = vst [vmem:[%s152 + $0x70] sm:$0xf] %v209
                %v211 = vld [vmem:[%s151 + $0xdc] sm:$0xf]
                %212 = vst [vmem:[%s152 + $0x74] sm:$0xf] %v211
                %v213 = vld [vmem:[%s151 + $0xe0] sm:$0xf]
                %214 = vst [vmem:[%s152 + $0x78] sm:$0xf] %v213
                %v215 = vld [vmem:[%s151 + $0xe4] sm:$0xf]
                %216 = vst [vmem:[%s152 + $0x7c] sm:$0xf] %v215
                %v217 = vld [vmem:[%s151 + $0xe8] sm:$0xf]
                %218 = vst [vmem:[%s152 + $0x80] sm:$0xf] %v217
                %v219 = vld [vmem:[%s151 + $0xec] sm:$0xf]
                %220 = vst [vmem:[%s152 + $0x84] sm:$0xf] %v219
                %v221 = vld [vmem:[%s151 + $0xf0] sm:$0xf]
                %222 = vst [vmem:[%s152 + $0x88] sm:$0xf] %v221
                %v223 = vld [vmem:[%s151 + $0xf4] sm:$0xf]
                %224 = vst [vmem:[%s152 + $0x8c] sm:$0xf] %v223
                %v225 = vld [vmem:[%s151 + $0xf8] sm:$0xf]
                %226 = vst [vmem:[%s152 + $0x90] sm:$0xf] %v225
                %v227 = vld [vmem:[%s151 + $0xfc] sm:$0xf]
                %228 = vst [vmem:[%s152 + $0x94] sm:$0xf] %v227
                %v229 = vld [vmem:[%s151 + $0x100] sm:$0xf]
                %230 = vst [vmem:[%s152 + $0x98] sm:$0xf] %v229
                %v231 = vld [vmem:[%s151 + $0x104] sm:$0xf]
                %232 = vst [vmem:[%s152 + $0x9c] sm:$0xf] %v231
                %v233 = vld [vmem:[%s151 + $0x108] sm:$0xf]
                %234 = vst [vmem:[%s152 + $0xa0] sm:$0xf] %v233
                %v235 = vld [vmem:[%s151 + $0x10c] sm:$0xf]
                %236 = vst [vmem:[%s152 + $0xa4] sm:$0xf] %v235
                %v237 = vld [vmem:[%s151 + $0x110] sm:$0xf]
                %238 = vst [vmem:[%s152 + $0xa8] sm:$0xf] %v237
                %v239 = vld [vmem:[%s151 + $0x114] sm:$0xf]
                %240 = vst [vmem:[%s152 + $0xac] sm:$0xf] %v239
                %v241 = vld [vmem:[%s151 + $0x118] sm:$0xf]
                %242 = vst [vmem:[%s152 + $0xb0] sm:$0xf] %v241
                %v243 = vld [vmem:[%s151 + $0x11c] sm:$0xf]
                %244 = vst [vmem:[%s152 + $0xb4] sm:$0xf] %v243
                %v245 = vld [vmem:[%s151 + $0x120] sm:$0xf]
                %246 = vst [vmem:[%s152 + $0xb8] sm:$0xf] %v245
                %v247 = vld [vmem:[%s151 + $0x124] sm:$0xf]
                %248 = vst [vmem:[%s152 + $0xbc] sm:$0xf] %v247
                %v249 = vld [vmem:[%s151 + $0x128] sm:$0xf]
                %250 = vst [vmem:[%s152 + $0xc0] sm:$0xf] %v249
                %v251 = vld [vmem:[%s151 + $0x12c] sm:$0xf]
                %252 = vst [vmem:[%s152 + $0xc4] sm:$0xf] %v251
                %v253 = vld [vmem:[%s151 + $0x130] sm:$0xf]
                %254 = vst [vmem:[%s152 + $0xc8] sm:$0xf] %v253
                %v255 = vld [vmem:[%s151 + $0x134] sm:$0xf]
                %256 = vst [vmem:[%s152 + $0xcc] sm:$0xf] %v255
                %v257 = vld [vmem:[%s151 + $0x1a0] sm:$0xf]
                %258 = vst [vmem:[%s152 + $0xd0] sm:$0xf] %v257
                %v259 = vld [vmem:[%s151 + $0x1a4] sm:$0xf]
                %260 = vst [vmem:[%s152 + $0xd4] sm:$0xf] %v259
                %v261 = vld [vmem:[%s151 + $0x1a8] sm:$0xf]
                %262 = vst [vmem:[%s152 + $0xd8] sm:$0xf] %v261
                %v263 = vld [vmem:[%s151 + $0x1ac] sm:$0xf]
                %264 = vst [vmem:[%s152 + $0xdc] sm:$0xf] %v263
                %v265 = vld [vmem:[%s151 + $0x1b0] sm:$0xf]
                %266 = vst [vmem:[%s152 + $0xe0] sm:$0xf] %v265
                %v267 = vld [vmem:[%s151 + $0x1b4] sm:$0xf]
                %268 = vst [vmem:[%s152 + $0xe4] sm:$0xf] %v267
                %v269 = vld [vmem:[%s151 + $0x1b8] sm:$0xf]
                %270 = vst [vmem:[%s152 + $0xe8] sm:$0xf] %v269
                %v271 = vld [vmem:[%s151 + $0x1bc] sm:$0xf]
                %272 = vst [vmem:[%s152 + $0xec] sm:$0xf] %v271
                %v273 = vld [vmem:[%s151 + $0x1c0] sm:$0xf]
                %274 = vst [vmem:[%s152 + $0xf0] sm:$0xf] %v273
                %v275 = vld [vmem:[%s151 + $0x1c4] sm:$0xf]
                %276 = vst [vmem:[%s152 + $0xf4] sm:$0xf] %v275
                %v277 = vld [vmem:[%s151 + $0x1c8] sm:$0xf]
                %278 = vst [vmem:[%s152 + $0xf8] sm:$0xf] %v277
                %v279 = vld [vmem:[%s151 + $0x1cc] sm:$0xf]
                %280 = vst [vmem:[%s152 + $0xfc] sm:$0xf] %v279
                %v281 = vld [vmem:[%s151 + $0x1d0] sm:$0xf]
                %282 = vst [vmem:[%s152 + $0x100] sm:$0xf] %v281
                %v283 = vld [vmem:[%s151 + $0x1d4] sm:$0xf]
                %284 = vst [vmem:[%s152 + $0x104] sm:$0xf] %v283
                %v285 = vld [vmem:[%s151 + $0x1d8] sm:$0xf]
                %286 = vst [vmem:[%s152 + $0x108] sm:$0xf] %v285
                %v287 = vld [vmem:[%s151 + $0x1dc] sm:$0xf]
                %288 = vst [vmem:[%s152 + $0x10c] sm:$0xf] %v287
                %v289 = vld [vmem:[%s151 + $0x1e0] sm:$0xf]
                %290 = vst [vmem:[%s152 + $0x110] sm:$0xf] %v289
                %v291 = vld [vmem:[%s151 + $0x1e4] sm:$0xf]
                %292 = vst [vmem:[%s152 + $0x114] sm:$0xf] %v291
                %v293 = vld [vmem:[%s151 + $0x1e8] sm:$0xf]
                %294 = vst [vmem:[%s152 + $0x118] sm:$0xf] %v293
                %v295 = vld [vmem:[%s151 + $0x1ec] sm:$0xf]
                %296 = vst [vmem:[%s152 + $0x11c] sm:$0xf] %v295
                %v297 = vld [vmem:[%s151 + $0x1f0] sm:$0xf]
                %298 = vst [vmem:[%s152 + $0x120] sm:$0xf] %v297
                %v299 = vld [vmem:[%s151 + $0x1f4] sm:$0xf]
                %300 = vst [vmem:[%s152 + $0x124] sm:$0xf] %v299
                %v301 = vld [vmem:[%s151 + $0x1f8] sm:$0xf]
                %302 = vst [vmem:[%s152 + $0x128] sm:$0xf] %v301
                %v303 = vld [vmem:[%s151 + $0x1fc] sm:$0xf]
                %304 = vst [vmem:[%s152 + $0x12c] sm:$0xf] %v303
                %v305 = vld [vmem:[%s151 + $0x200] sm:$0xf]
                %306 = vst [vmem:[%s152 + $0x130] sm:$0xf] %v305
                %v307 = vld [vmem:[%s151 + $0x204] sm:$0xf]
                %308 = vst [vmem:[%s152 + $0x134] sm:$0xf] %v307
                %v309 = vld [vmem:[%s151 + $0x270] sm:$0xf]
                %310 = vst [vmem:[%s152 + $0x138] sm:$0xf] %v309
                %v311 = vld [vmem:[%s151 + $0x274] sm:$0xf]
                %312 = vst [vmem:[%s152 + $0x13c] sm:$0xf] %v311
                %v313 = vld [vmem:[%s151 + $0x278] sm:$0xf]
                %314 = vst [vmem:[%s152 + $0x140] sm:$0xf] %v313
                %v315 = vld [vmem:[%s151 + $0x27c] sm:$0xf]
                %316 = vst [vmem:[%s152 + $0x144] sm:$0xf] %v315
                %v317 = vld [vmem:[%s151 + $0x280] sm:$0xf]
                %318 = vst [vmem:[%s152 + $0x148] sm:$0xf] %v317
                %v319 = vld [vmem:[%s151 + $0x284] sm:$0xf]
                %320 = vst [vmem:[%s152 + $0x14c] sm:$0xf] %v319
                %v321 = vld [vmem:[%s151 + $0x288] sm:$0xf]
                %322 = vst [vmem:[%s152 + $0x150] sm:$0xf] %v321
                %v323 = vld [vmem:[%s151 + $0x28c] sm:$0xf]
                %324 = vst [vmem:[%s152 + $0x154] sm:$0xf] %v323
                %v325 = vld [vmem:[%s151 + $0x290] sm:$0xf]
                %326 = vst [vmem:[%s152 + $0x158] sm:$0xf] %v325
                %v327 = vld [vmem:[%s151 + $0x294] sm:$0xf]
                %328 = vst [vmem:[%s152 + $0x15c] sm:$0xf] %v327
                %v329 = vld [vmem:[%s151 + $0x298] sm:$0xf]
                %330 = vst [vmem:[%s152 + $0x160] sm:$0xf] %v329
                %v331 = vld [vmem:[%s151 + $0x29c] sm:$0xf]
                %332 = vst [vmem:[%s152 + $0x164] sm:$0xf] %v331
                %v333 = vld [vmem:[%s151 + $0x2a0] sm:$0xf]
                %334 = vst [vmem:[%s152 + $0x168] sm:$0xf] %v333
                %v335 = vld [vmem:[%s151 + $0x2a4] sm:$0xf]
                %336 = vst [vmem:[%s152 + $0x16c] sm:$0xf] %v335
                %v337 = vld [vmem:[%s151 + $0x2a8] sm:$0xf]
                %338 = vst [vmem:[%s152 + $0x170] sm:$0xf] %v337
                %v339 = vld [vmem:[%s151 + $0x2ac] sm:$0xf]
                %340 = vst [vmem:[%s152 + $0x174] sm:$0xf] %v339
                %v341 = vld [vmem:[%s151 + $0x2b0] sm:$0xf]
                %342 = vst [vmem:[%s152 + $0x178] sm:$0xf] %v341
                %v343 = vld [vmem:[%s151 + $0x2b4] sm:$0xf]
                %344 = vst [vmem:[%s152 + $0x17c] sm:$0xf] %v343
                %v345 = vld [vmem:[%s151 + $0x2b8] sm:$0xf]
                %346 = vst [vmem:[%s152 + $0x180] sm:$0xf] %v345
                %v347 = vld [vmem:[%s151 + $0x2bc] sm:$0xf]
                %348 = vst [vmem:[%s152 + $0x184] sm:$0xf] %v347
                %v349 = vld [vmem:[%s151 + $0x2c0] sm:$0xf]
                %350 = vst [vmem:[%s152 + $0x188] sm:$0xf] %v349
                %v351 = vld [vmem:[%s151 + $0x2c4] sm:$0xf]
                %352 = vst [vmem:[%s152 + $0x18c] sm:$0xf] %v351
                %v353 = vld [vmem:[%s151 + $0x2c8] sm:$0xf]
                %354 = vst [vmem:[%s152 + $0x190] sm:$0xf] %v353
                %v355 = vld [vmem:[%s151 + $0x2cc] sm:$0xf]
                %356 = vst [vmem:[%s152 + $0x194] sm:$0xf] %v355
                %v357 = vld [vmem:[%s151 + $0x2d0] sm:$0xf]
                %358 = vst [vmem:[%s152 + $0x198] sm:$0xf] %v357
                %v359 = vld [vmem:[%s151 + $0x2d4] sm:$0xf]
                %360 = vst [vmem:[%s152 + $0x19c] sm:$0xf] %v359
              $region45: #{forward.3} parent=39 // loop_footer
                %s150 = sadd.s32 1, %s146
              $region46: #{forward.3} parent=39 // loop_footer_branch
                %145 = sbr.rel target = $region42
              $region47: #{forward.3} parent=39 // loop_exit
                _
            $region40: #{forward.3} parent=31 // pred_fallthru
              _
          $region32: #{forward.3} parent=27 // pred_fallthru
            _
          %588 = vnop
        $region28: #{forward.3} parent=23 // pred_fallthru
          _
      $region24: #{forward.3} parent=5 // pred_fallthru
        _
      %p589 = scmp.le.s32.totalorder 1, %s9
      %p590 = scmp.lt.s32.totalorder %s9, 3
      %p591 = pnand %p589, %p590
      %p592 = pneg %p591
      // Predicated region
      $region66: #{forward.3} parent=5 // pred_check
        _
      $region67: #{forward.3} parent=5 // pred_check_branch
        %594 = sbr.rel (%p591) target = $region69
      $region68: #{forward.3} parent=5 // pred_region
        %s595 = ssub.s32 %s9, 1
        %s596 = sand.u32 %s22, 1
        %s597 = sand.u32 %s22, 1
        %s598 = smul.addr %s597, 416
        %s599 = scalar_lea.vmem [#allocation2], %s598
        // Predicated region
        $region70: #{forward.3} parent=68 // pred_check
          %p600 = pneg %p35
        $region71: #{forward.3} parent=68 // pred_check_branch
          %602 = sbr.rel (%p600) target = $region73
        $region72: #{forward.3} parent=68 // pred_region
          _
        $region73: #{forward.3} parent=68 // pred_fallthru
          _
        %s603 = sand.u32 %s22, 1
        %s604 = sand.u32 %s22, 1
        %s605 = smul.addr %s604, 416
        %s606 = scalar_lea.vmem [#allocation2], %s605
        %p607 = pneg %p35
        %p608 = pneg %p32
        %p609 = pneg %p56
        %p610 = pneg %p53
        %p611 = pneg %p77
        %p612 = pneg %p74
        %p613 = pneg %p103
        %p614 = pneg %p100
        %s615 = smul.u32 26, %s14
        %p616 = scmp.lt.s32.totalorder %s615, 51
        %s617 = scalar_select %p616, %s615, 51
        %s618 = smul.addr %s617, 4
        %s619 = scalar_lea.vmem %s3, %s618
        %s620 = smul.u32 26, %s14
        %s621 = smul.u32 26, %s14
        %p622 = scmp.lt.s32.totalorder %s621, 51
        %s623 = scalar_select %p622, %s621, 51
        %s624 = smul.addr %s623, 4
        %s625 = scalar_lea.vmem %s3, %s624
        %s626 = smul.u32 26, %s14
        %v628 = vld [vmem:[%s599] sm:$0xf]
        %v629 = vld [vmem:[%s599 + $0x4] sm:$0xf]
        %v630 = vld [vmem:[%s599 + $0x8] sm:$0xf]
        %v631 = vld [vmem:[%s599 + $0xc] sm:$0xf]
        %v632 = vld [vmem:[%s599 + $0x10] sm:$0xf]
        %v633 = vld [vmem:[%s599 + $0x14] sm:$0xf]
        %v634 = vld [vmem:[%s599 + $0x18] sm:$0xf]
        %v635 = vld [vmem:[%s599 + $0x1c] sm:$0xf]
        %v636 = vld [vmem:[%s599 + $0x20] sm:$0xf]
        %v637 = vld [vmem:[%s599 + $0x24] sm:$0xf]
        %v638 = vld [vmem:[%s599 + $0x28] sm:$0xf]
        %v639 = vld [vmem:[%s599 + $0x2c] sm:$0xf]
        %v640 = vld [vmem:[%s599 + $0x30] sm:$0xf]
        %v641 = vld [vmem:[%s599 + $0x34] sm:$0xf]
        %v642 = vld [vmem:[%s599 + $0x38] sm:$0xf]
        %v643 = vld [vmem:[%s599 + $0x3c] sm:$0xf]
        %v644 = vld [vmem:[%s599 + $0x40] sm:$0xf]
        %v645 = vld [vmem:[%s599 + $0x44] sm:$0xf]
        %v646 = vld [vmem:[%s599 + $0x48] sm:$0xf]
        %v647 = vld [vmem:[%s599 + $0x4c] sm:$0xf]
        %v648 = vld [vmem:[%s599 + $0x50] sm:$0xf]
        %v649 = vld [vmem:[%s599 + $0x54] sm:$0xf]
        %v650 = vld [vmem:[%s599 + $0x58] sm:$0xf]
        %v651 = vld [vmem:[%s599 + $0x5c] sm:$0xf]
        %v652 = vld [vmem:[%s599 + $0x60] sm:$0xf]
        %v653 = vld [vmem:[%s599 + $0x64] sm:$0xf]
        %v654 = vld [vmem:[%s599 + $0x68] sm:$0xf]
        %v655 = vld [vmem:[%s599 + $0x6c] sm:$0xf]
        %v656 = vld [vmem:[%s599 + $0x70] sm:$0xf]
        %v657 = vld [vmem:[%s599 + $0x74] sm:$0xf]
        %v658 = vld [vmem:[%s599 + $0x78] sm:$0xf]
        %v659 = vld [vmem:[%s599 + $0x7c] sm:$0xf]
        %v660 = vld [vmem:[%s599 + $0x80] sm:$0xf]
        %v661 = vld [vmem:[%s599 + $0x84] sm:$0xf]
        %v662 = vld [vmem:[%s599 + $0x88] sm:$0xf]
        %v663 = vld [vmem:[%s599 + $0x8c] sm:$0xf]
        %v664 = vld [vmem:[%s599 + $0x90] sm:$0xf]
        %v665 = vld [vmem:[%s599 + $0x94] sm:$0xf]
        %v666 = vld [vmem:[%s599 + $0x98] sm:$0xf]
        %v667 = vld [vmem:[%s599 + $0x9c] sm:$0xf]
        %v668 = vld [vmem:[%s599 + $0xa0] sm:$0xf]
        %v669 = vld [vmem:[%s599 + $0xa4] sm:$0xf]
        %v670 = vld [vmem:[%s599 + $0xa8] sm:$0xf]
        %v671 = vld [vmem:[%s599 + $0xac] sm:$0xf]
        %v672 = vld [vmem:[%s599 + $0xb0] sm:$0xf]
        %v673 = vld [vmem:[%s599 + $0xb4] sm:$0xf]
        %v674 = vld [vmem:[%s599 + $0xb8] sm:$0xf]
        %v675 = vld [vmem:[%s599 + $0xbc] sm:$0xf]
        %v676 = vld [vmem:[%s599 + $0xc0] sm:$0xf]
        %v677 = vld [vmem:[%s599 + $0xc4] sm:$0xf]
        %v678 = vld [vmem:[%s599 + $0xc8] sm:$0xf]
        %v679 = vld [vmem:[%s599 + $0xcc] sm:$0xf]
        %v680 = vld [vmem:[%s599 + $0xd0] sm:$0xf]
        %v681 = vld [vmem:[%s599 + $0xd4] sm:$0xf]
        %v682 = vld [vmem:[%s599 + $0xd8] sm:$0xf]
        %v683 = vld [vmem:[%s599 + $0xdc] sm:$0xf]
        %v684 = vld [vmem:[%s599 + $0xe0] sm:$0xf]
        %v685 = vld [vmem:[%s599 + $0xe4] sm:$0xf]
        %v686 = vld [vmem:[%s599 + $0xe8] sm:$0xf]
        %v687 = vld [vmem:[%s599 + $0xec] sm:$0xf]
        %v688 = vld [vmem:[%s599 + $0xf0] sm:$0xf]
        %v689 = vld [vmem:[%s599 + $0xf4] sm:$0xf]
        %v690 = vld [vmem:[%s599 + $0xf8] sm:$0xf]
        %v691 = vld [vmem:[%s599 + $0xfc] sm:$0xf]
        %v692 = vld [vmem:[%s599 + $0x100] sm:$0xf]
        %v693 = vld [vmem:[%s599 + $0x104] sm:$0xf]
        %v694 = vld [vmem:[%s599 + $0x108] sm:$0xf]
        %v695 = vld [vmem:[%s599 + $0x10c] sm:$0xf]
        %v696 = vld [vmem:[%s599 + $0x110] sm:$0xf]
        %v697 = vld [vmem:[%s599 + $0x114] sm:$0xf]
        %v698 = vld [vmem:[%s599 + $0x118] sm:$0xf]
        %v699 = vld [vmem:[%s599 + $0x11c] sm:$0xf]
        %v700 = vld [vmem:[%s599 + $0x120] sm:$0xf]
        %v701 = vld [vmem:[%s599 + $0x124] sm:$0xf]
        %v702 = vld [vmem:[%s599 + $0x128] sm:$0xf]
        %v703 = vld [vmem:[%s599 + $0x12c] sm:$0xf]
        %v704 = vld [vmem:[%s599 + $0x130] sm:$0xf]
        %v705 = vld [vmem:[%s599 + $0x134] sm:$0xf]
        %v706 = vld [vmem:[%s599 + $0x138] sm:$0xf]
        %v707 = vld [vmem:[%s599 + $0x13c] sm:$0xf]
        %v708 = vld [vmem:[%s599 + $0x140] sm:$0xf]
        %v709 = vld [vmem:[%s599 + $0x144] sm:$0xf]
        %v710 = vld [vmem:[%s599 + $0x148] sm:$0xf]
        %v711 = vld [vmem:[%s599 + $0x14c] sm:$0xf]
        %v712 = vld [vmem:[%s599 + $0x150] sm:$0xf]
        %v713 = vld [vmem:[%s599 + $0x154] sm:$0xf]
        %v714 = vld [vmem:[%s599 + $0x158] sm:$0xf]
        %v715 = vld [vmem:[%s599 + $0x15c] sm:$0xf]
        %v716 = vld [vmem:[%s599 + $0x160] sm:$0xf]
        %v717 = vld [vmem:[%s599 + $0x164] sm:$0xf]
        %v718 = vld [vmem:[%s599 + $0x168] sm:$0xf]
        %v719 = vld [vmem:[%s599 + $0x16c] sm:$0xf]
        %v720 = vld [vmem:[%s599 + $0x170] sm:$0xf]
        %v721 = vld [vmem:[%s599 + $0x174] sm:$0xf]
        %v722 = vld [vmem:[%s599 + $0x178] sm:$0xf]
        %v723 = vld [vmem:[%s599 + $0x17c] sm:$0xf]
        %v724 = vld [vmem:[%s599 + $0x180] sm:$0xf]
        %v725 = vld [vmem:[%s599 + $0x184] sm:$0xf]
        %v726 = vld [vmem:[%s599 + $0x188] sm:$0xf]
        %v727 = vld [vmem:[%s599 + $0x18c] sm:$0xf]
        %v728 = vld [vmem:[%s599 + $0x190] sm:$0xf]
        %v729 = vld [vmem:[%s599 + $0x194] sm:$0xf]
        %v730 = vld [vmem:[%s599 + $0x198] sm:$0xf]
        %v731 = vld [vmem:[%s599 + $0x19c] sm:$0xf]
        %v732 = vld [vmem:[%s1] sm:$0xf]
        %v733 = vld [vmem:[%s1 + $0x4] sm:$0xf]
        %v734 = vld [vmem:[%s1 + $0x8] sm:$0xf]
        %v735 = vld [vmem:[%s1 + $0xc] sm:$0xf]
        %v736 = vld [vmem:[%s1 + $0x10] sm:$0xf]
        %v737 = vld [vmem:[%s1 + $0x14] sm:$0xf]
        %v738 = vld [vmem:[%s1 + $0x18] sm:$0xf]
        %v739 = vld [vmem:[%s1 + $0x1c] sm:$0xf]
        %v740 = vld [vmem:[%s1 + $0x20] sm:$0xf]
        %v741 = vld [vmem:[%s1 + $0x24] sm:$0xf]
        %v742 = vld [vmem:[%s1 + $0x28] sm:$0xf]
        %v743 = vld [vmem:[%s1 + $0x2c] sm:$0xf]
        %v744 = vld [vmem:[%s1 + $0x30] sm:$0xf]
        %v745 = vld [vmem:[%s1 + $0x34] sm:$0xf]
        %v746 = vld [vmem:[%s1 + $0x38] sm:$0xf]
        %v747 = vld [vmem:[%s1 + $0x3c] sm:$0xf]
        %v852 = vunpack.c.l.b16 %v628
        %v853 = vunpack.c.l.b16 %v629
        %v854 = vunpack.c.l.b16 %v630
        %v855 = vunpack.c.l.b16 %v631
        %v856 = vunpack.c.l.b16 %v632
        %v857 = vunpack.c.l.b16 %v633
        %v858 = vunpack.c.l.b16 %v634
        %v859 = vunpack.c.l.b16 %v635
        %v860 = vunpack.c.l.b16 %v636
        %v861 = vunpack.c.l.b16 %v637
        %v862 = vunpack.c.l.b16 %v638
        %v863 = vunpack.c.l.b16 %v639
        %v864 = vunpack.c.l.b16 %v640
        %v865 = vunpack.c.l.b16 %v641
        %v866 = vunpack.c.l.b16 %v642
        %v867 = vunpack.c.l.b16 %v643
        %v868 = vunpack.c.l.b16 %v644
        %v869 = vunpack.c.l.b16 %v645
        %v870 = vunpack.c.l.b16 %v646
        %v871 = vunpack.c.l.b16 %v647
        %v872 = vunpack.c.l.b16 %v648
        %v873 = vunpack.c.l.b16 %v649
        %v874 = vunpack.c.l.b16 %v650
        %v875 = vunpack.c.l.b16 %v651
        %v876 = vunpack.c.l.b16 %v652
        %v877 = vunpack.c.l.b16 %v653
        %v878 = vunpack.c.l.b16 %v654
        %v879 = vunpack.c.l.b16 %v655
        %v880 = vunpack.c.l.b16 %v656
        %v881 = vunpack.c.l.b16 %v657
        %v882 = vunpack.c.l.b16 %v658
        %v883 = vunpack.c.l.b16 %v659
        %v884 = vunpack.c.l.b16 %v660
        %v885 = vunpack.c.l.b16 %v661
        %v886 = vunpack.c.l.b16 %v662
        %v887 = vunpack.c.l.b16 %v663
        %v888 = vunpack.c.l.b16 %v664
        %v889 = vunpack.c.l.b16 %v665
        %v890 = vunpack.c.l.b16 %v666
        %v891 = vunpack.c.l.b16 %v667
        %v892 = vunpack.c.l.b16 %v668
        %v893 = vunpack.c.l.b16 %v669
        %v894 = vunpack.c.l.b16 %v670
        %v895 = vunpack.c.l.b16 %v671
        %v896 = vunpack.c.l.b16 %v672
        %v897 = vunpack.c.l.b16 %v673
        %v898 = vunpack.c.l.b16 %v674
        %v899 = vunpack.c.l.b16 %v675
        %v900 = vunpack.c.l.b16 %v676
        %v901 = vunpack.c.l.b16 %v677
        %v902 = vunpack.c.l.b16 %v678
        %v903 = vunpack.c.l.b16 %v679
        %v904 = vunpack.c.l.b16 %v680
        %v905 = vunpack.c.l.b16 %v681
        %v906 = vunpack.c.l.b16 %v682
        %v907 = vunpack.c.l.b16 %v683
        %v908 = vunpack.c.l.b16 %v684
        %v909 = vunpack.c.l.b16 %v685
        %v910 = vunpack.c.l.b16 %v686
        %v911 = vunpack.c.l.b16 %v687
        %v912 = vunpack.c.l.b16 %v688
        %v913 = vunpack.c.l.b16 %v689
        %v914 = vunpack.c.l.b16 %v690
        %v915 = vunpack.c.l.b16 %v691
        %v916 = vunpack.c.l.b16 %v692
        %v917 = vunpack.c.l.b16 %v693
        %v918 = vunpack.c.l.b16 %v694
        %v919 = vunpack.c.l.b16 %v695
        %v920 = vunpack.c.l.b16 %v696
        %v921 = vunpack.c.l.b16 %v697
        %v922 = vunpack.c.l.b16 %v698
        %v923 = vunpack.c.l.b16 %v699
        %v924 = vunpack.c.l.b16 %v700
        %v925 = vunpack.c.l.b16 %v701
        %v926 = vunpack.c.l.b16 %v702
        %v927 = vunpack.c.l.b16 %v703
        %v928 = vunpack.c.l.b16 %v704
        %v929 = vunpack.c.l.b16 %v705
        %v930 = vunpack.c.l.b16 %v706
        %v931 = vunpack.c.l.b16 %v707
        %v932 = vunpack.c.l.b16 %v708
        %v933 = vunpack.c.l.b16 %v709
        %v934 = vunpack.c.l.b16 %v710
        %v935 = vunpack.c.l.b16 %v711
        %v936 = vunpack.c.l.b16 %v712
        %v937 = vunpack.c.l.b16 %v713
        %v938 = vunpack.c.l.b16 %v714
        %v939 = vunpack.c.l.b16 %v715
        %v940 = vunpack.c.l.b16 %v716
        %v941 = vunpack.c.l.b16 %v717
        %v942 = vunpack.c.l.b16 %v718
        %v943 = vunpack.c.l.b16 %v719
        %v944 = vunpack.c.l.b16 %v720
        %v945 = vunpack.c.l.b16 %v721
        %v946 = vunpack.c.l.b16 %v722
        %v947 = vunpack.c.l.b16 %v723
        %v948 = vunpack.c.l.b16 %v724
        %v949 = vunpack.c.l.b16 %v725
        %v950 = vunpack.c.l.b16 %v726
        %v951 = vunpack.c.l.b16 %v727
        %v952 = vunpack.c.l.b16 %v728
        %v953 = vunpack.c.l.b16 %v729
        %v954 = vunpack.c.l.b16 %v730
        %v955 = vunpack.c.l.b16 %v731
        %v956 = vpack.c.b16 %v853, %v852
        %v957 = vpack.c.b16 %v855, %v854
        %v958 = vpack.c.b16 %v857, %v856
        %v959 = vpack.c.b16 %v859, %v858
        %v960 = vpack.c.b16 %v861, %v860
        %v961 = vpack.c.b16 %v863, %v862
        %v962 = vpack.c.b16 %v865, %v864
        %v963 = vpack.c.b16 %v867, %v866
        %v964 = vpack.c.b16 %v869, %v868
        %v965 = vpack.c.b16 %v871, %v870
        %v966 = vpack.c.b16 %v873, %v872
        %v967 = vpack.c.b16 %v875, %v874
        %v968 = vpack.c.b16 %v877, %v876
        %v969 = vpack.c.b16 %v879, %v878
        %v970 = vpack.c.b16 %v881, %v880
        %v971 = vpack.c.b16 %v883, %v882
        %v972 = vpack.c.b16 %v885, %v884
        %v973 = vpack.c.b16 %v887, %v886
        %v974 = vpack.c.b16 %v889, %v888
        %v975 = vpack.c.b16 %v891, %v890
        %v976 = vpack.c.b16 %v893, %v892
        %v977 = vpack.c.b16 %v895, %v894
        %v978 = vpack.c.b16 %v897, %v896
        %v979 = vpack.c.b16 %v899, %v898
        %v980 = vpack.c.b16 %v901, %v900
        %v981 = vpack.c.b16 %v903, %v902
        %v982 = vpack.c.b16 %v905, %v904
        %v983 = vpack.c.b16 %v907, %v906
        %v984 = vpack.c.b16 %v909, %v908
        %v985 = vpack.c.b16 %v911, %v910
        %v986 = vpack.c.b16 %v913, %v912
        %v987 = vpack.c.b16 %v915, %v914
        %v988 = vpack.c.b16 %v917, %v916
        %v989 = vpack.c.b16 %v919, %v918
        %v990 = vpack.c.b16 %v921, %v920
        %v991 = vpack.c.b16 %v923, %v922
        %v992 = vpack.c.b16 %v925, %v924
        %v993 = vpack.c.b16 %v927, %v926
        %v994 = vpack.c.b16 %v929, %v928
        %v995 = vpack.c.b16 %v931, %v930
        %v996 = vpack.c.b16 %v933, %v932
        %v997 = vpack.c.b16 %v935, %v934
        %v998 = vpack.c.b16 %v937, %v936
        %v999 = vpack.c.b16 %v939, %v938
        %v1000 = vpack.c.b16 %v941, %v940
        %v1001 = vpack.c.b16 %v943, %v942
        %v1002 = vpack.c.b16 %v945, %v944
        %v1003 = vpack.c.b16 %v947, %v946
        %v1004 = vpack.c.b16 %v949, %v948
        %v1005 = vpack.c.b16 %v951, %v950
        %v1006 = vpack.c.b16 %v953, %v952
        %v1007 = vpack.c.b16 %v955, %v954
        %v1076 = vunpack.c.l.b16 %v732
        %v1077 = vunpack.c.l.b16 %v733
        %v1078 = vunpack.c.l.b16 %v734
        %v1079 = vunpack.c.l.b16 %v735
        %v1080 = vunpack.c.l.b16 %v736
        %v1081 = vunpack.c.l.b16 %v737
        %v1082 = vunpack.c.l.b16 %v738
        %v1083 = vunpack.c.l.b16 %v739
        %v1084 = vunpack.c.l.b16 %v740
        %v1085 = vunpack.c.l.b16 %v741
        %v1086 = vunpack.c.l.b16 %v742
        %v1087 = vunpack.c.l.b16 %v743
        %v1088 = vunpack.c.l.b16 %v744
        %v1089 = vunpack.c.l.b16 %v745
        %v1090 = vunpack.c.l.b16 %v746
        %v1091 = vunpack.c.l.b16 %v747
        %v1092 = vpack.c.b16 %v1077, %v1076
        %v1093 = vpack.c.b16 %v1079, %v1078
        %v1094 = vpack.c.b16 %v1081, %v1080
        %v1095 = vpack.c.b16 %v1083, %v1082
        %v1096 = vpack.c.b16 %v1085, %v1084
        %v1097 = vpack.c.b16 %v1087, %v1086
        %v1098 = vpack.c.b16 %v1089, %v1088
        %v1099 = vpack.c.b16 %v1091, %v1090
        %1108 = vmatprep.subr.bf16.mxu0 0
        %1109 = vmatpush1.bf16.msra.mxu0 %v1092
        %1110 = vmatprep.subr.bf16.mxu0 0
        %1111 = vmatpush1.bf16.msra.mxu0 %v1093
        %1112 = vmatprep.subr.bf16.mxu0 0
        %1113 = vmatpush1.bf16.msra.mxu0 %v1094
        %1114 = vmatprep.subr.bf16.mxu0 0
        %1115 = vmatpush1.bf16.msra.mxu0 %v1095
        %1116 = vmatprep.subr.bf16.mxu0 0
        %1117 = vmatpush1.bf16.msra.mxu0 %v1096
        %1118 = vmatprep.subr.bf16.mxu0 0
        %1119 = vmatpush1.bf16.msra.mxu0 %v1097
        %1120 = vmatprep.subr.bf16.mxu0 0
        %1121 = vmatpush1.bf16.msra.mxu0 %v1098
        %1122 = vmatprep.subr.bf16.mxu0 0
        %1123 = vmatpush1.bf16.msra.mxu0 %v1099
        %1124 = vmatprep.subr.bf16.mxu0 0
        %1125 = vmatpush1.bf16.msra.mxu0 0
        %1126 = vmatprep.subr.bf16.mxu0 0
        %1127 = vmatpush1.bf16.msra.mxu0 0
        %1128 = vmatprep.subr.bf16.mxu0 0
        %1129 = vmatpush1.bf16.msra.mxu0 0
        %1130 = vmatprep.subr.bf16.mxu0 0
        %1131 = vmatpush1.bf16.msra.mxu0 0
        %1132 = vmatprep.subr.bf16.mxu0 0
        %1133 = vmatpush1.bf16.msra.mxu0 0
        %1134 = vmatprep.subr.bf16.mxu0 0
        %1135 = vmatpush1.bf16.msra.mxu0 0
        %1136 = vmatprep.subr.bf16.mxu0 0
        %1137 = vmatpush1.bf16.msra.mxu0 0
        %1138 = vmatprep.subr.bf16.mxu0 0
        %1139 = vmatpush1.bf16.msra.mxu0 0
        %1140 = vmatprep.mubr.bf16.mxu0 0
        %1141 = vmatmul.mubr.bf16.gmra.mrb[0].mxu0 %v956
        %v1142 = vpop.f32.mrb[0].mxu0
        %v1143 = vadd.f32 0.0, %v1142
        %v1144 = vpop.f32.mrb[0].mxu0
        %v1145 = vpop.f32.mrb[0].mxu0
        %v1146 = vadd.f32 0.0, %v1145
        %v1147 = vpop.f32.mrb[0].mxu0
        %1148 = vmatprep.mubr.bf16.mxu0 0
        %1149 = vmatmul.mubr.bf16.gmra.mrb[0].mxu0 %v957
        %v1150 = vpop.f32.mrb[0].mxu0
        %v1151 = vadd.f32 0.0, %v1150
        %v1152 = vpop.f32.mrb[0].mxu0
        %v1153 = vpop.f32.mrb[0].mxu0
        %v1154 = vadd.f32 0.0, %v1153
        %v1155 = vpop.f32.mrb[0].mxu0
        %1156 = vmatprep.mubr.bf16.mxu0 0
        %1157 = vmatmul.mubr.bf16.gmra.mrb[0].mxu0 %v958
        %v1158 = vpop.f32.mrb[0].mxu0
        %v1159 = vadd.f32 0.0, %v1158
        %v1160 = vpop.f32.mrb[0].mxu0
        %v1161 = vpop.f32.mrb[0].mxu0
        %v1162 = vadd.f32 0.0, %v1161
        %v1163 = vpop.f32.mrb[0].mxu0
        %1164 = vmatprep.mubr.bf16.mxu0 0
        %1165 = vmatmul.mubr.bf16.gmra.mrb[0].mxu0 %v959
        %v1166 = vpop.f32.mrb[0].mxu0
        %v1167 = vadd.f32 0.0, %v1166
        %v1168 = vpop.f32.mrb[0].mxu0
        %v1169 = vpop.f32.mrb[0].mxu0
        %v1170 = vadd.f32 0.0, %v1169
        %v1171 = vpop.f32.mrb[0].mxu0
        %1172 = vmatprep.mubr.bf16.mxu0 0
        %1173 = vmatmul.mubr.bf16.gmra.mrb[0].mxu0 %v960
        %v1174 = vpop.f32.mrb[0].mxu0
        %v1175 = vadd.f32 0.0, %v1174
        %v1176 = vpop.f32.mrb[0].mxu0
        %v1177 = vpop.f32.mrb[0].mxu0
        %v1178 = vadd.f32 0.0, %v1177
        %v1179 = vpop.f32.mrb[0].mxu0
        %1180 = vmatprep.mubr.bf16.mxu0 0
        %1181 = vmatmul.mubr.bf16.gmra.mrb[0].mxu0 %v961
        %v1182 = vpop.f32.mrb[0].mxu0
        %v1183 = vadd.f32 0.0, %v1182
        %v1184 = vpop.f32.mrb[0].mxu0
        %v1185 = vpop.f32.mrb[0].mxu0
        %v1186 = vadd.f32 0.0, %v1185
        %v1187 = vpop.f32.mrb[0].mxu0
        %1188 = vmatprep.mubr.bf16.mxu0 0
        %1189 = vmatmul.mubr.bf16.gmra.mrb[0].mxu0 %v962
        %v1190 = vpop.f32.mrb[0].mxu0
        %v1191 = vadd.f32 0.0, %v1190
        %v1192 = vpop.f32.mrb[0].mxu0
        %v1193 = vpop.f32.mrb[0].mxu0
        %v1194 = vadd.f32 0.0, %v1193
        %v1195 = vpop.f32.mrb[0].mxu0
        %1196 = vmatprep.mubr.bf16.mxu0 0
        %1197 = vmatmul.mubr.bf16.gmra.mrb[0].mxu0 %v963
        %v1198 = vpop.f32.mrb[0].mxu0
        %v1199 = vadd.f32 0.0, %v1198
        %v1200 = vpop.f32.mrb[0].mxu0
        %v1201 = vpop.f32.mrb[0].mxu0
        %v1202 = vadd.f32 0.0, %v1201
        %v1203 = vpop.f32.mrb[0].mxu0
        %1204 = vmatprep.mubr.bf16.mxu0 0
        %1205 = vmatmul.mubr.bf16.gmra.mrb[0].mxu0 %v964
        %v1206 = vpop.f32.mrb[0].mxu0
        %v1207 = vadd.f32 0.0, %v1206
        %v1208 = vpop.f32.mrb[0].mxu0
        %v1209 = vpop.f32.mrb[0].mxu0
        %v1210 = vadd.f32 0.0, %v1209
        %v1211 = vpop.f32.mrb[0].mxu0
        %1212 = vmatprep.mubr.bf16.mxu0 0
        %1213 = vmatmul.mubr.bf16.gmra.mrb[0].mxu0 %v965
        %v1214 = vpop.f32.mrb[0].mxu0
        %v1215 = vadd.f32 0.0, %v1214
        %v1216 = vpop.f32.mrb[0].mxu0
        %v1217 = vpop.f32.mrb[0].mxu0
        %v1218 = vadd.f32 0.0, %v1217
        %v1219 = vpop.f32.mrb[0].mxu0
        %1220 = vmatprep.mubr.bf16.mxu0 0
        %1221 = vmatmul.mubr.bf16.gmra.mrb[0].mxu0 %v966
        %v1222 = vpop.f32.mrb[0].mxu0
        %v1223 = vadd.f32 0.0, %v1222
        %v1224 = vpop.f32.mrb[0].mxu0
        %v1225 = vpop.f32.mrb[0].mxu0
        %v1226 = vadd.f32 0.0, %v1225
        %v1227 = vpop.f32.mrb[0].mxu0
        %1228 = vmatprep.mubr.bf16.mxu0 0
        %1229 = vmatmul.mubr.bf16.gmra.mrb[0].mxu0 %v967
        %v1230 = vpop.f32.mrb[0].mxu0
        %v1231 = vadd.f32 0.0, %v1230
        %v1232 = vpop.f32.mrb[0].mxu0
        %v1233 = vpop.f32.mrb[0].mxu0
        %v1234 = vadd.f32 0.0, %v1233
        %v1235 = vpop.f32.mrb[0].mxu0
        %1236 = vmatprep.mubr.bf16.mxu0 0
        %1237 = vmatmul.mubr.bf16.gmra.mrb[0].mxu0 %v968
        %v1238 = vpop.f32.mrb[0].mxu0
        %v1239 = vadd.f32 0.0, %v1238
        %v1240 = vpop.f32.mrb[0].mxu0
        %v1241 = vpop.f32.mrb[0].mxu0
        %v1242 = vadd.f32 0.0, %v1241
        %v1243 = vpop.f32.mrb[0].mxu0
        %1244 = vmatprep.mubr.bf16.mxu0 0
        %1245 = vmatmul.mubr.bf16.gmra.mrb[0].mxu0 %v969
        %v1246 = vpop.f32.mrb[0].mxu0
        %v1247 = vadd.f32 0.0, %v1246
        %v1248 = vpop.f32.mrb[0].mxu0
        %v1249 = vpop.f32.mrb[0].mxu0
        %v1250 = vadd.f32 0.0, %v1249
        %v1251 = vpop.f32.mrb[0].mxu0
        %1252 = vmatprep.mubr.bf16.mxu0 0
        %1253 = vmatmul.mubr.bf16.gmra.mrb[0].mxu0 %v970
        %v1254 = vpop.f32.mrb[0].mxu0
        %v1255 = vadd.f32 0.0, %v1254
        %v1256 = vpop.f32.mrb[0].mxu0
        %v1257 = vpop.f32.mrb[0].mxu0
        %v1258 = vadd.f32 0.0, %v1257
        %v1259 = vpop.f32.mrb[0].mxu0
        %1260 = vmatprep.mubr.bf16.mxu0 0
        %1261 = vmatmul.mubr.bf16.gmra.mrb[0].mxu0 %v971
        %v1262 = vpop.f32.mrb[0].mxu0
        %v1263 = vadd.f32 0.0, %v1262
        %v1264 = vpop.f32.mrb[0].mxu0
        %v1265 = vpop.f32.mrb[0].mxu0
        %v1266 = vadd.f32 0.0, %v1265
        %v1267 = vpop.f32.mrb[0].mxu0
        %1268 = vmatprep.mubr.bf16.mxu0 0
        %1269 = vmatmul.mubr.bf16.gmra.mrb[0].mxu0 %v972
        %v1270 = vpop.f32.mrb[0].mxu0
        %v1271 = vadd.f32 0.0, %v1270
        %v1272 = vpop.f32.mrb[0].mxu0
        %v1273 = vpop.f32.mrb[0].mxu0
        %v1274 = vadd.f32 0.0, %v1273
        %v1275 = vpop.f32.mrb[0].mxu0
        %1276 = vmatprep.mubr.bf16.mxu0 0
        %1277 = vmatmul.mubr.bf16.gmra.mrb[0].mxu0 %v973
        %v1278 = vpop.f32.mrb[0].mxu0
        %v1279 = vadd.f32 0.0, %v1278
        %v1280 = vpop.f32.mrb[0].mxu0
        %v1281 = vpop.f32.mrb[0].mxu0
        %v1282 = vadd.f32 0.0, %v1281
        %v1283 = vpop.f32.mrb[0].mxu0
        %1284 = vmatprep.mubr.bf16.mxu0 0
        %1285 = vmatmul.mubr.bf16.gmra.mrb[0].mxu0 %v974
        %v1286 = vpop.f32.mrb[0].mxu0
        %v1287 = vadd.f32 0.0, %v1286
        %v1288 = vpop.f32.mrb[0].mxu0
        %v1289 = vpop.f32.mrb[0].mxu0
        %v1290 = vadd.f32 0.0, %v1289
        %v1291 = vpop.f32.mrb[0].mxu0
        %1292 = vmatprep.mubr.bf16.mxu0 0
        %1293 = vmatmul.mubr.bf16.gmra.mrb[0].mxu0 %v975
        %v1294 = vpop.f32.mrb[0].mxu0
        %v1295 = vadd.f32 0.0, %v1294
        %v1296 = vpop.f32.mrb[0].mxu0
        %v1297 = vpop.f32.mrb[0].mxu0
        %v1298 = vadd.f32 0.0, %v1297
        %v1299 = vpop.f32.mrb[0].mxu0
        %1300 = vmatprep.mubr.bf16.mxu0 0
        %1301 = vmatmul.mubr.bf16.gmra.mrb[0].mxu0 %v976
        %v1302 = vpop.f32.mrb[0].mxu0
        %v1303 = vadd.f32 0.0, %v1302
        %v1304 = vpop.f32.mrb[0].mxu0
        %v1305 = vpop.f32.mrb[0].mxu0
        %v1306 = vadd.f32 0.0, %v1305
        %v1307 = vpop.f32.mrb[0].mxu0
        %1308 = vmatprep.mubr.bf16.mxu0 0
        %1309 = vmatmul.mubr.bf16.gmra.mrb[0].mxu0 %v977
        %v1310 = vpop.f32.mrb[0].mxu0
        %v1311 = vadd.f32 0.0, %v1310
        %v1312 = vpop.f32.mrb[0].mxu0
        %v1313 = vpop.f32.mrb[0].mxu0
        %v1314 = vadd.f32 0.0, %v1313
        %v1315 = vpop.f32.mrb[0].mxu0
        %1316 = vmatprep.mubr.bf16.mxu0 0
        %1317 = vmatmul.mubr.bf16.gmra.mrb[0].mxu0 %v978
        %v1318 = vpop.f32.mrb[0].mxu0
        %v1319 = vadd.f32 0.0, %v1318
        %v1320 = vpop.f32.mrb[0].mxu0
        %v1321 = vpop.f32.mrb[0].mxu0
        %v1322 = vadd.f32 0.0, %v1321
        %v1323 = vpop.f32.mrb[0].mxu0
        %1324 = vmatprep.mubr.bf16.mxu0 0
        %1325 = vmatmul.mubr.bf16.gmra.mrb[0].mxu0 %v979
        %v1326 = vpop.f32.mrb[0].mxu0
        %v1327 = vadd.f32 0.0, %v1326
        %v1328 = vpop.f32.mrb[0].mxu0
        %v1329 = vpop.f32.mrb[0].mxu0
        %v1330 = vadd.f32 0.0, %v1329
        %v1331 = vpop.f32.mrb[0].mxu0
        %1332 = vmatprep.mubr.bf16.mxu0 0
        %1333 = vmatmul.mubr.bf16.gmra.mrb[0].mxu0 %v980
        %v1334 = vpop.f32.mrb[0].mxu0
        %v1335 = vadd.f32 0.0, %v1334
        %v1336 = vpop.f32.mrb[0].mxu0
        %v1337 = vpop.f32.mrb[0].mxu0
        %v1338 = vadd.f32 0.0, %v1337
        %v1339 = vpop.f32.mrb[0].mxu0
        %1340 = vmatprep.mubr.bf16.mxu0 0
        %1341 = vmatmul.mubr.bf16.gmra.mrb[0].mxu0 %v981
        %v1342 = vpop.f32.mrb[0].mxu0
        %v1343 = vadd.f32 0.0, %v1342
        %v1344 = vpop.f32.mrb[0].mxu0
        %v1345 = vpop.f32.mrb[0].mxu0
        %v1346 = vadd.f32 0.0, %v1345
        %v1347 = vpop.f32.mrb[0].mxu0
        %1348 = vmatprep.mubr.bf16.mxu0 0
        %1349 = vmatmul.mubr.bf16.gmra.mrb[0].mxu0 %v982
        %v1350 = vpop.f32.mrb[0].mxu0
        %v1351 = vadd.f32 0.0, %v1350
        %v1352 = vpop.f32.mrb[0].mxu0
        %v1353 = vpop.f32.mrb[0].mxu0
        %v1354 = vadd.f32 0.0, %v1353
        %v1355 = vpop.f32.mrb[0].mxu0
        %1356 = vmatprep.mubr.bf16.mxu0 0
        %1357 = vmatmul.mubr.bf16.gmra.mrb[0].mxu0 %v983
        %v1358 = vpop.f32.mrb[0].mxu0
        %v1359 = vadd.f32 0.0, %v1358
        %v1360 = vpop.f32.mrb[0].mxu0
        %v1361 = vpop.f32.mrb[0].mxu0
        %v1362 = vadd.f32 0.0, %v1361
        %v1363 = vpop.f32.mrb[0].mxu0
        %1364 = vmatprep.mubr.bf16.mxu0 0
        %1365 = vmatmul.mubr.bf16.gmra.mrb[0].mxu0 %v984
        %v1366 = vpop.f32.mrb[0].mxu0
        %v1367 = vadd.f32 0.0, %v1366
        %v1368 = vpop.f32.mrb[0].mxu0
        %v1369 = vpop.f32.mrb[0].mxu0
        %v1370 = vadd.f32 0.0, %v1369
        %v1371 = vpop.f32.mrb[0].mxu0
        %1372 = vmatprep.mubr.bf16.mxu0 0
        %1373 = vmatmul.mubr.bf16.gmra.mrb[0].mxu0 %v985
        %v1374 = vpop.f32.mrb[0].mxu0
        %v1375 = vadd.f32 0.0, %v1374
        %v1376 = vpop.f32.mrb[0].mxu0
        %v1377 = vpop.f32.mrb[0].mxu0
        %v1378 = vadd.f32 0.0, %v1377
        %v1379 = vpop.f32.mrb[0].mxu0
        %1380 = vmatprep.mubr.bf16.mxu0 0
        %1381 = vmatmul.mubr.bf16.gmra.mrb[0].mxu0 %v986
        %v1382 = vpop.f32.mrb[0].mxu0
        %v1383 = vadd.f32 0.0, %v1382
        %v1384 = vpop.f32.mrb[0].mxu0
        %v1385 = vpop.f32.mrb[0].mxu0
        %v1386 = vadd.f32 0.0, %v1385
        %v1387 = vpop.f32.mrb[0].mxu0
        %1388 = vmatprep.mubr.bf16.mxu0 0
        %1389 = vmatmul.mubr.bf16.gmra.mrb[0].mxu0 %v987
        %v1390 = vpop.f32.mrb[0].mxu0
        %v1391 = vadd.f32 0.0, %v1390
        %v1392 = vpop.f32.mrb[0].mxu0
        %v1393 = vpop.f32.mrb[0].mxu0
        %v1394 = vadd.f32 0.0, %v1393
        %v1395 = vpop.f32.mrb[0].mxu0
        %1396 = vmatprep.mubr.bf16.mxu0 0
        %1397 = vmatmul.mubr.bf16.gmra.mrb[0].mxu0 %v988
        %v1398 = vpop.f32.mrb[0].mxu0
        %v1399 = vadd.f32 0.0, %v1398
        %v1400 = vpop.f32.mrb[0].mxu0
        %v1401 = vpop.f32.mrb[0].mxu0
        %v1402 = vadd.f32 0.0, %v1401
        %v1403 = vpop.f32.mrb[0].mxu0
        %1404 = vmatprep.mubr.bf16.mxu0 0
        %1405 = vmatmul.mubr.bf16.gmra.mrb[0].mxu0 %v989
        %v1406 = vpop.f32.mrb[0].mxu0
        %v1407 = vadd.f32 0.0, %v1406
        %v1408 = vpop.f32.mrb[0].mxu0
        %v1409 = vpop.f32.mrb[0].mxu0
        %v1410 = vadd.f32 0.0, %v1409
        %v1411 = vpop.f32.mrb[0].mxu0
        %1412 = vmatprep.mubr.bf16.mxu0 0
        %1413 = vmatmul.mubr.bf16.gmra.mrb[0].mxu0 %v990
        %v1414 = vpop.f32.mrb[0].mxu0
        %v1415 = vadd.f32 0.0, %v1414
        %v1416 = vpop.f32.mrb[0].mxu0
        %v1417 = vpop.f32.mrb[0].mxu0
        %v1418 = vadd.f32 0.0, %v1417
        %v1419 = vpop.f32.mrb[0].mxu0
        %1420 = vmatprep.mubr.bf16.mxu0 0
        %1421 = vmatmul.mubr.bf16.gmra.mrb[0].mxu0 %v991
        %v1422 = vpop.f32.mrb[0].mxu0
        %v1423 = vadd.f32 0.0, %v1422
        %v1424 = vpop.f32.mrb[0].mxu0
        %v1425 = vpop.f32.mrb[0].mxu0
        %v1426 = vadd.f32 0.0, %v1425
        %v1427 = vpop.f32.mrb[0].mxu0
        %1428 = vmatprep.mubr.bf16.mxu0 0
        %1429 = vmatmul.mubr.bf16.gmra.mrb[0].mxu0 %v992
        %v1430 = vpop.f32.mrb[0].mxu0
        %v1431 = vadd.f32 0.0, %v1430
        %v1432 = vpop.f32.mrb[0].mxu0
        %v1433 = vpop.f32.mrb[0].mxu0
        %v1434 = vadd.f32 0.0, %v1433
        %v1435 = vpop.f32.mrb[0].mxu0
        %1436 = vmatprep.mubr.bf16.mxu0 0
        %1437 = vmatmul.mubr.bf16.gmra.mrb[0].mxu0 %v993
        %v1438 = vpop.f32.mrb[0].mxu0
        %v1439 = vadd.f32 0.0, %v1438
        %v1440 = vpop.f32.mrb[0].mxu0
        %v1441 = vpop.f32.mrb[0].mxu0
        %v1442 = vadd.f32 0.0, %v1441
        %v1443 = vpop.f32.mrb[0].mxu0
        %1444 = vmatprep.mubr.bf16.mxu0 0
        %1445 = vmatmul.mubr.bf16.gmra.mrb[0].mxu0 %v994
        %v1446 = vpop.f32.mrb[0].mxu0
        %v1447 = vadd.f32 0.0, %v1446
        %v1448 = vpop.f32.mrb[0].mxu0
        %v1449 = vpop.f32.mrb[0].mxu0
        %v1450 = vadd.f32 0.0, %v1449
        %v1451 = vpop.f32.mrb[0].mxu0
        %1452 = vmatprep.mubr.bf16.mxu0 0
        %1453 = vmatmul.mubr.bf16.gmra.mrb[0].mxu0 %v995
        %v1454 = vpop.f32.mrb[0].mxu0
        %v1455 = vadd.f32 0.0, %v1454
        %v1456 = vpop.f32.mrb[0].mxu0
        %v1457 = vpop.f32.mrb[0].mxu0
        %v1458 = vadd.f32 0.0, %v1457
        %v1459 = vpop.f32.mrb[0].mxu0
        %1460 = vmatprep.mubr.bf16.mxu0 0
        %1461 = vmatmul.mubr.bf16.gmra.mrb[0].mxu0 %v996
        %v1462 = vpop.f32.mrb[0].mxu0
        %v1463 = vadd.f32 0.0, %v1462
        %v1464 = vpop.f32.mrb[0].mxu0
        %v1465 = vpop.f32.mrb[0].mxu0
        %v1466 = vadd.f32 0.0, %v1465
        %v1467 = vpop.f32.mrb[0].mxu0
        %1468 = vmatprep.mubr.bf16.mxu0 0
        %1469 = vmatmul.mubr.bf16.gmra.mrb[0].mxu0 %v997
        %v1470 = vpop.f32.mrb[0].mxu0
        %v1471 = vadd.f32 0.0, %v1470
        %v1472 = vpop.f32.mrb[0].mxu0
        %v1473 = vpop.f32.mrb[0].mxu0
        %v1474 = vadd.f32 0.0, %v1473
        %v1475 = vpop.f32.mrb[0].mxu0
        %1476 = vmatprep.mubr.bf16.mxu0 0
        %1477 = vmatmul.mubr.bf16.gmra.mrb[0].mxu0 %v998
        %v1478 = vpop.f32.mrb[0].mxu0
        %v1479 = vadd.f32 0.0, %v1478
        %v1480 = vpop.f32.mrb[0].mxu0
        %v1481 = vpop.f32.mrb[0].mxu0
        %v1482 = vadd.f32 0.0, %v1481
        %v1483 = vpop.f32.mrb[0].mxu0
        %1484 = vmatprep.mubr.bf16.mxu0 0
        %1485 = vmatmul.mubr.bf16.gmra.mrb[0].mxu0 %v999
        %v1486 = vpop.f32.mrb[0].mxu0
        %v1487 = vadd.f32 0.0, %v1486
        %v1488 = vpop.f32.mrb[0].mxu0
        %v1489 = vpop.f32.mrb[0].mxu0
        %v1490 = vadd.f32 0.0, %v1489
        %v1491 = vpop.f32.mrb[0].mxu0
        %1492 = vmatprep.mubr.bf16.mxu0 0
        %1493 = vmatmul.mubr.bf16.gmra.mrb[0].mxu0 %v1000
        %v1494 = vpop.f32.mrb[0].mxu0
        %v1495 = vadd.f32 0.0, %v1494
        %v1496 = vpop.f32.mrb[0].mxu0
        %v1497 = vpop.f32.mrb[0].mxu0
        %v1498 = vadd.f32 0.0, %v1497
        %v1499 = vpop.f32.mrb[0].mxu0
        %1500 = vmatprep.mubr.bf16.mxu0 0
        %1501 = vmatmul.mubr.bf16.gmra.mrb[0].mxu0 %v1001
        %v1502 = vpop.f32.mrb[0].mxu0
        %v1503 = vadd.f32 0.0, %v1502
        %v1504 = vpop.f32.mrb[0].mxu0
        %v1505 = vpop.f32.mrb[0].mxu0
        %v1506 = vadd.f32 0.0, %v1505
        %v1507 = vpop.f32.mrb[0].mxu0
        %1508 = vmatprep.mubr.bf16.mxu0 0
        %1509 = vmatmul.mubr.bf16.gmra.mrb[0].mxu0 %v1002
        %v1510 = vpop.f32.mrb[0].mxu0
        %v1511 = vadd.f32 0.0, %v1510
        %v1512 = vpop.f32.mrb[0].mxu0
        %v1513 = vpop.f32.mrb[0].mxu0
        %v1514 = vadd.f32 0.0, %v1513
        %v1515 = vpop.f32.mrb[0].mxu0
        %1516 = vmatprep.mubr.bf16.mxu0 0
        %1517 = vmatmul.mubr.bf16.gmra.mrb[0].mxu0 %v1003
        %v1518 = vpop.f32.mrb[0].mxu0
        %v1519 = vadd.f32 0.0, %v1518
        %v1520 = vpop.f32.mrb[0].mxu0
        %v1521 = vpop.f32.mrb[0].mxu0
        %v1522 = vadd.f32 0.0, %v1521
        %v1523 = vpop.f32.mrb[0].mxu0
        %1524 = vmatprep.mubr.bf16.mxu0 0
        %1525 = vmatmul.mubr.bf16.gmra.mrb[0].mxu0 %v1004
        %v1526 = vpop.f32.mrb[0].mxu0
        %v1527 = vadd.f32 0.0, %v1526
        %v1528 = vpop.f32.mrb[0].mxu0
        %v1529 = vpop.f32.mrb[0].mxu0
        %v1530 = vadd.f32 0.0, %v1529
        %v1531 = vpop.f32.mrb[0].mxu0
        %1532 = vmatprep.mubr.bf16.mxu0 0
        %1533 = vmatmul.mubr.bf16.gmra.mrb[0].mxu0 %v1005
        %v1534 = vpop.f32.mrb[0].mxu0
        %v1535 = vadd.f32 0.0, %v1534
        %v1536 = vpop.f32.mrb[0].mxu0
        %v1537 = vpop.f32.mrb[0].mxu0
        %v1538 = vadd.f32 0.0, %v1537
        %v1539 = vpop.f32.mrb[0].mxu0
        %1540 = vmatprep.mubr.bf16.mxu0 0
        %1541 = vmatmul.mubr.bf16.gmra.mrb[0].mxu0 %v1006
        %v1542 = vpop.f32.mrb[0].mxu0
        %v1543 = vadd.f32 0.0, %v1542
        %v1544 = vpop.f32.mrb[0].mxu0
        %v1545 = vpop.f32.mrb[0].mxu0
        %v1546 = vadd.f32 0.0, %v1545
        %v1547 = vpop.f32.mrb[0].mxu0
        %1548 = vmatprep.mubr.bf16.mxu0 0
        %1549 = vmatmul.mubr.bf16.gmra.mrb[0].mxu0 %v1007
        %v1550 = vpop.f32.mrb[0].mxu0
        %v1551 = vadd.f32 0.0, %v1550
        %v1552 = vpop.f32.mrb[0].mxu0
        %v1553 = vpop.f32.mrb[0].mxu0
        %v1554 = vadd.f32 0.0, %v1553
        %v1555 = vpop.f32.mrb[0].mxu0
        %1556 = vdwg.mxu0
        %v1557 = vmax.f32 %v1143, %v1247
        %v1558 = vmax.f32 %v1557, %v1351
        %v1559 = vmax.f32 %v1558, %v1455
        %v1560 = vmax.f32 %v1146, %v1250
        %v1561 = vmax.f32 %v1560, %v1354
        %v1562 = vmax.f32 %v1561, %v1458
        %v1563 = vmax.f32 %v1151, %v1255
        %v1564 = vmax.f32 %v1563, %v1359
        %v1565 = vmax.f32 %v1564, %v1463
        %v1566 = vmax.f32 %v1154, %v1258
        %v1567 = vmax.f32 %v1566, %v1362
        %v1568 = vmax.f32 %v1567, %v1466
        %v1569 = vmax.f32 %v1159, %v1263
        %v1570 = vmax.f32 %v1569, %v1367
        %v1571 = vmax.f32 %v1570, %v1471
        %v1572 = vmax.f32 %v1162, %v1266
        %v1573 = vmax.f32 %v1572, %v1370
        %v1574 = vmax.f32 %v1573, %v1474
        %v1575 = vmax.f32 %v1167, %v1271
        %v1576 = vmax.f32 %v1575, %v1375
        %v1577 = vmax.f32 %v1576, %v1479
        %v1578 = vmax.f32 %v1170, %v1274
        %v1579 = vmax.f32 %v1578, %v1378
        %v1580 = vmax.f32 %v1579, %v1482
        %v1581 = vmax.f32 %v1175, %v1279
        %v1582 = vmax.f32 %v1581, %v1383
        %v1583 = vmax.f32 %v1582, %v1487
        %v1584 = vmax.f32 %v1178, %v1282
        %v1585 = vmax.f32 %v1584, %v1386
        %v1586 = vmax.f32 %v1585, %v1490
        %v1587 = vmax.f32 %v1183, %v1287
        %v1588 = vmax.f32 %v1587, %v1391
        %v1589 = vmax.f32 %v1588, %v1495
        %v1590 = vmax.f32 %v1186, %v1290
        %v1591 = vmax.f32 %v1590, %v1394
        %v1592 = vmax.f32 %v1591, %v1498
        %v1593 = vmax.f32 %v1191, %v1295
        %v1594 = vmax.f32 %v1593, %v1399
        %v1595 = vmax.f32 %v1594, %v1503
        %v1596 = vmax.f32 %v1194, %v1298
        %v1597 = vmax.f32 %v1596, %v1402
        %v1598 = vmax.f32 %v1597, %v1506
        %v1599 = vmax.f32 %v1199, %v1303
        %v1600 = vmax.f32 %v1599, %v1407
        %v1601 = vmax.f32 %v1600, %v1511
        %v1602 = vmax.f32 %v1202, %v1306
        %v1603 = vmax.f32 %v1602, %v1410
        %v1604 = vmax.f32 %v1603, %v1514
        %v1605 = vmax.f32 %v1207, %v1311
        %v1606 = vmax.f32 %v1605, %v1415
        %v1607 = vmax.f32 %v1606, %v1519
        %v1608 = vmax.f32 %v1210, %v1314
        %v1609 = vmax.f32 %v1608, %v1418
        %v1610 = vmax.f32 %v1609, %v1522
        %v1611 = vmax.f32 %v1215, %v1319
        %v1612 = vmax.f32 %v1611, %v1423
        %v1613 = vmax.f32 %v1612, %v1527
        %v1614 = vmax.f32 %v1218, %v1322
        %v1615 = vmax.f32 %v1614, %v1426
        %v1616 = vmax.f32 %v1615, %v1530
        %v1617 = vmax.f32 %v1223, %v1327
        %v1618 = vmax.f32 %v1617, %v1431
        %v1619 = vmax.f32 %v1618, %v1535
        %v1620 = vmax.f32 %v1226, %v1330
        %v1621 = vmax.f32 %v1620, %v1434
        %v1622 = vmax.f32 %v1621, %v1538
        %v1623 = vmax.f32 %v1231, %v1335
        %v1624 = vmax.f32 %v1623, %v1439
        %v1625 = vmax.f32 %v1624, %v1543
        %v1626 = vmax.f32 %v1234, %v1338
        %v1627 = vmax.f32 %v1626, %v1442
        %v1628 = vmax.f32 %v1627, %v1546
        %v1629 = vmax.f32 %v1239, %v1343
        %v1630 = vmax.f32 %v1629, %v1447
        %v1631 = vmax.f32 %v1630, %v1551
        %v1632 = vmax.f32 %v1242, %v1346
        %v1633 = vmax.f32 %v1632, %v1450
        %v1634 = vmax.f32 %v1633, %v1554
        %v1635 = vld [vmem:[%s2] sm:$0x1]
        %v1637 = vlaneseq
        %v1638 = vshrl.u32 %v1637, 7
        %v1639 = vsub.s32 0, %v1638
        %v1640 = vrot.slane %v1635, %v1639
        %v1642 = vadd.f32 %v1559, %v1640
        %v1643 = vadd.f32 %v1562, %v1640
        %v1644 = vadd.f32 %v1565, %v1640
        %v1645 = vadd.f32 %v1568, %v1640
        %v1646 = vadd.f32 %v1571, %v1640
        %v1647 = vadd.f32 %v1574, %v1640
        %v1648 = vadd.f32 %v1577, %v1640
        %v1649 = vadd.f32 %v1580, %v1640
        %v1650 = vadd.f32 %v1583, %v1640
        %v1651 = vadd.f32 %v1586, %v1640
        %v1652 = vadd.f32 %v1589, %v1640
        %v1653 = vadd.f32 %v1592, %v1640
        %v1654 = vadd.f32 %v1595, %v1640
        %v1655 = vadd.f32 %v1598, %v1640
        %v1656 = vadd.f32 %v1601, %v1640
        %v1657 = vadd.f32 %v1604, %v1640
        %v1658 = vadd.f32 %v1607, %v1640
        %v1659 = vadd.f32 %v1610, %v1640
        %v1660 = vadd.f32 %v1613, %v1640
        %v1661 = vadd.f32 %v1616, %v1640
        %v1662 = vadd.f32 %v1619, %v1640
        %v1663 = vadd.f32 %v1622, %v1640
        %v1664 = vadd.f32 %v1625, %v1640
        %v1665 = vadd.f32 %v1628, %v1640
        %v1666 = vadd.f32 %v1631, %v1640
        %v1667 = vadd.f32 %v1634, %v1640
        %v1668 = vmax.f32 %v1642, 0.0
        %v1669 = vmax.f32 %v1643, 0.0
        %v1670 = vmax.f32 %v1644, 0.0
        %v1671 = vmax.f32 %v1645, 0.0
        %v1672 = vmax.f32 %v1646, 0.0
        %v1673 = vmax.f32 %v1647, 0.0
        %v1674 = vmax.f32 %v1648, 0.0
        %v1675 = vmax.f32 %v1649, 0.0
        %v1676 = vmax.f32 %v1650, 0.0
        %v1677 = vmax.f32 %v1651, 0.0
        %v1678 = vmax.f32 %v1652, 0.0
        %v1679 = vmax.f32 %v1653, 0.0
        %v1680 = vmax.f32 %v1654, 0.0
        %v1681 = vmax.f32 %v1655, 0.0
        %v1682 = vmax.f32 %v1656, 0.0
        %v1683 = vmax.f32 %v1657, 0.0
        %v1684 = vmax.f32 %v1658, 0.0
        %v1685 = vmax.f32 %v1659, 0.0
        %v1686 = vmax.f32 %v1660, 0.0
        %v1687 = vmax.f32 %v1661, 0.0
        %v1688 = vmax.f32 %v1662, 0.0
        %v1689 = vmax.f32 %v1663, 0.0
        %v1690 = vmax.f32 %v1664, 0.0
        %v1691 = vmax.f32 %v1665, 0.0
        %v1692 = vmax.f32 %v1666, 0.0
        %v1693 = vmax.f32 %v1667, 0.0
        %v1694 = vpack.c.bf16 %v1669, %v1668
        %v1695 = vpack.c.bf16 %v1671, %v1670
        %v1696 = vpack.c.bf16 %v1673, %v1672
        %v1697 = vpack.c.bf16 %v1675, %v1674
        %v1698 = vpack.c.bf16 %v1677, %v1676
        %v1699 = vpack.c.bf16 %v1679, %v1678
        %v1700 = vpack.c.bf16 %v1681, %v1680
        %v1701 = vpack.c.bf16 %v1683, %v1682
        %v1702 = vpack.c.bf16 %v1685, %v1684
        %v1703 = vpack.c.bf16 %v1687, %v1686
        %v1704 = vpack.c.bf16 %v1689, %v1688
        %v1705 = vpack.c.bf16 %v1691, %v1690
        %v1706 = vpack.c.bf16 %v1693, %v1692
        %v1720 = vunpack.c.l.b16 %v1694
        %v1721 = vunpack.c.h.b16 %v1694
        %v1722 = vunpack.c.l.b16 %v1695
        %v1723 = vunpack.c.h.b16 %v1695
        %v1724 = vunpack.c.l.b16 %v1696
        %v1725 = vunpack.c.h.b16 %v1696
        %v1726 = vunpack.c.l.b16 %v1697
        %v1727 = vunpack.c.h.b16 %v1697
        %v1728 = vunpack.c.l.b16 %v1698
        %v1729 = vunpack.c.h.b16 %v1698
        %v1730 = vunpack.c.l.b16 %v1699
        %v1731 = vunpack.c.h.b16 %v1699
        %v1732 = vunpack.c.l.b16 %v1700
        %v1733 = vunpack.c.h.b16 %v1700
        %v1734 = vunpack.c.l.b16 %v1701
        %v1735 = vunpack.c.h.b16 %v1701
        %v1736 = vunpack.c.l.b16 %v1702
        %v1737 = vunpack.c.h.b16 %v1702
        %v1738 = vunpack.c.l.b16 %v1703
        %v1739 = vunpack.c.h.b16 %v1703
        %v1740 = vunpack.c.l.b16 %v1704
        %v1741 = vunpack.c.h.b16 %v1704
        %v1742 = vunpack.c.l.b16 %v1705
        %v1743 = vunpack.c.h.b16 %v1705
        %v1744 = vunpack.c.l.b16 %v1706
        %v1745 = vunpack.c.h.b16 %v1706
        %v1746 = vpack.c.b16 %v1720, %v1720
        %v1747 = vpack.c.b16 %v1721, %v1721
        %v1748 = vpack.c.b16 %v1722, %v1722
        %v1749 = vpack.c.b16 %v1723, %v1723
        %v1750 = vpack.c.b16 %v1724, %v1724
        %v1751 = vpack.c.b16 %v1725, %v1725
        %v1752 = vpack.c.b16 %v1726, %v1726
        %v1753 = vpack.c.b16 %v1727, %v1727
        %v1754 = vpack.c.b16 %v1728, %v1728
        %v1755 = vpack.c.b16 %v1729, %v1729
        %v1756 = vpack.c.b16 %v1730, %v1730
        %v1757 = vpack.c.b16 %v1731, %v1731
        %v1758 = vpack.c.b16 %v1732, %v1732
        %v1759 = vpack.c.b16 %v1733, %v1733
        %v1760 = vpack.c.b16 %v1734, %v1734
        %v1761 = vpack.c.b16 %v1735, %v1735
        %v1762 = vpack.c.b16 %v1736, %v1736
        %v1763 = vpack.c.b16 %v1737, %v1737
        %v1764 = vpack.c.b16 %v1738, %v1738
        %v1765 = vpack.c.b16 %v1739, %v1739
        %v1766 = vpack.c.b16 %v1740, %v1740
        %v1767 = vpack.c.b16 %v1741, %v1741
        %v1768 = vpack.c.b16 %v1742, %v1742
        %v1769 = vpack.c.b16 %v1743, %v1743
        %v1770 = vpack.c.b16 %v1744, %v1744
        %v1771 = vpack.c.b16 %v1745, %v1745
        %1798 = vst [vmem:[%s625] sm:$0xf] %v1746
        %1799 = vst [vmem:[%s625 + $0x4] sm:$0xf] %v1747
        %1800 = vst [vmem:[%s625 + $0x8] sm:$0xf] %v1748
        %1801 = vst [vmem:[%s625 + $0xc] sm:$0xf] %v1749
        %1802 = vst [vmem:[%s625 + $0x10] sm:$0xf] %v1750
        %1803 = vst [vmem:[%s625 + $0x14] sm:$0xf] %v1751
        %1804 = vst [vmem:[%s625 + $0x18] sm:$0xf] %v1752
        %1805 = vst [vmem:[%s625 + $0x1c] sm:$0xf] %v1753
        %1806 = vst [vmem:[%s625 + $0x20] sm:$0xf] %v1754
        %1807 = vst [vmem:[%s625 + $0x24] sm:$0xf] %v1755
        %1808 = vst [vmem:[%s625 + $0x28] sm:$0xf] %v1756
        %1809 = vst [vmem:[%s625 + $0x2c] sm:$0xf] %v1757
        %1810 = vst [vmem:[%s625 + $0x30] sm:$0xf] %v1758
        %1811 = vst [vmem:[%s625 + $0x34] sm:$0xf] %v1759
        %1812 = vst [vmem:[%s625 + $0x38] sm:$0xf] %v1760
        %1813 = vst [vmem:[%s625 + $0x3c] sm:$0xf] %v1761
        %1814 = vst [vmem:[%s625 + $0x40] sm:$0xf] %v1762
        %1815 = vst [vmem:[%s625 + $0x44] sm:$0xf] %v1763
        %1816 = vst [vmem:[%s625 + $0x48] sm:$0xf] %v1764
        %1817 = vst [vmem:[%s625 + $0x4c] sm:$0xf] %v1765
        %1818 = vst [vmem:[%s625 + $0x50] sm:$0xf] %v1766
        %1819 = vst [vmem:[%s625 + $0x54] sm:$0xf] %v1767
        %1820 = vst [vmem:[%s625 + $0x58] sm:$0xf] %v1768
        %1821 = vst [vmem:[%s625 + $0x5c] sm:$0xf] %v1769
        %1822 = vst [vmem:[%s625 + $0x60] sm:$0xf] %v1770
        %1823 = vst [vmem:[%s625 + $0x64] sm:$0xf] %v1771
        %s1824 = smul.u32 26, %s14
        %p1825 = scmp.lt.s32.totalorder %s1824, 51
        %s1826 = scalar_select %p1825, %s1824, 51
        %s1827 = smul.addr %s1826, 4
        %s1828 = scalar_lea.vmem %s3, %s1827
        // Predicated region
        $region74: #{forward.3} parent=68 // pred_check
          %p1829 = pneg %p100
        $region75: #{forward.3} parent=68 // pred_check_branch
          %1831 = sbr.rel (%p1829) target = $region77
        $region76: #{forward.3} parent=68 // pred_region
          %s1832 = smul.u32 26, %s14
        $region77: #{forward.3} parent=68 // pred_fallthru
          _
      $region69: #{forward.3} parent=5 // pred_fallthru
        _
      %p1833 = scmp.le.s32.totalorder 2, %s9
      // Predicated region
      $region78: #{forward.3} parent=5 // pred_check
        %p1834 = pneg %p1833
      $region79: #{forward.3} parent=5 // pred_check_branch
        %1836 = sbr.rel (%p1834) target = $region81
      $region80: #{forward.3} parent=5 // pred_region
        %s1837 = ssub.s32 %s9, 2
        // Predicated region
        $region82: #{forward.3} parent=80 // pred_check
          %p1838 = pneg %p106
        $region83: #{forward.3} parent=80 // pred_check_branch
          %1840 = sbr.rel (%p1838) target = $region85
        $region84: #{forward.3} parent=80 // pred_region
          %s1841 = smul.u32 26, %s15
          %p1842 = scmp.lt.s32.totalorder %s1841, 51
          %s1843 = scalar_select %p1842, %s1841, 51
          %s1844 = smul.addr %s1843, 4
          %s1845 = scalar_lea.vmem %s3, %s1844
        $region85: #{forward.3} parent=80 // pred_fallthru
          _
      $region81: #{forward.3} parent=5 // pred_fallthru
        _
    $region6: #{forward.3} parent=1 // loop_footer
      %s13 = sadd.s32 1, %s9
    $region7: #{forward.3} parent=1 // loop_footer_branch
      %8 = sbr.rel target = $region3
    $region8: #{forward.3} parent=1 // loop_exit
      _

// kernel: forward.4
$region0: #{forward.4}
  #allocation0 [shape = 'u32[]', space=smem, size = 0x4, offset = 0x4, fixed_abs, tag = 'smem constant byte address 0x4 - core index']
  #allocation1 [shape = 'u32[144,128]{1,0:T(1,128)}', space=vmem, size = 0x12000, scoped, tag = 'internal scratch']
  %s0 = inlined_call_operand.vmem [shape: bf16[4,64,256], index: 0, kind: input, shape index: {}]
  %s1 = inlined_call_operand.vmem [shape: bf16[256,128], index: 1, kind: input, shape index: {}]
  %s2 = inlined_call_operand.vmem [shape: f32[1,128], index: 2, kind: input, shape index: {}]
  %s3 = inlined_call_operand.vmem [shape: bf16[64,128], index: 3, kind: output, shape index: {}]
  %s4 = sld [smem:[#allocation0]]
  $region83: #{forward.4} parent=0
    _
  %s6 = ssub.s32 1, %s4
  %s7 = scalar_select 0, %s6, %s4
  $region1: #{forward.4} parent=0
    #allocation2 [shape = 'u8[131072]{0}', space=vmem, size = 0x20000, scoped, tag = 'input window, operand 0']
    loop: start=0, step=1, limit=4
    $region2: #{forward.4} parent=1 // loop_pre_header
      _
    $region3: #{forward.4} parent=1 // loop_header
      %s9 = sphi 0, %s13
      %p10 = scmp.ge.s32.totalorder %s9, 4
      %s19 = sphi 0, %s21
      %s22 = sphi 0, %s19
      %s23 = sphi 0, %s22
      %s39 = sphi 0, %s23
      %s43 = sphi 0, %s43
      %s45 = sphi 0, %s43
      %s46 = sphi 0, %s45
      %s60 = sphi 0, %s46
      %s64 = sphi 0, %s64
      %s66 = sphi 0, %s64
      %s67 = sphi 0, %s66
      %s81 = sphi 0, %s67
      %s87 = sphi 0, %s89
      %s90 = sphi 0, %s87
      %s91 = sphi 0, %s90
      %s107 = sphi 0, %s91
    $region4: #{forward.4} parent=1 // loop_header_branch
      %12 = sbr.rel (%p10) target = $region8
    $region5: #{forward.4} parent=1 // loop_body
      %s14 = ssub.s32 %s9, 1
      %s15 = ssub.s32 %s9, 2
      %s16 = sadd.s32 %s9, 1
      %s17 = ssub.s32 %s9, %s16
      %p18 = scmp.eq.s32.totalorder %s17, 0
      %s20 = sadd.s32 %s19, 1
      %s21 = scalar_select %p18, %s19, %s20
      %p24 = pneg %p18
      %p25 = scmp.eq.s32.totalorder %s9, 1
      %p26 = por %p24, %p25
      %p27 = scmp.ne.s32.totalorder %s19, %s22
      %p28 = scmp.eq.s32.totalorder %s9, 0
      %p29 = por %p27, %p28
      %p30 = scmp.ne.s32.totalorder %s19, %s22
      %p31 = scmp.eq.s32.totalorder %s14, 1
      %p32 = por %p30, %p31
      %p33 = scmp.ne.s32.totalorder %s22, %s23
      %p34 = scmp.eq.s32.totalorder %s14, 0
      %p35 = por %p33, %p34
      %p36 = scmp.ne.s32.totalorder %s22, %s23
      %p37 = scmp.eq.s32.totalorder %s15, 1
      %p38 = por %p36, %p37
      %p40 = scmp.ne.s32.totalorder %s23, %s39
      %p41 = scmp.eq.s32.totalorder %s15, 0
      %p42 = por %p40, %p41
      %s44 = sadd.s32 %s43, 1
      %p47 = scmp.eq.s32.totalorder %s9, 1
      %p48 = scmp.ne.s32.totalorder %s43, %s45
      %p49 = scmp.eq.s32.totalorder %s9, 0
      %p50 = por %p48, %p49
      %p51 = scmp.ne.s32.totalorder %s43, %s45
      %p52 = scmp.eq.s32.totalorder %s14, 1
      %p53 = por %p51, %p52
      %p54 = scmp.ne.s32.totalorder %s45, %s46
      %p55 = scmp.eq.s32.totalorder %s14, 0
      %p56 = por %p54, %p55
      %p57 = scmp.ne.s32.totalorder %s45, %s46
      %p58 = scmp.eq.s32.totalorder %s15, 1
      %p59 = por %p57, %p58
      %p61 = scmp.ne.s32.totalorder %s46, %s60
      %p62 = scmp.eq.s32.totalorder %s15, 0
      %p63 = por %p61, %p62
      %s65 = sadd.s32 %s64, 1
      %p68 = scmp.eq.s32.totalorder %s9, 1
      %p69 = scmp.ne.s32.totalorder %s64, %s66
      %p70 = scmp.eq.s32.totalorder %s9, 0
      %p71 = por %p69, %p70
      %p72 = scmp.ne.s32.totalorder %s64, %s66
      %p73 = scmp.eq.s32.totalorder %s14, 1
      %p74 = por %p72, %p73
      %p75 = scmp.ne.s32.totalorder %s66, %s67
      %p76 = scmp.eq.s32.totalorder %s14, 0
      %p77 = por %p75, %p76
      %p78 = scmp.ne.s32.totalorder %s66, %s67
      %p79 = scmp.eq.s32.totalorder %s15, 1
      %p80 = por %p78, %p79
      %p82 = scmp.ne.s32.totalorder %s67, %s81
      %p83 = scmp.eq.s32.totalorder %s15, 0
      %p84 = por %p82, %p83
      %s85 = ssub.s32 %s9, %s16
      %p86 = scmp.eq.s32.totalorder %s85, 0
      %s88 = sadd.s32 %s87, 1
      %s89 = scalar_select %p86, %s87, %s88
      %p92 = pneg %p86
      %p93 = scmp.eq.s32.totalorder %s9, 1
      %p94 = por %p92, %p93
      %p95 = scmp.ne.s32.totalorder %s87, %s90
      %p96 = scmp.eq.s32.totalorder %s9, 0
      %p97 = por %p95, %p96
      %p98 = scmp.ne.s32.totalorder %s87, %s90
      %p99 = scmp.eq.s32.totalorder %s14, 1
      %p100 = por %p98, %p99
      %p101 = scmp.ne.s32.totalorder %s90, %s91
      %p102 = scmp.eq.s32.totalorder %s14, 0
      %p103 = por %p101, %p102
      %p104 = scmp.ne.s32.totalorder %s90, %s91
      %p105 = scmp.eq.s32.totalorder %s15, 1
      %p106 = por %p104, %p105
      %p108 = scmp.ne.s32.totalorder %s91, %s107
      %p109 = scmp.eq.s32.totalorder %s15, 0
      %p110 = por %p108, %p109
      %p111 = scmp.le.s32.totalorder 1, %s9
      %p112 = scmp.lt.s32.totalorder %s9, 3
      %p113 = pnand %p111, %p112
      %p114 = pneg %p113
      // Predicated region
      $region9: #{forward.4} parent=5 // pred_check
        _
      $region10: #{forward.4} parent=5 // pred_check_branch
        %116 = sbr.rel (%p113) target = $region12
      $region11: #{forward.4} parent=5 // pred_region
        %s117 = ssub.s32 %s9, 1
        // Predicated region
        $region13: #{forward.4} parent=11 // pred_check
          %p118 = pneg %p56
        $region14: #{forward.4} parent=11 // pred_check_branch
          %120 = sbr.rel (%p118) target = $region16
        $region15: #{forward.4} parent=11 // pred_region
          _
        $region16: #{forward.4} parent=11 // pred_fallthru
          _
        // Predicated region
        $region17: #{forward.4} parent=11 // pred_check
          %p121 = pneg %p77
        $region18: #{forward.4} parent=11 // pred_check_branch
          %123 = sbr.rel (%p121) target = $region20
        $region19: #{forward.4} parent=11 // pred_region
          _
        $region20: #{forward.4} parent=11 // pred_fallthru
          _
      $region12: #{forward.4} parent=5 // pred_fallthru
        _
      %p124 = scmp.lt.s32.totalorder %s9, 2
      // Predicated region
      $region21: #{forward.4} parent=5 // pred_check
        %p125 = pneg %p124
      $region22: #{forward.4} parent=5 // pred_check_branch
        %127 = sbr.rel (%p125) target = $region24
      $region23: #{forward.4} parent=5 // pred_region
        // Predicated region
        $region25: #{forward.4} parent=23 // pred_check
          %p128 = pneg %p29
        $region26: #{forward.4} parent=23 // pred_check_branch
          %130 = sbr.rel (%p128) target = $region28
        $region27: #{forward.4} parent=23 // pred_region
          %s131 = sand.u32 %s19, 1
          %s132 = sand.u32 %s19, 1
          %s133 = smul.addr %s132, 128
          %s134 = scalar_lea.vmem [#allocation2], %s133
          %s135 = smul.u32 4, %s9
          %s136 = smul.addr %s135, 2
          %s137 = smul.addr %s136, 4
          %s138 = scalar_lea.vmem %s0, %s137
          // Predicated region
          $region29: #{forward.4} parent=27 // pred_check
            _
          $region30: #{forward.4} parent=27 // pred_check_branch
            %140 = sbr.rel (0) target = $region32
          $region31: #{forward.4} parent=27 // pred_region
            // Predicated region
            $region33: #{forward.4} parent=31 // pred_check
              _
            $region34: #{forward.4} parent=31 // pred_check_branch
              %142 = sbr.rel (0) target = $region36
            $region35: #{forward.4} parent=31 // pred_region
              // Predicated region
              $region48: #{forward.4} parent=35 // pred_check
                _
              $region49: #{forward.4} parent=35 // pred_check_branch
                %187 = sbr.rel (0) target = $region51
              $region50: #{forward.4} parent=35 // pred_region
                loop: start=0, step=1, limit=1
                $region52: #{forward.4} parent=50 // loop_pre_header
                  _
                $region53: #{forward.4} parent=50 // loop_header
                  %s189 = sphi 0, %s193
                  %p190 = scmp.ge.s32.totalorder %s189, 1
                  %s194 = sphi %s138, %s138
                  %s195 = sphi %s134, %s134
                $region54: #{forward.4} parent=50 // loop_header_branch
                  %192 = sbr.rel (%p190) target = $region58
                $region55: #{forward.4} parent=50 // loop_body
                  %v196 = vld [vmem:[%s194] sm:$0xff]
                  %197 = vst [vmem:[%s195] sm:$0xff] %v196
                  %v198 = vld [vmem:[%s194 + $0x8] sm:$0xff]
                  %199 = vst [vmem:[%s195 + $0x8] sm:$0xff] %v198
                  %v200 = vld [vmem:[%s194 + $0x10] sm:$0xff]
                  %201 = vst [vmem:[%s195 + $0x10] sm:$0xff] %v200
                  %v202 = vld [vmem:[%s194 + $0x18] sm:$0xff]
                  %203 = vst [vmem:[%s195 + $0x18] sm:$0xff] %v202
                  %v204 = vld [vmem:[%s194 + $0x40] sm:$0xff]
                  %205 = vst [vmem:[%s195 + $0x20] sm:$0xff] %v204
                  %v206 = vld [vmem:[%s194 + $0x48] sm:$0xff]
                  %207 = vst [vmem:[%s195 + $0x28] sm:$0xff] %v206
                  %v208 = vld [vmem:[%s194 + $0x50] sm:$0xff]
                  %209 = vst [vmem:[%s195 + $0x30] sm:$0xff] %v208
                  %v210 = vld [vmem:[%s194 + $0x58] sm:$0xff]
                  %211 = vst [vmem:[%s195 + $0x38] sm:$0xff] %v210
                  %v212 = vld [vmem:[%s194 + $0x80] sm:$0xff]
                  %213 = vst [vmem:[%s195 + $0x40] sm:$0xff] %v212
                  %v214 = vld [vmem:[%s194 + $0x88] sm:$0xff]
                  %215 = vst [vmem:[%s195 + $0x48] sm:$0xff] %v214
                  %v216 = vld [vmem:[%s194 + $0x90] sm:$0xff]
                  %217 = vst [vmem:[%s195 + $0x50] sm:$0xff] %v216
                  %v218 = vld [vmem:[%s194 + $0x98] sm:$0xff]
                  %219 = vst [vmem:[%s195 + $0x58] sm:$0xff] %v218
                  %v220 = vld [vmem:[%s194 + $0xc0] sm:$0xff]
                  %221 = vst [vmem:[%s195 + $0x60] sm:$0xff] %v220
                  %v222 = vld [vmem:[%s194 + $0xc8] sm:$0xff]
                  %223 = vst [vmem:[%s195 + $0x68] sm:$0xff] %v222
                  %v224 = vld [vmem:[%s194 + $0xd0] sm:$0xff]
                  %225 = vst [vmem:[%s195 + $0x70] sm:$0xff] %v224
                  %v226 = vld [vmem:[%s194 + $0xd8] sm:$0xff]
                  %227 = vst [vmem:[%s195 + $0x78] sm:$0xff] %v226
                $region56: #{forward.4} parent=50 // loop_footer
                  %s193 = sadd.s32 1, %s189
                $region57: #{forward.4} parent=50 // loop_footer_branch
                  %188 = sbr.rel target = $region53
                $region58: #{forward.4} parent=50 // loop_exit
                  _
              $region51: #{forward.4} parent=35 // pred_fallthru
                _
              // Predicated region
              $region59: #{forward.4} parent=35 // pred_check
                _
              $region60: #{forward.4} parent=35 // pred_check_branch
                %229 = sbr.rel target = $region62
              $region61: #{forward.4} parent=35 // pred_region
                _
              $region62: #{forward.4} parent=35 // pred_fallthru
                _
            $region36: #{forward.4} parent=31 // pred_fallthru
              _
            // Predicated region
            $region37: #{forward.4} parent=31 // pred_check
              _
            $region38: #{forward.4} parent=31 // pred_check_branch
              %144 = sbr.rel target = $region40
            $region39: #{forward.4} parent=31 // pred_region
              loop: start=0, step=1, limit=1
              $region41: #{forward.4} parent=39 // loop_pre_header
                _
              $region42: #{forward.4} parent=39 // loop_header
                %s147 = sphi 0, %s151
                %p148 = scmp.ge.s32.totalorder %s147, 1
                %s152 = sphi %s138, %s138
                %s153 = sphi %s134, %s134
              $region43: #{forward.4} parent=39 // loop_header_branch
                %150 = sbr.rel (%p148) target = $region47
              $region44: #{forward.4} parent=39 // loop_body
                %v154 = vld [vmem:[%s152] sm:$0xff]
                %155 = vst [vmem:[%s153] sm:$0xff] %v154
                %v156 = vld [vmem:[%s152 + $0x8] sm:$0xff]
                %157 = vst [vmem:[%s153 + $0x8] sm:$0xff] %v156
                %v158 = vld [vmem:[%s152 + $0x10] sm:$0xff]
                %159 = vst [vmem:[%s153 + $0x10] sm:$0xff] %v158
                %v160 = vld [vmem:[%s152 + $0x18] sm:$0xff]
                %161 = vst [vmem:[%s153 + $0x18] sm:$0xff] %v160
                %v162 = vld [vmem:[%s152 + $0x40] sm:$0xff]
                %163 = vst [vmem:[%s153 + $0x20] sm:$0xff] %v162
                %v164 = vld [vmem:[%s152 + $0x48] sm:$0xff]
                %165 = vst [vmem:[%s153 + $0x28] sm:$0xff] %v164
                %v166 = vld [vmem:[%s152 + $0x50] sm:$0xff]
                %167 = vst [vmem:[%s153 + $0x30] sm:$0xff] %v166
                %v168 = vld [vmem:[%s152 + $0x58] sm:$0xff]
                %169 = vst [vmem:[%s153 + $0x38] sm:$0xff] %v168
                %v170 = vld [vmem:[%s152 + $0x80] sm:$0xff]
                %171 = vst [vmem:[%s153 + $0x40] sm:$0xff] %v170
                %v172 = vld [vmem:[%s152 + $0x88] sm:$0xff]
                %173 = vst [vmem:[%s153 + $0x48] sm:$0xff] %v172
                %v174 = vld [vmem:[%s152 + $0x90] sm:$0xff]
                %175 = vst [vmem:[%s153 + $0x50] sm:$0xff] %v174
                %v176 = vld [vmem:[%s152 + $0x98] sm:$0xff]
                %177 = vst [vmem:[%s153 + $0x58] sm:$0xff] %v176
                %v178 = vld [vmem:[%s152 + $0xc0] sm:$0xff]
                %179 = vst [vmem:[%s153 + $0x60] sm:$0xff] %v178
                %v180 = vld [vmem:[%s152 + $0xc8] sm:$0xff]
                %181 = vst [vmem:[%s153 + $0x68] sm:$0xff] %v180
                %v182 = vld [vmem:[%s152 + $0xd0] sm:$0xff]
                %183 = vst [vmem:[%s153 + $0x70] sm:$0xff] %v182
                %v184 = vld [vmem:[%s152 + $0xd8] sm:$0xff]
                %185 = vst [vmem:[%s153 + $0x78] sm:$0xff] %v184
              $region45: #{forward.4} parent=39 // loop_footer
                %s151 = sadd.s32 1, %s147
              $region46: #{forward.4} parent=39 // loop_footer_branch
                %146 = sbr.rel target = $region42
              $region47: #{forward.4} parent=39 // loop_exit
                _
            $region40: #{forward.4} parent=31 // pred_fallthru
              _
          $region32: #{forward.4} parent=27 // pred_fallthru
            _
          %230 = vnop
        $region28: #{forward.4} parent=23 // pred_fallthru
          _
      $region24: #{forward.4} parent=5 // pred_fallthru
        _
      %p231 = scmp.le.s32.totalorder 1, %s9
      %p232 = scmp.lt.s32.totalorder %s9, 3
      %p233 = pnand %p231, %p232
      %p234 = pneg %p233
      // Predicated region
      $region63: #{forward.4} parent=5 // pred_check
        _
      $region64: #{forward.4} parent=5 // pred_check_branch
        %236 = sbr.rel (%p233) target = $region66
      $region65: #{forward.4} parent=5 // pred_region
        %s237 = ssub.s32 %s9, 1
        %s238 = sand.u32 %s22, 1
        %s239 = sand.u32 %s22, 1
        %s240 = smul.addr %s239, 128
        %s241 = scalar_lea.vmem [#allocation2], %s240
        // Predicated region
        $region67: #{forward.4} parent=65 // pred_check
          %p242 = pneg %p35
        $region68: #{forward.4} parent=65 // pred_check_branch
          %244 = sbr.rel (%p242) target = $region70
        $region69: #{forward.4} parent=65 // pred_region
          _
        $region70: #{forward.4} parent=65 // pred_fallthru
          _
        %s245 = sand.u32 %s22, 1
        %s246 = sand.u32 %s22, 1
        %s247 = smul.addr %s246, 128
        %s248 = scalar_lea.vmem [#allocation2], %s247
        %p249 = pneg %p35
        %p250 = pneg %p32
        %p251 = pneg %p56
        %p252 = pneg %p53
        %p253 = pneg %p77
        %p254 = pneg %p74
        %p255 = pneg %p103
        %p256 = pneg %p100
        %s257 = smul.u32 4, %s14
        %p258 = scmp.lt.s32.totalorder %s257, 7
        %s259 = scalar_select %p258, %s257, 7
        %s260 = smul.addr %s259, 4
        %s261 = scalar_lea.vmem %s3, %s260
        %s262 = smul.u32 4, %s14
        %s263 = smul.u32 4, %s14
        %p264 = scmp.lt.s32.totalorder %s263, 7
        %s265 = scalar_select %p264, %s263, 7
        %s266 = smul.addr %s265, 4
        %s267 = scalar_lea.vmem %s3, %s266
        %s268 = smul.u32 4, %s14
        %v270 = vld [vmem:[%s241] sm:$0xff]
        %v271 = vld [vmem:[%s241 + $0x8] sm:$0xff]
        %v272 = vld [vmem:[%s241 + $0x10] sm:$0xff]
        %v273 = vld [vmem:[%s241 + $0x18] sm:$0xff]
        %v274 = vld [vmem:[%s241 + $0x20] sm:$0xff]
        %v275 = vld [vmem:[%s241 + $0x28] sm:$0xff]
        %v276 = vld [vmem:[%s241 + $0x30] sm:$0xff]
        %v277 = vld [vmem:[%s241 + $0x38] sm:$0xff]
        %v278 = vld [vmem:[%s241 + $0x40] sm:$0xff]
        %v279 = vld [vmem:[%s241 + $0x48] sm:$0xff]
        %v280 = vld [vmem:[%s241 + $0x50] sm:$0xff]
        %v281 = vld [vmem:[%s241 + $0x58] sm:$0xff]
        %v282 = vld [vmem:[%s241 + $0x60] sm:$0xff]
        %v283 = vld [vmem:[%s241 + $0x68] sm:$0xff]
        %v284 = vld [vmem:[%s241 + $0x70] sm:$0xff]
        %v285 = vld [vmem:[%s241 + $0x78] sm:$0xff]
        %v286 = vld [vmem:[%s1] sm:$0xf]
        %v287 = vld [vmem:[%s1 + $0x4] sm:$0xf]
        %v288 = vld [vmem:[%s1 + $0x8] sm:$0xf]
        %v289 = vld [vmem:[%s1 + $0xc] sm:$0xf]
        %v290 = vld [vmem:[%s1 + $0x10] sm:$0xf]
        %v291 = vld [vmem:[%s1 + $0x14] sm:$0xf]
        %v292 = vld [vmem:[%s1 + $0x18] sm:$0xf]
        %v293 = vld [vmem:[%s1 + $0x1c] sm:$0xf]
        %v294 = vld [vmem:[%s1 + $0x20] sm:$0xf]
        %v295 = vld [vmem:[%s1 + $0x24] sm:$0xf]
        %v296 = vld [vmem:[%s1 + $0x28] sm:$0xf]
        %v297 = vld [vmem:[%s1 + $0x2c] sm:$0xf]
        %v298 = vld [vmem:[%s1 + $0x30] sm:$0xf]
        %v299 = vld [vmem:[%s1 + $0x34] sm:$0xf]
        %v300 = vld [vmem:[%s1 + $0x38] sm:$0xf]
        %v301 = vld [vmem:[%s1 + $0x3c] sm:$0xf]
        %v302 = vld [vmem:[%s1 + $0x40] sm:$0xf]
        %v303 = vld [vmem:[%s1 + $0x44] sm:$0xf]
        %v304 = vld [vmem:[%s1 + $0x48] sm:$0xf]
        %v305 = vld [vmem:[%s1 + $0x4c] sm:$0xf]
        %v306 = vld [vmem:[%s1 + $0x50] sm:$0xf]
        %v307 = vld [vmem:[%s1 + $0x54] sm:$0xf]
        %v308 = vld [vmem:[%s1 + $0x58] sm:$0xf]
        %v309 = vld [vmem:[%s1 + $0x5c] sm:$0xf]
        %v310 = vld [vmem:[%s1 + $0x60] sm:$0xf]
        %v311 = vld [vmem:[%s1 + $0x64] sm:$0xf]
        %v312 = vld [vmem:[%s1 + $0x68] sm:$0xf]
        %v313 = vld [vmem:[%s1 + $0x6c] sm:$0xf]
        %v314 = vld [vmem:[%s1 + $0x70] sm:$0xf]
        %v315 = vld [vmem:[%s1 + $0x74] sm:$0xf]
        %v316 = vld [vmem:[%s1 + $0x78] sm:$0xf]
        %v317 = vld [vmem:[%s1 + $0x7c] sm:$0xf]
        %v334 = vunpack.c.l.b16 %v270
        %v335 = vunpack.c.h.b16 %v270
        %v336 = vunpack.c.l.b16 %v271
        %v337 = vunpack.c.h.b16 %v271
        %v338 = vunpack.c.l.b16 %v272
        %v339 = vunpack.c.h.b16 %v272
        %v340 = vunpack.c.l.b16 %v273
        %v341 = vunpack.c.h.b16 %v273
        %v342 = vunpack.c.l.b16 %v274
        %v343 = vunpack.c.h.b16 %v274
        %v344 = vunpack.c.l.b16 %v275
        %v345 = vunpack.c.h.b16 %v275
        %v346 = vunpack.c.l.b16 %v276
        %v347 = vunpack.c.h.b16 %v276
        %v348 = vunpack.c.l.b16 %v277
        %v349 = vunpack.c.h.b16 %v277
        %v350 = vunpack.c.l.b16 %v278
        %v351 = vunpack.c.h.b16 %v278
        %v352 = vunpack.c.l.b16 %v279
        %v353 = vunpack.c.h.b16 %v279
        %v354 = vunpack.c.l.b16 %v280
        %v355 = vunpack.c.h.b16 %v280
        %v356 = vunpack.c.l.b16 %v281
        %v357 = vunpack.c.h.b16 %v281
        %v358 = vunpack.c.l.b16 %v282
        %v359 = vunpack.c.h.b16 %v282
        %v360 = vunpack.c.l.b16 %v283
        %v361 = vunpack.c.h.b16 %v283
        %v362 = vunpack.c.l.b16 %v284
        %v363 = vunpack.c.h.b16 %v284
        %v364 = vunpack.c.l.b16 %v285
        %v365 = vunpack.c.h.b16 %v285
        %v366 = vpack.c.b16 %v336, %v334
        %v367 = vpack.c.b16 %v337, %v335
        %v368 = vpack.c.b16 %v340, %v338
        %v369 = vpack.c.b16 %v341, %v339
        %v370 = vpack.c.b16 %v344, %v342
        %v371 = vpack.c.b16 %v345, %v343
        %v372 = vpack.c.b16 %v348, %v346
        %v373 = vpack.c.b16 %v349, %v347
        %v374 = vpack.c.b16 %v352, %v350
        %v375 = vpack.c.b16 %v353, %v351
        %v376 = vpack.c.b16 %v356, %v354
        %v377 = vpack.c.b16 %v357, %v355
        %v378 = vpack.c.b16 %v360, %v358
        %v379 = vpack.c.b16 %v361, %v359
        %v380 = vpack.c.b16 %v364, %v362
        %v381 = vpack.c.b16 %v365, %v363
        %v430 = vunpack.c.l.b16 %v286
        %v431 = vunpack.c.l.b16 %v287
        %v432 = vunpack.c.l.b16 %v288
        %v433 = vunpack.c.l.b16 %v289
        %v434 = vunpack.c.l.b16 %v290
        %v435 = vunpack.c.l.b16 %v291
        %v436 = vunpack.c.l.b16 %v292
        %v437 = vunpack.c.l.b16 %v293
        %v438 = vunpack.c.l.b16 %v294
        %v439 = vunpack.c.l.b16 %v295
        %v440 = vunpack.c.l.b16 %v296
        %v441 = vunpack.c.l.b16 %v297
        %v442 = vunpack.c.l.b16 %v298
        %v443 = vunpack.c.l.b16 %v299
        %v444 = vunpack.c.l.b16 %v300
        %v445 = vunpack.c.l.b16 %v301
        %v446 = vunpack.c.l.b16 %v302
        %v447 = vunpack.c.l.b16 %v303
        %v448 = vunpack.c.l.b16 %v304
        %v449 = vunpack.c.l.b16 %v305
        %v450 = vunpack.c.l.b16 %v306
        %v451 = vunpack.c.l.b16 %v307
        %v452 = vunpack.c.l.b16 %v308
        %v453 = vunpack.c.l.b16 %v309
        %v454 = vunpack.c.l.b16 %v310
        %v455 = vunpack.c.l.b16 %v311
        %v456 = vunpack.c.l.b16 %v312
        %v457 = vunpack.c.l.b16 %v313
        %v458 = vunpack.c.l.b16 %v314
        %v459 = vunpack.c.l.b16 %v315
        %v460 = vunpack.c.l.b16 %v316
        %v461 = vunpack.c.l.b16 %v317
        %v462 = vpack.c.b16 %v431, %v430
        %v463 = vpack.c.b16 %v433, %v432
        %v464 = vpack.c.b16 %v435, %v434
        %v465 = vpack.c.b16 %v437, %v436
        %v466 = vpack.c.b16 %v439, %v438
        %v467 = vpack.c.b16 %v441, %v440
        %v468 = vpack.c.b16 %v443, %v442
        %v469 = vpack.c.b16 %v445, %v444
        %v470 = vpack.c.b16 %v447, %v446
        %v471 = vpack.c.b16 %v449, %v448
        %v472 = vpack.c.b16 %v451, %v450
        %v473 = vpack.c.b16 %v453, %v452
        %v474 = vpack.c.b16 %v455, %v454
        %v475 = vpack.c.b16 %v457, %v456
        %v476 = vpack.c.b16 %v459, %v458
        %v477 = vpack.c.b16 %v461, %v460
        %494 = vmatprep.subr.bf16.mxu0 0
        %495 = vmatpush1.bf16.msra.mxu0 %v462
        %496 = vmatprep.subr.bf16.mxu0 0
        %497 = vmatpush1.bf16.msra.mxu0 %v463
        %498 = vmatprep.subr.bf16.mxu0 0
        %499 = vmatpush1.bf16.msra.mxu0 %v464
        %500 = vmatprep.subr.bf16.mxu0 0
        %501 = vmatpush1.bf16.msra.mxu0 %v465
        %502 = vmatprep.subr.bf16.mxu0 0
        %503 = vmatpush1.bf16.msra.mxu0 %v466
        %504 = vmatprep.subr.bf16.mxu0 0
        %505 = vmatpush1.bf16.msra.mxu0 %v467
        %506 = vmatprep.subr.bf16.mxu0 0
        %507 = vmatpush1.bf16.msra.mxu0 %v468
        %508 = vmatprep.subr.bf16.mxu0 0
        %509 = vmatpush1.bf16.msra.mxu0 %v469
        %510 = vmatprep.subr.bf16.mxu0 0
        %511 = vmatpush1.bf16.msra.mxu0 %v470
        %512 = vmatprep.subr.bf16.mxu0 0
        %513 = vmatpush1.bf16.msra.mxu0 %v471
        %514 = vmatprep.subr.bf16.mxu0 0
        %515 = vmatpush1.bf16.msra.mxu0 %v472
        %516 = vmatprep.subr.bf16.mxu0 0
        %517 = vmatpush1.bf16.msra.mxu0 %v473
        %518 = vmatprep.subr.bf16.mxu0 0
        %519 = vmatpush1.bf16.msra.mxu0 %v474
        %520 = vmatprep.subr.bf16.mxu0 0
        %521 = vmatpush1.bf16.msra.mxu0 %v475
        %522 = vmatprep.subr.bf16.mxu0 0
        %523 = vmatpush1.bf16.msra.mxu0 %v476
        %524 = vmatprep.subr.bf16.mxu0 0
        %525 = vmatpush1.bf16.msra.mxu0 %v477
        %526 = vmatprep.mubr.bf16.mxu0 %v367
        %527 = vmatmul.mubr.bf16.gmra.mrb[0].mxu0 %v366
        %v528 = vpop.f32.mrb[0].mxu0
        %v529 = vadd.f32 0.0, %v528
        %v530 = vpop.f32.mrb[0].mxu0
        %v531 = vpop.f32.mrb[0].mxu0
        %v532 = vadd.f32 0.0, %v531
        %v533 = vpop.f32.mrb[0].mxu0
        %534 = vmatprep.mubr.bf16.mxu0 %v369
        %535 = vmatmul.mubr.bf16.gmra.mrb[0].mxu0 %v368
        %v536 = vpop.f32.mrb[0].mxu0
        %v537 = vadd.f32 0.0, %v536
        %v538 = vpop.f32.mrb[0].mxu0
        %v539 = vpop.f32.mrb[0].mxu0
        %v540 = vadd.f32 0.0, %v539
        %v541 = vpop.f32.mrb[0].mxu0
        %542 = vmatprep.mubr.bf16.mxu0 %v371
        %543 = vmatmul.mubr.bf16.gmra.mrb[0].mxu0 %v370
        %v544 = vpop.f32.mrb[0].mxu0
        %v545 = vadd.f32 0.0, %v544
        %v546 = vpop.f32.mrb[0].mxu0
        %v547 = vpop.f32.mrb[0].mxu0
        %v548 = vadd.f32 0.0, %v547
        %v549 = vpop.f32.mrb[0].mxu0
        %550 = vmatprep.mubr.bf16.mxu0 %v373
        %551 = vmatmul.mubr.bf16.gmra.mrb[0].mxu0 %v372
        %v552 = vpop.f32.mrb[0].mxu0
        %v553 = vadd.f32 0.0, %v552
        %v554 = vpop.f32.mrb[0].mxu0
        %v555 = vpop.f32.mrb[0].mxu0
        %v556 = vadd.f32 0.0, %v555
        %v557 = vpop.f32.mrb[0].mxu0
        %558 = vmatprep.mubr.bf16.mxu0 %v375
        %559 = vmatmul.mubr.bf16.gmra.mrb[0].mxu0 %v374
        %v560 = vpop.f32.mrb[0].mxu0
        %v561 = vadd.f32 0.0, %v560
        %v562 = vpop.f32.mrb[0].mxu0
        %v563 = vpop.f32.mrb[0].mxu0
        %v564 = vadd.f32 0.0, %v563
        %v565 = vpop.f32.mrb[0].mxu0
        %566 = vmatprep.mubr.bf16.mxu0 %v377
        %567 = vmatmul.mubr.bf16.gmra.mrb[0].mxu0 %v376
        %v568 = vpop.f32.mrb[0].mxu0
        %v569 = vadd.f32 0.0, %v568
        %v570 = vpop.f32.mrb[0].mxu0
        %v571 = vpop.f32.mrb[0].mxu0
        %v572 = vadd.f32 0.0, %v571
        %v573 = vpop.f32.mrb[0].mxu0
        %574 = vmatprep.mubr.bf16.mxu0 %v379
        %575 = vmatmul.mubr.bf16.gmra.mrb[0].mxu0 %v378
        %v576 = vpop.f32.mrb[0].mxu0
        %v577 = vadd.f32 0.0, %v576
        %v578 = vpop.f32.mrb[0].mxu0
        %v579 = vpop.f32.mrb[0].mxu0
        %v580 = vadd.f32 0.0, %v579
        %v581 = vpop.f32.mrb[0].mxu0
        %582 = vmatprep.mubr.bf16.mxu0 %v381
        %583 = vmatmul.mubr.bf16.gmra.mrb[0].mxu0 %v380
        %v584 = vpop.f32.mrb[0].mxu0
        %v585 = vadd.f32 0.0, %v584
        %v586 = vpop.f32.mrb[0].mxu0
        %v587 = vpop.f32.mrb[0].mxu0
        %v588 = vadd.f32 0.0, %v587
        %v589 = vpop.f32.mrb[0].mxu0
        %590 = vdwg.mxu0
        %v591 = vmax.f32 %v529, %v545
        %v592 = vmax.f32 %v591, %v561
        %v593 = vmax.f32 %v592, %v577
        %v594 = vmax.f32 %v532, %v548
        %v595 = vmax.f32 %v594, %v564
        %v596 = vmax.f32 %v595, %v580
        %v597 = vmax.f32 %v537, %v553
        %v598 = vmax.f32 %v597, %v569
        %v599 = vmax.f32 %v598, %v585
        %v600 = vmax.f32 %v540, %v556
        %v601 = vmax.f32 %v600, %v572
        %v602 = vmax.f32 %v601, %v588
        %v603 = vld [vmem:[%s2] sm:$0x1]
        %v605 = vlaneseq
        %v606 = vshrl.u32 %v605, 7
        %v607 = vsub.s32 0, %v606
        %v608 = vrot.slane %v603, %v607
        %v610 = vadd.f32 %v593, %v608
        %v611 = vadd.f32 %v596, %v608
        %v612 = vadd.f32 %v599, %v608
        %v613 = vadd.f32 %v602, %v608
        %v614 = vmax.f32 %v610, 0.0
        %v615 = vmax.f32 %v611, 0.0
        %v616 = vmax.f32 %v612, 0.0
        %v617 = vmax.f32 %v613, 0.0
        %v618 = vpack.c.bf16 %v615, %v614
        %v619 = vpack.c.bf16 %v617, %v616
        %v622 = vunpack.c.l.b16 %v618
        %v623 = vunpack.c.h.b16 %v618
        %v624 = vunpack.c.l.b16 %v619
        %v625 = vunpack.c.h.b16 %v619
        %v626 = vpack.c.b16 %v622, %v622
        %v627 = vpack.c.b16 %v623, %v623
        %v628 = vpack.c.b16 %v624, %v624
        %v629 = vpack.c.b16 %v625, %v625
        %634 = vst [vmem:[%s267] sm:$0xf] %v626
        %635 = vst [vmem:[%s267 + $0x4] sm:$0xf] %v627
        %636 = vst [vmem:[%s267 + $0x8] sm:$0xf] %v628
        %637 = vst [vmem:[%s267 + $0xc] sm:$0xf] %v629
        %s638 = smul.u32 4, %s14
        %p639 = scmp.lt.s32.totalorder %s638, 7
        %s640 = scalar_select %p639, %s638, 7
        %s641 = smul.addr %s640, 4
        %s642 = scalar_lea.vmem %s3, %s641
        // Predicated region
        $region71: #{forward.4} parent=65 // pred_check
          %p643 = pneg %p100
        $region72: #{forward.4} parent=65 // pred_check_branch
          %645 = sbr.rel (%p643) target = $region74
        $region73: #{forward.4} parent=65 // pred_region
          %s646 = smul.u32 4, %s14
        $region74: #{forward.4} parent=65 // pred_fallthru
          _
      $region66: #{forward.4} parent=5 // pred_fallthru
        _
      %p647 = scmp.le.s32.totalorder 2, %s9
      // Predicated region
      $region75: #{forward.4} parent=5 // pred_check
        %p648 = pneg %p647
      $region76: #{forward.4} parent=5 // pred_check_branch
        %650 = sbr.rel (%p648) target = $region78
      $region77: #{forward.4} parent=5 // pred_region
        %s651 = ssub.s32 %s9, 2
        // Predicated region
        $region79: #{forward.4} parent=77 // pred_check
          %p652 = pneg %p106
        $region80: #{forward.4} parent=77 // pred_check_branch
          %654 = sbr.rel (%p652) target = $region82
        $region81: #{forward.4} parent=77 // pred_region
          %s655 = smul.u32 4, %s15
          %p656 = scmp.lt.s32.totalorder %s655, 7
          %s657 = scalar_select %p656, %s655, 7
          %s658 = smul.addr %s657, 4
          %s659 = scalar_lea.vmem %s3, %s658
        $region82: #{forward.4} parent=77 // pred_fallthru
          _
      $region78: #{forward.4} parent=5 // pred_fallthru
        _
    $region6: #{forward.4} parent=1 // loop_footer
      %s13 = sadd.s32 1, %s9
    $region7: #{forward.4} parent=1 // loop_footer_branch
      %8 = sbr.rel target = $region3
    $region8: #{forward.4} parent=1 // loop_exit
      _

// kernel: forward.5
$region0: #{forward.5}
  #allocation0 [shape = 'u32[]', space=smem, size = 0x4, offset = 0x4, fixed_abs, tag = 'smem constant byte address 0x4 - core index']
  #allocation1 [shape = 'u32[144,128]{1,0:T(1,128)}', space=vmem, size = 0x12000, scoped, tag = 'internal scratch']
  %s0 = inlined_call_operand.vmem [shape: bf16[16,512], index: 0, kind: input, shape index: {}]
  %s1 = inlined_call_operand.vmem [shape: bf16[512,128], index: 1, kind: input, shape index: {}]
  %s2 = inlined_call_operand.vmem [shape: f32[1,128], index: 2, kind: input, shape index: {}]
  %s3 = inlined_call_operand.vmem [shape: bf16[128,128], index: 3, kind: input, shape index: {}]
  %s4 = inlined_call_operand.vmem [shape: f32[1,128], index: 4, kind: input, shape index: {}]
  %s5 = inlined_call_operand.vmem [shape: bf16[128,128], index: 5, kind: input, shape index: {}]
  %s6 = inlined_call_operand.vmem [shape: f32[1,128], index: 6, kind: input, shape index: {}]
  %s7 = inlined_call_operand.vmem [shape: f32[16,128], index: 7, kind: output, shape index: {}]
  %s8 = sld [smem:[#allocation0]]
  $region38: #{forward.5} parent=0
    _
  %s10 = ssub.s32 1, %s8
  %s11 = scalar_select 0, %s10, %s8
  // Predicated region
  $region2: #{forward.5} parent=0 // pred_check
    _
  $region3: #{forward.5} parent=0 // pred_check_branch
    %13 = sbr.rel (0) target = $region5
  $region4: #{forward.5} parent=0 // pred_region
    _
  $region5: #{forward.5} parent=0 // pred_fallthru
    _
  // Predicated region
  $region6: #{forward.5} parent=0 // pred_check
    _
  $region7: #{forward.5} parent=0 // pred_check_branch
    %15 = sbr.rel (0) target = $region9
  $region8: #{forward.5} parent=0 // pred_region
    _
  $region9: #{forward.5} parent=0 // pred_fallthru
    _
  // Predicated region
  $region10: #{forward.5} parent=0 // pred_check
    _
  $region11: #{forward.5} parent=0 // pred_check_branch
    %17 = sbr.rel (0) target = $region13
  $region12: #{forward.5} parent=0 // pred_region
    _
  $region13: #{forward.5} parent=0 // pred_fallthru
    _
  // Predicated region
  $region14: #{forward.5} parent=0 // pred_check
    _
  $region15: #{forward.5} parent=0 // pred_check_branch
    %19 = sbr.rel (0) target = $region17
  $region16: #{forward.5} parent=0 // pred_region
    _
  $region17: #{forward.5} parent=0 // pred_fallthru
    _
  // Predicated region
  $region18: #{forward.5} parent=0 // pred_check
    _
  $region19: #{forward.5} parent=0 // pred_check_branch
    %21 = sbr.rel (0) target = $region21
  $region20: #{forward.5} parent=0 // pred_region
    _
  $region21: #{forward.5} parent=0 // pred_fallthru
    _
  // Predicated region
  $region22: #{forward.5} parent=0 // pred_check
    _
  $region23: #{forward.5} parent=0 // pred_check_branch
    %23 = sbr.rel (0) target = $region25
  $region24: #{forward.5} parent=0 // pred_region
    _
  $region25: #{forward.5} parent=0 // pred_fallthru
    _
  // Predicated region
  $region26: #{forward.5} parent=0 // pred_check
    _
  $region27: #{forward.5} parent=0 // pred_check_branch
    %25 = sbr.rel (0) target = $region29
  $region28: #{forward.5} parent=0 // pred_region
    _
  $region29: #{forward.5} parent=0 // pred_fallthru
    _
  %v27 = vld [vmem:[%s0] sm:$0xff]
  %v28 = vld [vmem:[%s0 + $0x8] sm:$0xff]
  %v29 = vld [vmem:[%s0 + $0x10] sm:$0xff]
  %v30 = vld [vmem:[%s0 + $0x18] sm:$0xff]
  %v31 = vld [vmem:[%s1] sm:$0xf]
  %v32 = vld [vmem:[%s1 + $0x4] sm:$0xf]
  %v33 = vld [vmem:[%s1 + $0x8] sm:$0xf]
  %v34 = vld [vmem:[%s1 + $0xc] sm:$0xf]
  %v35 = vld [vmem:[%s1 + $0x10] sm:$0xf]
  %v36 = vld [vmem:[%s1 + $0x14] sm:$0xf]
  %v37 = vld [vmem:[%s1 + $0x18] sm:$0xf]
  %v38 = vld [vmem:[%s1 + $0x1c] sm:$0xf]
  %v39 = vld [vmem:[%s1 + $0x20] sm:$0xf]
  %v40 = vld [vmem:[%s1 + $0x24] sm:$0xf]
  %v41 = vld [vmem:[%s1 + $0x28] sm:$0xf]
  %v42 = vld [vmem:[%s1 + $0x2c] sm:$0xf]
  %v43 = vld [vmem:[%s1 + $0x30] sm:$0xf]
  %v44 = vld [vmem:[%s1 + $0x34] sm:$0xf]
  %v45 = vld [vmem:[%s1 + $0x38] sm:$0xf]
  %v46 = vld [vmem:[%s1 + $0x3c] sm:$0xf]
  %v47 = vld [vmem:[%s1 + $0x40] sm:$0xf]
  %v48 = vld [vmem:[%s1 + $0x44] sm:$0xf]
  %v49 = vld [vmem:[%s1 + $0x48] sm:$0xf]
  %v50 = vld [vmem:[%s1 + $0x4c] sm:$0xf]
  %v51 = vld [vmem:[%s1 + $0x50] sm:$0xf]
  %v52 = vld [vmem:[%s1 + $0x54] sm:$0xf]
  %v53 = vld [vmem:[%s1 + $0x58] sm:$0xf]
  %v54 = vld [vmem:[%s1 + $0x5c] sm:$0xf]
  %v55 = vld [vmem:[%s1 + $0x60] sm:$0xf]
  %v56 = vld [vmem:[%s1 + $0x64] sm:$0xf]
  %v57 = vld [vmem:[%s1 + $0x68] sm:$0xf]
  %v58 = vld [vmem:[%s1 + $0x6c] sm:$0xf]
  %v59 = vld [vmem:[%s1 + $0x70] sm:$0xf]
  %v60 = vld [vmem:[%s1 + $0x74] sm:$0xf]
  %v61 = vld [vmem:[%s1 + $0x78] sm:$0xf]
  %v62 = vld [vmem:[%s1 + $0x7c] sm:$0xf]
  %v63 = vld [vmem:[%s1 + $0x80] sm:$0xf]
  %v64 = vld [vmem:[%s1 + $0x84] sm:$0xf]
  %v65 = vld [vmem:[%s1 + $0x88] sm:$0xf]
  %v66 = vld [vmem:[%s1 + $0x8c] sm:$0xf]
  %v67 = vld [vmem:[%s1 + $0x90] sm:$0xf]
  %v68 = vld [vmem:[%s1 + $0x94] sm:$0xf]
  %v69 = vld [vmem:[%s1 + $0x98] sm:$0xf]
  %v70 = vld [vmem:[%s1 + $0x9c] sm:$0xf]
  %v71 = vld [vmem:[%s1 + $0xa0] sm:$0xf]
  %v72 = vld [vmem:[%s1 + $0xa4] sm:$0xf]
  %v73 = vld [vmem:[%s1 + $0xa8] sm:$0xf]
  %v74 = vld [vmem:[%s1 + $0xac] sm:$0xf]
  %v75 = vld [vmem:[%s1 + $0xb0] sm:$0xf]
  %v76 = vld [vmem:[%s1 + $0xb4] sm:$0xf]
  %v77 = vld [vmem:[%s1 + $0xb8] sm:$0xf]
  %v78 = vld [vmem:[%s1 + $0xbc] sm:$0xf]
  %v79 = vld [vmem:[%s1 + $0xc0] sm:$0xf]
  %v80 = vld [vmem:[%s1 + $0xc4] sm:$0xf]
  %v81 = vld [vmem:[%s1 + $0xc8] sm:$0xf]
  %v82 = vld [vmem:[%s1 + $0xcc] sm:$0xf]
  %v83 = vld [vmem:[%s1 + $0xd0] sm:$0xf]
  %v84 = vld [vmem:[%s1 + $0xd4] sm:$0xf]
  %v85 = vld [vmem:[%s1 + $0xd8] sm:$0xf]
  %v86 = vld [vmem:[%s1 + $0xdc] sm:$0xf]
  %v87 = vld [vmem:[%s1 + $0xe0] sm:$0xf]
  %v88 = vld [vmem:[%s1 + $0xe4] sm:$0xf]
  %v89 = vld [vmem:[%s1 + $0xe8] sm:$0xf]
  %v90 = vld [vmem:[%s1 + $0xec] sm:$0xf]
  %v91 = vld [vmem:[%s1 + $0xf0] sm:$0xf]
  %v92 = vld [vmem:[%s1 + $0xf4] sm:$0xf]
  %v93 = vld [vmem:[%s1 + $0xf8] sm:$0xf]
  %v94 = vld [vmem:[%s1 + $0xfc] sm:$0xf]
  %v95 = vld [vmem:[%s2] sm:$0x1]
  %v97 = vlaneseq
  %v98 = vshrl.u32 %v97, 7
  %v99 = vsub.s32 0, %v98
  %v100 = vrot.slane %v95, %v99
  %v106 = vunpack.c.l.b16 %v27
  %v107 = vunpack.c.h.b16 %v27
  %v108 = vunpack.c.l.b16 %v28
  %v109 = vunpack.c.h.b16 %v28
  %v110 = vunpack.c.l.b16 %v29
  %v111 = vunpack.c.h.b16 %v29
  %v112 = vunpack.c.l.b16 %v30
  %v113 = vunpack.c.h.b16 %v30
  %v114 = vpack.c.b16 %v110, %v106
  %v115 = vpack.c.b16 %v111, %v107
  %v116 = vpack.c.b16 %v112, %v108
  %v117 = vpack.c.b16 %v113, %v109
  %v186 = vunpack.c.l.b16 %v31
  %v187 = vunpack.c.l.b16 %v32
  %v188 = vunpack.c.l.b16 %v33
  %v189 = vunpack.c.l.b16 %v34
  %v190 = vunpack.c.l.b16 %v35
  %v191 = vunpack.c.l.b16 %v36
  %v192 = vunpack.c.l.b16 %v37
  %v193 = vunpack.c.l.b16 %v38
  %v194 = vunpack.c.l.b16 %v39
  %v195 = vunpack.c.l.b16 %v40
  %v196 = vunpack.c.l.b16 %v41
  %v197 = vunpack.c.l.b16 %v42
  %v198 = vunpack.c.l.b16 %v43
  %v199 = vunpack.c.l.b16 %v44
  %v200 = vunpack.c.l.b16 %v45
  %v201 = vunpack.c.l.b16 %v46
  %v202 = vunpack.c.l.b16 %v47
  %v203 = vunpack.c.l.b16 %v48
  %v204 = vunpack.c.l.b16 %v49
  %v205 = vunpack.c.l.b16 %v50
  %v206 = vunpack.c.l.b16 %v51
  %v207 = vunpack.c.l.b16 %v52
  %v208 = vunpack.c.l.b16 %v53
  %v209 = vunpack.c.l.b16 %v54
  %v210 = vunpack.c.l.b16 %v55
  %v211 = vunpack.c.l.b16 %v56
  %v212 = vunpack.c.l.b16 %v57
  %v213 = vunpack.c.l.b16 %v58
  %v214 = vunpack.c.l.b16 %v59
  %v215 = vunpack.c.l.b16 %v60
  %v216 = vunpack.c.l.b16 %v61
  %v217 = vunpack.c.l.b16 %v62
  %v218 = vunpack.c.l.b16 %v63
  %v219 = vunpack.c.l.b16 %v64
  %v220 = vunpack.c.l.b16 %v65
  %v221 = vunpack.c.l.b16 %v66
  %v222 = vunpack.c.l.b16 %v67
  %v223 = vunpack.c.l.b16 %v68
  %v224 = vunpack.c.l.b16 %v69
  %v225 = vunpack.c.l.b16 %v70
  %v226 = vunpack.c.l.b16 %v71
  %v227 = vunpack.c.l.b16 %v72
  %v228 = vunpack.c.l.b16 %v73
  %v229 = vunpack.c.l.b16 %v74
  %v230 = vunpack.c.l.b16 %v75
  %v231 = vunpack.c.l.b16 %v76
  %v232 = vunpack.c.l.b16 %v77
  %v233 = vunpack.c.l.b16 %v78
  %v234 = vunpack.c.l.b16 %v79
  %v235 = vunpack.c.l.b16 %v80
  %v236 = vunpack.c.l.b16 %v81
  %v237 = vunpack.c.l.b16 %v82
  %v238 = vunpack.c.l.b16 %v83
  %v239 = vunpack.c.l.b16 %v84
  %v240 = vunpack.c.l.b16 %v85
  %v241 = vunpack.c.l.b16 %v86
  %v242 = vunpack.c.l.b16 %v87
  %v243 = vunpack.c.l.b16 %v88
  %v244 = vunpack.c.l.b16 %v89
  %v245 = vunpack.c.l.b16 %v90
  %v246 = vunpack.c.l.b16 %v91
  %v247 = vunpack.c.l.b16 %v92
  %v248 = vunpack.c.l.b16 %v93
  %v249 = vunpack.c.l.b16 %v94
  %v250 = vpack.c.b16 %v187, %v186
  %v251 = vpack.c.b16 %v189, %v188
  %v252 = vpack.c.b16 %v191, %v190
  %v253 = vpack.c.b16 %v193, %v192
  %v254 = vpack.c.b16 %v195, %v194
  %v255 = vpack.c.b16 %v197, %v196
  %v256 = vpack.c.b16 %v199, %v198
  %v257 = vpack.c.b16 %v201, %v200
  %v258 = vpack.c.b16 %v203, %v202
  %v259 = vpack.c.b16 %v205, %v204
  %v260 = vpack.c.b16 %v207, %v206
  %v261 = vpack.c.b16 %v209, %v208
  %v262 = vpack.c.b16 %v211, %v210
  %v263 = vpack.c.b16 %v213, %v212
  %v264 = vpack.c.b16 %v215, %v214
  %v265 = vpack.c.b16 %v217, %v216
  %v266 = vpack.c.b16 %v219, %v218
  %v267 = vpack.c.b16 %v221, %v220
  %v268 = vpack.c.b16 %v223, %v222
  %v269 = vpack.c.b16 %v225, %v224
  %v270 = vpack.c.b16 %v227, %v226
  %v271 = vpack.c.b16 %v229, %v228
  %v272 = vpack.c.b16 %v231, %v230
  %v273 = vpack.c.b16 %v233, %v232
  %v274 = vpack.c.b16 %v235, %v234
  %v275 = vpack.c.b16 %v237, %v236
  %v276 = vpack.c.b16 %v239, %v238
  %v277 = vpack.c.b16 %v241, %v240
  %v278 = vpack.c.b16 %v243, %v242
  %v279 = vpack.c.b16 %v245, %v244
  %v280 = vpack.c.b16 %v247, %v246
  %v281 = vpack.c.b16 %v249, %v248
  %314 = vmatprep.subr.bf16.mxu0 0
  %315 = vmatpush1.bf16.msra.mxu0 %v250
  %316 = vmatprep.subr.bf16.mxu0 0
  %317 = vmatpush1.bf16.msra.mxu0 %v251
  %318 = vmatprep.subr.bf16.mxu0 0
  %319 = vmatpush1.bf16.msra.mxu0 %v252
  %320 = vmatprep.subr.bf16.mxu0 0
  %321 = vmatpush1.bf16.msra.mxu0 %v253
  %322 = vmatprep.subr.bf16.mxu0 0
  %323 = vmatpush1.bf16.msra.mxu0 %v254
  %324 = vmatprep.subr.bf16.mxu0 0
  %325 = vmatpush1.bf16.msra.mxu0 %v255
  %326 = vmatprep.subr.bf16.mxu0 0
  %327 = vmatpush1.bf16.msra.mxu0 %v256
  %328 = vmatprep.subr.bf16.mxu0 0
  %329 = vmatpush1.bf16.msra.mxu0 %v257
  %330 = vmatprep.subr.bf16.mxu0 0
  %331 = vmatpush1.bf16.msra.mxu0 %v258
  %332 = vmatprep.subr.bf16.mxu0 0
  %333 = vmatpush1.bf16.msra.mxu0 %v259
  %334 = vmatprep.subr.bf16.mxu0 0
  %335 = vmatpush1.bf16.msra.mxu0 %v260
  %336 = vmatprep.subr.bf16.mxu0 0
  %337 = vmatpush1.bf16.msra.mxu0 %v261
  %338 = vmatprep.subr.bf16.mxu0 0
  %339 = vmatpush1.bf16.msra.mxu0 %v262
  %340 = vmatprep.subr.bf16.mxu0 0
  %341 = vmatpush1.bf16.msra.mxu0 %v263
  %342 = vmatprep.subr.bf16.mxu0 0
  %343 = vmatpush1.bf16.msra.mxu0 %v264
  %344 = vmatprep.subr.bf16.mxu0 0
  %345 = vmatpush1.bf16.msra.mxu0 %v265
  %346 = vmatprep.mubr.bf16.mxu0 %v115
  %347 = vmatmul.mubr.bf16.gmra.mrb[0].mxu0 %v114
  %v348 = vpop.f32.mrb[0].mxu0
  %v349 = vadd.f32 %v100, %v348
  %v350 = vpop.f32.mrb[0].mxu0
  %v351 = vpop.f32.mrb[0].mxu0
  %v352 = vadd.f32 %v100, %v351
  %v353 = vpop.f32.mrb[0].mxu0
  %354 = vdwg.mxu0
  %355 = vmatprep.subr.bf16.mxu0 0
  %356 = vmatpush1.bf16.msra.mxu0 %v266
  %357 = vmatprep.subr.bf16.mxu0 0
  %358 = vmatpush1.bf16.msra.mxu0 %v267
  %359 = vmatprep.subr.bf16.mxu0 0
  %360 = vmatpush1.bf16.msra.mxu0 %v268
  %361 = vmatprep.subr.bf16.mxu0 0
  %362 = vmatpush1.bf16.msra.mxu0 %v269
  %363 = vmatprep.subr.bf16.mxu0 0
  %364 = vmatpush1.bf16.msra.mxu0 %v270
  %365 = vmatprep.subr.bf16.mxu0 0
  %366 = vmatpush1.bf16.msra.mxu0 %v271
  %367 = vmatprep.subr.bf16.mxu0 0
  %368 = vmatpush1.bf16.msra.mxu0 %v272
  %369 = vmatprep.subr.bf16.mxu0 0
  %370 = vmatpush1.bf16.msra.mxu0 %v273
  %371 = vmatprep.subr.bf16.mxu0 0
  %372 = vmatpush1.bf16.msra.mxu0 %v274
  %373 = vmatprep.subr.bf16.mxu0 0
  %374 = vmatpush1.bf16.msra.mxu0 %v275
  %375 = vmatprep.subr.bf16.mxu0 0
  %376 = vmatpush1.bf16.msra.mxu0 %v276
  %377 = vmatprep.subr.bf16.mxu0 0
  %378 = vmatpush1.bf16.msra.mxu0 %v277
  %379 = vmatprep.subr.bf16.mxu0 0
  %380 = vmatpush1.bf16.msra.mxu0 %v278
  %381 = vmatprep.subr.bf16.mxu0 0
  %382 = vmatpush1.bf16.msra.mxu0 %v279
  %383 = vmatprep.subr.bf16.mxu0 0
  %384 = vmatpush1.bf16.msra.mxu0 %v280
  %385 = vmatprep.subr.bf16.mxu0 0
  %386 = vmatpush1.bf16.msra.mxu0 %v281
  %387 = vmatprep.mubr.bf16.mxu0 %v117
  %388 = vmatmul.mubr.bf16.gmra.mrb[0].mxu0 %v116
  %v389 = vpop.f32.mrb[0].mxu0
  %v390 = vadd.f32 %v349, %v389
  %v391 = vpop.f32.mrb[0].mxu0
  %v392 = vpop.f32.mrb[0].mxu0
  %v393 = vadd.f32 %v352, %v392
  %v394 = vpop.f32.mrb[0].mxu0
  %395 = vdwg.mxu0
  %v396 = vmax.f32 %v390, 0.0
  %v397 = vmax.f32 %v393, 0.0
  %v398 = vpack.c.bf16 %v397, %v396
  %v399 = vld [vmem:[%s3] sm:$0xf]
  %v400 = vld [vmem:[%s3 + $0x4] sm:$0xf]
  %v401 = vld [vmem:[%s3 + $0x8] sm:$0xf]
  %v402 = vld [vmem:[%s3 + $0xc] sm:$0xf]
  %v403 = vld [vmem:[%s3 + $0x10] sm:$0xf]
  %v404 = vld [vmem:[%s3 + $0x14] sm:$0xf]
  %v405 = vld [vmem:[%s3 + $0x18] sm:$0xf]
  %v406 = vld [vmem:[%s3 + $0x1c] sm:$0xf]
  %v407 = vld [vmem:[%s3 + $0x20] sm:$0xf]
  %v408 = vld [vmem:[%s3 + $0x24] sm:$0xf]
  %v409 = vld [vmem:[%s3 + $0x28] sm:$0xf]
  %v410 = vld [vmem:[%s3 + $0x2c] sm:$0xf]
  %v411 = vld [vmem:[%s3 + $0x30] sm:$0xf]
  %v412 = vld [vmem:[%s3 + $0x34] sm:$0xf]
  %v413 = vld [vmem:[%s3 + $0x38] sm:$0xf]
  %v414 = vld [vmem:[%s3 + $0x3c] sm:$0xf]
  %v415 = vld [vmem:[%s4] sm:$0x1]
  %v417 = vlaneseq
  %v418 = vshrl.u32 %v417, 7
  %v419 = vsub.s32 0, %v418
  %v420 = vrot.slane %v415, %v419
  %v438 = vunpack.c.l.b16 %v399
  %v439 = vunpack.c.l.b16 %v400
  %v440 = vunpack.c.l.b16 %v401
  %v441 = vunpack.c.l.b16 %v402
  %v442 = vunpack.c.l.b16 %v403
  %v443 = vunpack.c.l.b16 %v404
  %v444 = vunpack.c.l.b16 %v405
  %v445 = vunpack.c.l.b16 %v406
  %v446 = vunpack.c.l.b16 %v407
  %v447 = vunpack.c.l.b16 %v408
  %v448 = vunpack.c.l.b16 %v409
  %v449 = vunpack.c.l.b16 %v410
  %v450 = vunpack.c.l.b16 %v411
  %v451 = vunpack.c.l.b16 %v412
  %v452 = vunpack.c.l.b16 %v413
  %v453 = vunpack.c.l.b16 %v414
  %v454 = vpack.c.b16 %v439, %v438
  %v455 = vpack.c.b16 %v441, %v440
  %v456 = vpack.c.b16 %v443, %v442
  %v457 = vpack.c.b16 %v445, %v444
  %v458 = vpack.c.b16 %v447, %v446
  %v459 = vpack.c.b16 %v449, %v448
  %v460 = vpack.c.b16 %v451, %v450
  %v461 = vpack.c.b16 %v453, %v452
  %470 = vmatprep.subr.bf16.mxu0 0
  %471 = vmatpush1.bf16.msra.mxu0 %v454
  %472 = vmatprep.subr.bf16.mxu0 0
  %473 = vmatpush1.bf16.msra.mxu0 %v455
  %474 = vmatprep.subr.bf16.mxu0 0
  %475 = vmatpush1.bf16.msra.mxu0 %v456
  %476 = vmatprep.subr.bf16.mxu0 0
  %477 = vmatpush1.bf16.msra.mxu0 %v457
  %478 = vmatprep.subr.bf16.mxu0 0
  %479 = vmatpush1.bf16.msra.mxu0 %v458
  %480 = vmatprep.subr.bf16.mxu0 0
  %481 = vmatpush1.bf16.msra.mxu0 %v459
  %482 = vmatprep.subr.bf16.mxu0 0
  %483 = vmatpush1.bf16.msra.mxu0 %v460
  %484 = vmatprep.subr.bf16.mxu0 0
  %485 = vmatpush1.bf16.msra.mxu0 %v461
  %486 = vmatprep.subr.bf16.mxu0 0
  %487 = vmatpush1.bf16.msra.mxu0 0
  %488 = vmatprep.subr.bf16.mxu0 0
  %489 = vmatpush1.bf16.msra.mxu0 0
  %490 = vmatprep.subr.bf16.mxu0 0
  %491 = vmatpush1.bf16.msra.mxu0 0
  %492 = vmatprep.subr.bf16.mxu0 0
  %493 = vmatpush1.bf16.msra.mxu0 0
  %494 = vmatprep.subr.bf16.mxu0 0
  %495 = vmatpush1.bf16.msra.mxu0 0
  %496 = vmatprep.subr.bf16.mxu0 0
  %497 = vmatpush1.bf16.msra.mxu0 0
  %498 = vmatprep.subr.bf16.mxu0 0
  %499 = vmatpush1.bf16.msra.mxu0 0
  %500 = vmatprep.subr.bf16.mxu0 0
  %501 = vmatpush1.bf16.msra.mxu0 0
  %502 = vmatprep.mubr.bf16.mxu0 0
  %503 = vmatmul.mubr.bf16.gmra.mrb[0].mxu0 %v398
  %v504 = vpop.f32.mrb[0].mxu0
  %v505 = vadd.f32 %v420, %v504
  %v506 = vpop.f32.mrb[0].mxu0
  %v507 = vpop.f32.mrb[0].mxu0
  %v508 = vadd.f32 %v420, %v507
  %v509 = vpop.f32.mrb[0].mxu0
  %510 = vdwg.mxu0
  %v511 = vmax.f32 %v505, 0.0
  %v512 = vmax.f32 %v508, 0.0
  %v513 = vpack.c.bf16 %v512, %v511
  %v514 = vld [vmem:[%s5] sm:$0xf]
  %v515 = vld [vmem:[%s5 + $0x4] sm:$0xf]
  %v516 = vld [vmem:[%s5 + $0x8] sm:$0xf]
  %v517 = vld [vmem:[%s5 + $0xc] sm:$0xf]
  %v518 = vld [vmem:[%s5 + $0x10] sm:$0xf]
  %v519 = vld [vmem:[%s5 + $0x14] sm:$0xf]
  %v520 = vld [vmem:[%s5 + $0x18] sm:$0xf]
  %v521 = vld [vmem:[%s5 + $0x1c] sm:$0xf]
  %v522 = vld [vmem:[%s5 + $0x20] sm:$0xf]
  %v523 = vld [vmem:[%s5 + $0x24] sm:$0xf]
  %v524 = vld [vmem:[%s5 + $0x28] sm:$0xf]
  %v525 = vld [vmem:[%s5 + $0x2c] sm:$0xf]
  %v526 = vld [vmem:[%s5 + $0x30] sm:$0xf]
  %v527 = vld [vmem:[%s5 + $0x34] sm:$0xf]
  %v528 = vld [vmem:[%s5 + $0x38] sm:$0xf]
  %v529 = vld [vmem:[%s5 + $0x3c] sm:$0xf]
  %v530 = vld [vmem:[%s6] sm:$0x1]
  %v532 = vlaneseq
  %v533 = vshrl.u32 %v532, 7
  %v534 = vsub.s32 0, %v533
  %v535 = vrot.slane %v530, %v534
  %v553 = vunpack.c.l.b16 %v514
  %v554 = vunpack.c.l.b16 %v515
  %v555 = vunpack.c.l.b16 %v516
  %v556 = vunpack.c.l.b16 %v517
  %v557 = vunpack.c.l.b16 %v518
  %v558 = vunpack.c.l.b16 %v519
  %v559 = vunpack.c.l.b16 %v520
  %v560 = vunpack.c.l.b16 %v521
  %v561 = vunpack.c.l.b16 %v522
  %v562 = vunpack.c.l.b16 %v523
  %v563 = vunpack.c.l.b16 %v524
  %v564 = vunpack.c.l.b16 %v525
  %v565 = vunpack.c.l.b16 %v526
  %v566 = vunpack.c.l.b16 %v527
  %v567 = vunpack.c.l.b16 %v528
  %v568 = vunpack.c.l.b16 %v529
  %v569 = vpack.c.b16 %v554, %v553
  %v570 = vpack.c.b16 %v556, %v555
  %v571 = vpack.c.b16 %v558, %v557
  %v572 = vpack.c.b16 %v560, %v559
  %v573 = vpack.c.b16 %v562, %v561
  %v574 = vpack.c.b16 %v564, %v563
  %v575 = vpack.c.b16 %v566, %v565
  %v576 = vpack.c.b16 %v568, %v567
  %585 = vmatprep.subr.bf16.mxu0 0
  %586 = vmatpush1.bf16.msra.mxu0 %v569
  %587 = vmatprep.subr.bf16.mxu0 0
  %588 = vmatpush1.bf16.msra.mxu0 %v570
  %589 = vmatprep.subr.bf16.mxu0 0
  %590 = vmatpush1.bf16.msra.mxu0 %v571
  %591 = vmatprep.subr.bf16.mxu0 0
  %592 = vmatpush1.bf16.msra.mxu0 %v572
  %593 = vmatprep.subr.bf16.mxu0 0
  %594 = vmatpush1.bf16.msra.mxu0 %v573
  %595 = vmatprep.subr.bf16.mxu0 0
  %596 = vmatpush1.bf16.msra.mxu0 %v574
  %597 = vmatprep.subr.bf16.mxu0 0
  %598 = vmatpush1.bf16.msra.mxu0 %v575
  %599 = vmatprep.subr.bf16.mxu0 0
  %600 = vmatpush1.bf16.msra.mxu0 %v576
  %601 = vmatprep.subr.bf16.mxu0 0
  %602 = vmatpush1.bf16.msra.mxu0 0
  %603 = vmatprep.subr.bf16.mxu0 0
  %604 = vmatpush1.bf16.msra.mxu0 0
  %605 = vmatprep.subr.bf16.mxu0 0
  %606 = vmatpush1.bf16.msra.mxu0 0
  %607 = vmatprep.subr.bf16.mxu0 0
  %608 = vmatpush1.bf16.msra.mxu0 0
  %609 = vmatprep.subr.bf16.mxu0 0
  %610 = vmatpush1.bf16.msra.mxu0 0
  %611 = vmatprep.subr.bf16.mxu0 0
  %612 = vmatpush1.bf16.msra.mxu0 0
  %613 = vmatprep.subr.bf16.mxu0 0
  %614 = vmatpush1.bf16.msra.mxu0 0
  %615 = vmatprep.subr.bf16.mxu0 0
  %616 = vmatpush1.bf16.msra.mxu0 0
  %617 = vmatprep.mubr.bf16.mxu0 0
  %618 = vmatmul.mubr.bf16.gmra.mrb[0].mxu0 %v513
  %v619 = vpop.f32.mrb[0].mxu0
  %v620 = vadd.f32 %v535, %v619
  %v621 = vpop.f32.mrb[0].mxu0
  %v622 = vpop.f32.mrb[0].mxu0
  %v623 = vadd.f32 %v535, %v622
  %v624 = vpop.f32.mrb[0].mxu0
  %625 = vdwg.mxu0
  %626 = vst [vmem:[%s7] sm:$0xff] %v620
  %627 = vst [vmem:[%s7 + $0x8] sm:$0xff] %v623
  // Predicated region
  $region30: #{forward.5} parent=0 // pred_check
    _
  $region31: #{forward.5} parent=0 // pred_check_branch
    %629 = sbr.rel (0) target = $region33
  $region32: #{forward.5} parent=0 // pred_region
    _
  $region33: #{forward.5} parent=0 // pred_fallthru
    _
  // Predicated region
  $region34: #{forward.5} parent=0 // pred_check
    _
  $region35: #{forward.5} parent=0 // pred_check_branch
    %631 = sbr.rel (0) target = $region37
  $region36: #{forward.5} parent=0 // pred_region
    _
  $region37: #{forward.5} parent=0 // pred_fallthru
    _

</llo_original>
